<compile_context>
chip_gen: v7x
topology: tpu7x:2x2x1
jax: 0.10.0
libtpu: 0.0.40
codegen_flags: <defaults>
</compile_context>

<pallas_src>
import functools

import jax
import jax.numpy as jnp
from jax.experimental import pallas as pl

# ---- scaled-down BERT hyperparameters (real BERT: hidden=768, layers=12) ----
VOCAB = 100
MAX_POS = 32
TYPE_VOCAB = 2
HIDDEN = 128
N_LAYERS = 2
N_HEADS = 4
HEAD_DIM = HIDDEN // N_HEADS
INTERMEDIATE = 256
NUM_CLASSES = 10
CLS_PAD = 128            # lane-dense classifier output width (real logits = first 10)
LN_EPS = 1e-12
ATTN_SCALE = 1.0 / (HEAD_DIM ** 0.5)


# --------------------------- in-kernel helpers --------------------------------

def _layernorm(h, g, b):
    # f32 math, biased variance (matches torch.nn.LayerNorm).
    mu = jnp.mean(h, axis=-1, keepdims=True)
    var = jnp.mean((h - mu) ** 2, axis=-1, keepdims=True)
    return (h - mu) * jax.lax.rsqrt(var + LN_EPS) * g + b


def _mxu(a_f32, w_bf16):
    # bf16 MXU matmul with f32 accumulation.
    return jnp.dot(a_f32.astype(jnp.bfloat16), w_bf16,
                   preferred_element_type=jnp.float32)


def _gelu(y):
    # tanh-approx GELU (BERT's erf-GELU differs by <1e-3); f32.
    return 0.5 * y * (1.0 + jnp.tanh(0.7978845608028654 * (y + 0.044715 * y * y * y)))


# --------------------------- fused forward kernel -----------------------------

def _fused_bert_kernel(
        x_ref, mask_ref, emb_g_ref, emb_b_ref,
        wqkv_ref, bqkv_ref, wo_ref, bo_ref, ln1_g_ref, ln1_b_ref,
        w1_ref, b1_ref, w2_ref, b2_ref, ln2_g_ref, ln2_b_ref,
        cls_w_ref, cls_b_ref, o_ref, *, batch, seq):
    # Embedding LayerNorm (no zero-residual input stream).
    x = _layernorm(x_ref[...], emb_g_ref[...], emb_b_ref[...])       # (B*S, H) f32
    mask = mask_ref[...]                                             # (B, S) additive key bias

    for l in range(N_LAYERS):                                        # static unrolled
        # ---- self-attention -------------------------------------------------
        qkv = _mxu(x, wqkv_ref[l]) + bqkv_ref[l]                     # (B*S, 3H) f32
        ctx_rows = []
        for b in range(batch):
            rows = qkv[b * seq:(b + 1) * seq, :]                     # (S, 3H) static slice
            q_all = rows[:, 0 * HIDDEN:1 * HIDDEN]
            k_all = rows[:, 1 * HIDDEN:2 * HIDDEN]
            v_all = rows[:, 2 * HIDDEN:3 * HIDDEN]
            bias = mask[b:b + 1, :]                                  # (1, S) -> broadcast over queries
            heads = []
            for h in range(N_HEADS):
                sl = slice(h * HEAD_DIM, (h + 1) * HEAD_DIM)
                q = q_all[:, sl]                                     # (S, D) f32
                kt = k_all[:, sl].T                                  # (D, S) f32
                v = v_all[:, sl].astype(jnp.bfloat16)                # (S, D)
                s = jnp.dot(q.astype(jnp.bfloat16), kt.astype(jnp.bfloat16),
                            preferred_element_type=jnp.float32) * ATTN_SCALE
                s = s + bias                                         # mask bias on key positions
                s = s - jnp.max(s, axis=-1, keepdims=True)           # f32 softmax
                p = jnp.exp(s)
                p = p * pl.reciprocal(jnp.sum(p, axis=-1, keepdims=True), approx=True)
                heads.append(jnp.dot(p.astype(jnp.bfloat16), v,
                                     preferred_element_type=jnp.float32))
            ctx_rows.append(jnp.concatenate(heads, axis=-1))         # (S, H)
        ctx = jnp.concatenate(ctx_rows, axis=0)                      # (B*S, H)

        attn_out = _mxu(ctx, wo_ref[l]) + bo_ref[l]
        x = _layernorm(attn_out + x, ln1_g_ref[l], ln1_b_ref[l])

        # ---- feed-forward -----------------------------------------------------
        h1 = _gelu(_mxu(x, w1_ref[l]) + b1_ref[l])                   # (B*S, I)
        h2 = _mxu(h1, w2_ref[l]) + b2_ref[l]                         # (B*S, H)
        x = _layernorm(h2 + x, ln2_g_ref[l], ln2_b_ref[l])

    # CLS pooling + classifier head.  nn.Dropout(0.3) is identity at inference.
    cls = jnp.concatenate([x[b * seq:b * seq + 1, :] for b in range(batch)], axis=0)  # (B, H)
    o_ref[...] = _mxu(cls, cls_w_ref[...]) + cls_b_ref[...]          # (B, 128) lane-dense


# --------------------------- parameters (synthetic, deterministic) ------------

def init_params(key):
    keys = iter(jax.random.split(key, 32))

    def nrm(shape, dtype=jnp.float32, scale=0.02):
        return (scale * jax.random.normal(next(keys), shape, dtype=jnp.float32)).astype(dtype)

    cls_w = jnp.zeros((HIDDEN, CLS_PAD), jnp.float32)
    cls_w = cls_w.at[:, :NUM_CLASSES].set(nrm((HIDDEN, NUM_CLASSES)))

    return {
        "word_emb": nrm((VOCAB, HIDDEN)),
        "pos_emb": nrm((MAX_POS, HIDDEN)),
        "type_emb": nrm((TYPE_VOCAB, HIDDEN)),
        "emb_ln_g": jnp.ones((1, HIDDEN), jnp.float32),
        "emb_ln_b": jnp.zeros((1, HIDDEN), jnp.float32),
        # Per-layer weights stacked on a leading layer axis; MXU weights in bf16,
        # biases / LayerNorm params in f32.
        "wqkv": nrm((N_LAYERS, HIDDEN, 3 * HIDDEN), jnp.bfloat16),
        "bqkv": jnp.zeros((N_LAYERS, 1, 3 * HIDDEN), jnp.float32),
        "wo": nrm((N_LAYERS, HIDDEN, HIDDEN), jnp.bfloat16),
        "bo": jnp.zeros((N_LAYERS, 1, HIDDEN), jnp.float32),
        "ln1_g": jnp.ones((N_LAYERS, 1, HIDDEN), jnp.float32),
        "ln1_b": jnp.zeros((N_LAYERS, 1, HIDDEN), jnp.float32),
        "w1": nrm((N_LAYERS, HIDDEN, INTERMEDIATE), jnp.bfloat16),
        "b1": jnp.zeros((N_LAYERS, 1, INTERMEDIATE), jnp.float32),
        "w2": nrm((N_LAYERS, INTERMEDIATE, HIDDEN), jnp.bfloat16),
        "b2": jnp.zeros((N_LAYERS, 1, HIDDEN), jnp.float32),
        "ln2_g": jnp.ones((N_LAYERS, 1, HIDDEN), jnp.float32),
        "ln2_b": jnp.zeros((N_LAYERS, 1, HIDDEN), jnp.float32),
        "cls_w": cls_w.astype(jnp.bfloat16),            # (H, 128) zero-padded, lane-dense
        "cls_b": jnp.zeros((1, CLS_PAD), jnp.float32),
    }


# --------------------------- forward pass --------------------------------------

def forward(params, input_ids, attention_mask):
    B, S = input_ids.shape

    # Embedding gather + position/type embeddings: plain-JAX glue (no Pallas gather).
    emb = (jnp.take(params["word_emb"], input_ids, axis=0)
           + params["pos_emb"][:S][None, :, :]
           + params["type_emb"][0][None, None, :])
    x_emb = emb.reshape(B * S, HIDDEN)

    # BERT extended attention mask: 0 -> -1e9 additive bias on key positions.
    mask_bias = (1.0 - attention_mask.astype(jnp.float32)) * -1e9    # (B, S)

    # One fused pallas_call for the whole encoder + head: activations and all
    # layer weights stay VMEM-resident for the entire forward (default full-array
    # BlockSpecs, no grid -> single invocation, zero inter-op HBM traffic).
    # TODO(synk): at real BERT sizes (hidden=768, seq=512, intermediate=3072)
    # switch to a token-tiled grid with dimension_semantics=("parallel",) and
    # tiled weight BlockSpecs + explicit vmem_limit_bytes so the working set fits
    # v7x's 64 MiB VMEM and shards across its 2 TensorCores.
    logits_padded = pl.pallas_call(
        functools.partial(_fused_bert_kernel, batch=B, seq=S),
        out_shape=jax.ShapeDtypeStruct((B, CLS_PAD), jnp.float32),
    )(x_emb, mask_bias, params["emb_ln_g"], params["emb_ln_b"],
      params["wqkv"], params["bqkv"], params["wo"], params["bo"],
      params["ln1_g"], params["ln1_b"],
      params["w1"], params["b1"], params["w2"], params["b2"],
      params["ln2_g"], params["ln2_b"],
      params["cls_w"], params["cls_b"])

    return logits_padded[:, :NUM_CLASSES]


# --------------------------- driver --------------------------------------------

if __name__ == "__main__":
    key = jax.random.PRNGKey(0)
    pkey, ikey = jax.random.split(key)
    params = init_params(pkey)

    B, S = 2, 8
    input_ids = jax.random.randint(ikey, (B, S), 0, VOCAB, dtype=jnp.int32)
    attention_mask = jnp.ones((B, S), dtype=jnp.int32).at[1, 6:].set(0)

    logits = jax.jit(forward)(params, input_ids, attention_mask)
    jax.block_until_ready(logits)
    assert logits.shape == (B, NUM_CLASSES) and logits.dtype == jnp.float32
    print("KERNEL_OK")
</pallas_src>

<mosaic_0001>
module attributes {stable_mosaic.version = 11 : i64} {
  func.func @_fused_bert_kernel(%arg0: memref<16x128xf32, #tpu.memory_space<vmem>>, %arg1: memref<2x8xf32, #tpu.memory_space<vmem>>, %arg2: memref<1x128xf32, #tpu.memory_space<vmem>>, %arg3: memref<1x128xf32, #tpu.memory_space<vmem>>, %arg4: memref<2x128x384xbf16, #tpu.memory_space<vmem>>, %arg5: memref<2x1x384xf32, #tpu.memory_space<vmem>>, %arg6: memref<2x128x128xbf16, #tpu.memory_space<vmem>>, %arg7: memref<2x1x128xf32, #tpu.memory_space<vmem>>, %arg8: memref<2x1x128xf32, #tpu.memory_space<vmem>>, %arg9: memref<2x1x128xf32, #tpu.memory_space<vmem>>, %arg10: memref<2x128x256xbf16, #tpu.memory_space<vmem>>, %arg11: memref<2x1x256xf32, #tpu.memory_space<vmem>>, %arg12: memref<2x256x128xbf16, #tpu.memory_space<vmem>>, %arg13: memref<2x1x128xf32, #tpu.memory_space<vmem>>, %arg14: memref<2x1x128xf32, #tpu.memory_space<vmem>>, %arg15: memref<2x1x128xf32, #tpu.memory_space<vmem>>, %arg16: memref<128x128xbf16, #tpu.memory_space<vmem>>, %arg17: memref<1x128xf32, #tpu.memory_space<vmem>>, %arg18: memref<2x128xf32, #tpu.memory_space<vmem>>) attributes {dimension_semantics = [], scalar_prefetch = 0 : i64, scratch_operands = 0 : i64, tpu.core_type = #tpu.core_type<tc>} {
    %c0 = arith.constant 0 : index
    %c0_0 = arith.constant 0 : index
    %0 = vector.load %arg0[%c0, %c0_0] : memref<16x128xf32, #tpu.memory_space<vmem>>, vector<16x128xf32>
    %c0_1 = arith.constant 0 : index
    %c0_2 = arith.constant 0 : index
    %1 = vector.load %arg2[%c0_1, %c0_2] : memref<1x128xf32, #tpu.memory_space<vmem>>, vector<1x128xf32>
    %c0_3 = arith.constant 0 : index
    %c0_4 = arith.constant 0 : index
    %2 = vector.load %arg3[%c0_3, %c0_4] : memref<1x128xf32, #tpu.memory_space<vmem>>, vector<1x128xf32>
    %cst = arith.constant dense<0.000000e+00> : vector<16xf32>
    %3 = vector.multi_reduction <add>, %0, %cst [1] : vector<16x128xf32> to vector<16xf32>
    %4 = vector.shape_cast %3 : vector<16xf32> to vector<16x1xf32>
    %cst_5 = arith.constant 1.280000e+02 : f32
    %5 = vector.broadcast %cst_5 : f32 to vector<16x1xf32>
    %6 = arith.divf %4, %5 : vector<16x1xf32>
    %7 = vector.broadcast %6 : vector<16x1xf32> to vector<16x128xf32>
    %8 = arith.subf %0, %7 : vector<16x128xf32>
    %9 = arith.mulf %8, %8 : vector<16x128xf32>
    %cst_6 = arith.constant dense<0.000000e+00> : vector<16xf32>
    %10 = vector.multi_reduction <add>, %9, %cst_6 [1] : vector<16x128xf32> to vector<16xf32>
    %11 = vector.shape_cast %10 : vector<16xf32> to vector<16x1xf32>
    %cst_7 = arith.constant 1.280000e+02 : f32
    %12 = vector.broadcast %cst_7 : f32 to vector<16x1xf32>
    %13 = arith.divf %11, %12 : vector<16x1xf32>
    %14 = vector.broadcast %6 : vector<16x1xf32> to vector<16x128xf32>
    %15 = arith.subf %0, %14 : vector<16x128xf32>
    %cst_8 = arith.constant 9.99999996E-13 : f32
    %16 = vector.broadcast %cst_8 : f32 to vector<16x1xf32>
    %17 = arith.addf %13, %16 : vector<16x1xf32>
    %18 = math.rsqrt %17 : vector<16x1xf32>
    %19 = vector.broadcast %18 : vector<16x1xf32> to vector<16x128xf32>
    %20 = arith.mulf %15, %19 : vector<16x128xf32>
    %21 = vector.broadcast %1 : vector<1x128xf32> to vector<16x128xf32>
    %22 = arith.mulf %20, %21 : vector<16x128xf32>
    %23 = vector.broadcast %2 : vector<1x128xf32> to vector<16x128xf32>
    %24 = arith.addf %22, %23 : vector<16x128xf32>
    %c0_9 = arith.constant 0 : index
    %c0_10 = arith.constant 0 : index
    %25 = vector.load %arg1[%c0_9, %c0_10] : memref<2x8xf32, #tpu.memory_space<vmem>>, vector<2x8xf32>
    %c0_11 = arith.constant 0 : index
    %c0_12 = arith.constant 0 : index
    %c0_13 = arith.constant 0 : index
    %26 = vector.load %arg4[%c0_11, %c0_12, %c0_13] : memref<2x128x384xbf16, #tpu.memory_space<vmem>>, vector<1x128x384xbf16>
    %27 = vector.shape_cast %26 : vector<1x128x384xbf16> to vector<128x384xbf16>
    %28 = arith.truncf %24 : vector<16x128xf32> to vector<16x128xbf16>
    %cst_14 = arith.constant dense<0.000000e+00> : vector<16x384xf32>
    %29 = tpu.matmul %28, %27, %cst_14 {dimension_numbers = #tpu.dot_dimension_numbers<[1], [0], [0], [1], [0, 0, 1, 1], [], []>} : vector<16x128xbf16>, vector<128x384xbf16>, vector<16x384xf32> -> vector<16x384xf32>
    %c0_15 = arith.constant 0 : index
    %c0_16 = arith.constant 0 : index
    %c0_17 = arith.constant 0 : index
    %30 = vector.load %arg5[%c0_15, %c0_16, %c0_17] : memref<2x1x384xf32, #tpu.memory_space<vmem>>, vector<1x1x384xf32>
    %31 = vector.shape_cast %30 : vector<1x1x384xf32> to vector<1x384xf32>
    %32 = vector.broadcast %31 : vector<1x384xf32> to vector<16x384xf32>
    %33 = arith.addf %29, %32 : vector<16x384xf32>
    %34 = vector.extract_strided_slice %33 {offsets = [0, 0], sizes = [8, 384], strides = [1, 1]} : vector<16x384xf32> to vector<8x384xf32>
    %35 = vector.extract_strided_slice %34 {offsets = [0, 0], sizes = [8, 128], strides = [1, 1]} : vector<8x384xf32> to vector<8x128xf32>
    %36 = vector.extract_strided_slice %34 {offsets = [0, 128], sizes = [8, 128], strides = [1, 1]} : vector<8x384xf32> to vector<8x128xf32>
    %37 = vector.extract_strided_slice %34 {offsets = [0, 256], sizes = [8, 128], strides = [1, 1]} : vector<8x384xf32> to vector<8x128xf32>
    %38 = vector.extract_strided_slice %25 {offsets = [0, 0], sizes = [1, 8], strides = [1, 1]} : vector<2x8xf32> to vector<1x8xf32>
    %39 = vector.extract_strided_slice %35 {offsets = [0, 0], sizes = [8, 32], strides = [1, 1]} : vector<8x128xf32> to vector<8x32xf32>
    %40 = vector.extract_strided_slice %36 {offsets = [0, 0], sizes = [8, 32], strides = [1, 1]} : vector<8x128xf32> to vector<8x32xf32>
    %41 = tpu.transpose %40, [1, 0] : vector<8x32xf32> -> vector<32x8xf32>
    %42 = vector.extract_strided_slice %37 {offsets = [0, 0], sizes = [8, 32], strides = [1, 1]} : vector<8x128xf32> to vector<8x32xf32>
    %43 = arith.truncf %42 : vector<8x32xf32> to vector<8x32xbf16>
    %44 = arith.truncf %39 : vector<8x32xf32> to vector<8x32xbf16>
    %45 = arith.truncf %41 : vector<32x8xf32> to vector<32x8xbf16>
    %cst_18 = arith.constant dense<0.000000e+00> : vector<8x8xf32>
    %46 = tpu.matmul %44, %45, %cst_18 {dimension_numbers = #tpu.dot_dimension_numbers<[1], [0], [0], [1], [0, 0, 1, 1], [], []>} : vector<8x32xbf16>, vector<32x8xbf16>, vector<8x8xf32> -> vector<8x8xf32>
    %cst_19 = arith.constant 0.176776692 : f32
    %47 = vector.broadcast %cst_19 : f32 to vector<8x8xf32>
    %48 = arith.mulf %46, %47 : vector<8x8xf32>
    %49 = vector.broadcast %38 : vector<1x8xf32> to vector<8x8xf32>
    %50 = arith.addf %48, %49 : vector<8x8xf32>
    %cst_20 = arith.constant dense<0xFF800000> : vector<8xf32>
    %51 = vector.multi_reduction <maximumf>, %50, %cst_20 [1] : vector<8x8xf32> to vector<8xf32>
    %52 = vector.shape_cast %51 : vector<8xf32> to vector<8x1xf32>
    %53 = vector.broadcast %52 : vector<8x1xf32> to vector<8x8xf32>
    %54 = arith.subf %50, %53 : vector<8x8xf32>
    %55 = math.exp %54 : vector<8x8xf32>
    %cst_21 = arith.constant dense<0.000000e+00> : vector<8xf32>
    %56 = vector.multi_reduction <add>, %55, %cst_21 [1] : vector<8x8xf32> to vector<8xf32>
    %57 = vector.shape_cast %56 : vector<8xf32> to vector<8x1xf32>
    %58 = tpu.reciprocal %57 {approx = true} : vector<8x1xf32> -> vector<8x1xf32>
    %59 = vector.broadcast %58 : vector<8x1xf32> to vector<8x8xf32>
    %60 = arith.mulf %55, %59 : vector<8x8xf32>
    %61 = arith.truncf %60 : vector<8x8xf32> to vector<8x8xbf16>
    %cst_22 = arith.constant dense<0.000000e+00> : vector<8x32xf32>
    %62 = tpu.matmul %61, %43, %cst_22 {dimension_numbers = #tpu.dot_dimension_numbers<[1], [0], [0], [1], [0, 0, 1, 1], [], []>} : vector<8x8xbf16>, vector<8x32xbf16>, vector<8x32xf32> -> vector<8x32xf32>
    %63 = vector.extract_strided_slice %35 {offsets = [0, 32], sizes = [8, 32], strides = [1, 1]} : vector<8x128xf32> to vector<8x32xf32>
    %64 = vector.extract_strided_slice %36 {offsets = [0, 32], sizes = [8, 32], strides = [1, 1]} : vector<8x128xf32> to vector<8x32xf32>
    %65 = tpu.transpose %64, [1, 0] : vector<8x32xf32> -> vector<32x8xf32>
    %66 = vector.extract_strided_slice %37 {offsets = [0, 32], sizes = [8, 32], strides = [1, 1]} : vector<8x128xf32> to vector<8x32xf32>
    %67 = arith.truncf %66 : vector<8x32xf32> to vector<8x32xbf16>
    %68 = arith.truncf %63 : vector<8x32xf32> to vector<8x32xbf16>
    %69 = arith.truncf %65 : vector<32x8xf32> to vector<32x8xbf16>
    %cst_23 = arith.constant dense<0.000000e+00> : vector<8x8xf32>
    %70 = tpu.matmul %68, %69, %cst_23 {dimension_numbers = #tpu.dot_dimension_numbers<[1], [0], [0], [1], [0, 0, 1, 1], [], []>} : vector<8x32xbf16>, vector<32x8xbf16>, vector<8x8xf32> -> vector<8x8xf32>
    %cst_24 = arith.constant 0.176776692 : f32
    %71 = vector.broadcast %cst_24 : f32 to vector<8x8xf32>
    %72 = arith.mulf %70, %71 : vector<8x8xf32>
    %73 = vector.broadcast %38 : vector<1x8xf32> to vector<8x8xf32>
    %74 = arith.addf %72, %73 : vector<8x8xf32>
    %cst_25 = arith.constant dense<0xFF800000> : vector<8xf32>
    %75 = vector.multi_reduction <maximumf>, %74, %cst_25 [1] : vector<8x8xf32> to vector<8xf32>
    %76 = vector.shape_cast %75 : vector<8xf32> to vector<8x1xf32>
    %77 = vector.broadcast %76 : vector<8x1xf32> to vector<8x8xf32>
    %78 = arith.subf %74, %77 : vector<8x8xf32>
    %79 = math.exp %78 : vector<8x8xf32>
    %cst_26 = arith.constant dense<0.000000e+00> : vector<8xf32>
    %80 = vector.multi_reduction <add>, %79, %cst_26 [1] : vector<8x8xf32> to vector<8xf32>
    %81 = vector.shape_cast %80 : vector<8xf32> to vector<8x1xf32>
    %82 = tpu.reciprocal %81 {approx = true} : vector<8x1xf32> -> vector<8x1xf32>
    %83 = vector.broadcast %82 : vector<8x1xf32> to vector<8x8xf32>
    %84 = arith.mulf %79, %83 : vector<8x8xf32>
    %85 = arith.truncf %84 : vector<8x8xf32> to vector<8x8xbf16>
    %cst_27 = arith.constant dense<0.000000e+00> : vector<8x32xf32>
    %86 = tpu.matmul %85, %67, %cst_27 {dimension_numbers = #tpu.dot_dimension_numbers<[1], [0], [0], [1], [0, 0, 1, 1], [], []>} : vector<8x8xbf16>, vector<8x32xbf16>, vector<8x32xf32> -> vector<8x32xf32>
    %87 = vector.extract_strided_slice %35 {offsets = [0, 64], sizes = [8, 32], strides = [1, 1]} : vector<8x128xf32> to vector<8x32xf32>
    %88 = vector.extract_strided_slice %36 {offsets = [0, 64], sizes = [8, 32], strides = [1, 1]} : vector<8x128xf32> to vector<8x32xf32>
    %89 = tpu.transpose %88, [1, 0] : vector<8x32xf32> -> vector<32x8xf32>
    %90 = vector.extract_strided_slice %37 {offsets = [0, 64], sizes = [8, 32], strides = [1, 1]} : vector<8x128xf32> to vector<8x32xf32>
    %91 = arith.truncf %90 : vector<8x32xf32> to vector<8x32xbf16>
    %92 = arith.truncf %87 : vector<8x32xf32> to vector<8x32xbf16>
    %93 = arith.truncf %89 : vector<32x8xf32> to vector<32x8xbf16>
    %cst_28 = arith.constant dense<0.000000e+00> : vector<8x8xf32>
    %94 = tpu.matmul %92, %93, %cst_28 {dimension_numbers = #tpu.dot_dimension_numbers<[1], [0], [0], [1], [0, 0, 1, 1], [], []>} : vector<8x32xbf16>, vector<32x8xbf16>, vector<8x8xf32> -> vector<8x8xf32>
    %cst_29 = arith.constant 0.176776692 : f32
    %95 = vector.broadcast %cst_29 : f32 to vector<8x8xf32>
    %96 = arith.mulf %94, %95 : vector<8x8xf32>
    %97 = vector.broadcast %38 : vector<1x8xf32> to vector<8x8xf32>
    %98 = arith.addf %96, %97 : vector<8x8xf32>
    %cst_30 = arith.constant dense<0xFF800000> : vector<8xf32>
    %99 = vector.multi_reduction <maximumf>, %98, %cst_30 [1] : vector<8x8xf32> to vector<8xf32>
    %100 = vector.shape_cast %99 : vector<8xf32> to vector<8x1xf32>
    %101 = vector.broadcast %100 : vector<8x1xf32> to vector<8x8xf32>
    %102 = arith.subf %98, %101 : vector<8x8xf32>
    %103 = math.exp %102 : vector<8x8xf32>
    %cst_31 = arith.constant dense<0.000000e+00> : vector<8xf32>
    %104 = vector.multi_reduction <add>, %103, %cst_31 [1] : vector<8x8xf32> to vector<8xf32>
    %105 = vector.shape_cast %104 : vector<8xf32> to vector<8x1xf32>
    %106 = tpu.reciprocal %105 {approx = true} : vector<8x1xf32> -> vector<8x1xf32>
    %107 = vector.broadcast %106 : vector<8x1xf32> to vector<8x8xf32>
    %108 = arith.mulf %103, %107 : vector<8x8xf32>
    %109 = arith.truncf %108 : vector<8x8xf32> to vector<8x8xbf16>
    %cst_32 = arith.constant dense<0.000000e+00> : vector<8x32xf32>
    %110 = tpu.matmul %109, %91, %cst_32 {dimension_numbers = #tpu.dot_dimension_numbers<[1], [0], [0], [1], [0, 0, 1, 1], [], []>} : vector<8x8xbf16>, vector<8x32xbf16>, vector<8x32xf32> -> vector<8x32xf32>
    %111 = vector.extract_strided_slice %35 {offsets = [0, 96], sizes = [8, 32], strides = [1, 1]} : vector<8x128xf32> to vector<8x32xf32>
    %112 = vector.extract_strided_slice %36 {offsets = [0, 96], sizes = [8, 32], strides = [1, 1]} : vector<8x128xf32> to vector<8x32xf32>
    %113 = tpu.transpose %112, [1, 0] : vector<8x32xf32> -> vector<32x8xf32>
    %114 = vector.extract_strided_slice %37 {offsets = [0, 96], sizes = [8, 32], strides = [1, 1]} : vector<8x128xf32> to vector<8x32xf32>
    %115 = arith.truncf %114 : vector<8x32xf32> to vector<8x32xbf16>
    %116 = arith.truncf %111 : vector<8x32xf32> to vector<8x32xbf16>
    %117 = arith.truncf %113 : vector<32x8xf32> to vector<32x8xbf16>
    %cst_33 = arith.constant dense<0.000000e+00> : vector<8x8xf32>
    %118 = tpu.matmul %116, %117, %cst_33 {dimension_numbers = #tpu.dot_dimension_numbers<[1], [0], [0], [1], [0, 0, 1, 1], [], []>} : vector<8x32xbf16>, vector<32x8xbf16>, vector<8x8xf32> -> vector<8x8xf32>
    %cst_34 = arith.constant 0.176776692 : f32
    %119 = vector.broadcast %cst_34 : f32 to vector<8x8xf32>
    %120 = arith.mulf %118, %119 : vector<8x8xf32>
    %121 = vector.broadcast %38 : vector<1x8xf32> to vector<8x8xf32>
    %122 = arith.addf %120, %121 : vector<8x8xf32>
    %cst_35 = arith.constant dense<0xFF800000> : vector<8xf32>
    %123 = vector.multi_reduction <maximumf>, %122, %cst_35 [1] : vector<8x8xf32> to vector<8xf32>
    %124 = vector.shape_cast %123 : vector<8xf32> to vector<8x1xf32>
    %125 = vector.broadcast %124 : vector<8x1xf32> to vector<8x8xf32>
    %126 = arith.subf %122, %125 : vector<8x8xf32>
    %127 = math.exp %126 : vector<8x8xf32>
    %cst_36 = arith.constant dense<0.000000e+00> : vector<8xf32>
    %128 = vector.multi_reduction <add>, %127, %cst_36 [1] : vector<8x8xf32> to vector<8xf32>
    %129 = vector.shape_cast %128 : vector<8xf32> to vector<8x1xf32>
    %130 = tpu.reciprocal %129 {approx = true} : vector<8x1xf32> -> vector<8x1xf32>
    %131 = vector.broadcast %130 : vector<8x1xf32> to vector<8x8xf32>
    %132 = arith.mulf %127, %131 : vector<8x8xf32>
    %133 = arith.truncf %132 : vector<8x8xf32> to vector<8x8xbf16>
    %cst_37 = arith.constant dense<0.000000e+00> : vector<8x32xf32>
    %134 = tpu.matmul %133, %115, %cst_37 {dimension_numbers = #tpu.dot_dimension_numbers<[1], [0], [0], [1], [0, 0, 1, 1], [], []>} : vector<8x8xbf16>, vector<8x32xbf16>, vector<8x32xf32> -> vector<8x32xf32>
    %135 = tpu.concatenate %62, %86, %110, %134 in 1 : vector<8x32xf32>, vector<8x32xf32>, vector<8x32xf32>, vector<8x32xf32> -> vector<8x128xf32>
    %136 = vector.extract_strided_slice %33 {offsets = [8, 0], sizes = [8, 384], strides = [1, 1]} : vector<16x384xf32> to vector<8x384xf32>
    %137 = vector.extract_strided_slice %136 {offsets = [0, 0], sizes = [8, 128], strides = [1, 1]} : vector<8x384xf32> to vector<8x128xf32>
    %138 = vector.extract_strided_slice %136 {offsets = [0, 128], sizes = [8, 128], strides = [1, 1]} : vector<8x384xf32> to vector<8x128xf32>
    %139 = vector.extract_strided_slice %136 {offsets = [0, 256], sizes = [8, 128], strides = [1, 1]} : vector<8x384xf32> to vector<8x128xf32>
    %140 = vector.extract_strided_slice %25 {offsets = [1, 0], sizes = [1, 8], strides = [1, 1]} : vector<2x8xf32> to vector<1x8xf32>
    %141 = vector.extract_strided_slice %137 {offsets = [0, 0], sizes = [8, 32], strides = [1, 1]} : vector<8x128xf32> to vector<8x32xf32>
    %142 = vector.extract_strided_slice %138 {offsets = [0, 0], sizes = [8, 32], strides = [1, 1]} : vector<8x128xf32> to vector<8x32xf32>
    %143 = tpu.transpose %142, [1, 0] : vector<8x32xf32> -> vector<32x8xf32>
    %144 = vector.extract_strided_slice %139 {offsets = [0, 0], sizes = [8, 32], strides = [1, 1]} : vector<8x128xf32> to vector<8x32xf32>
    %145 = arith.truncf %144 : vector<8x32xf32> to vector<8x32xbf16>
    %146 = arith.truncf %141 : vector<8x32xf32> to vector<8x32xbf16>
    %147 = arith.truncf %143 : vector<32x8xf32> to vector<32x8xbf16>
    %cst_38 = arith.constant dense<0.000000e+00> : vector<8x8xf32>
    %148 = tpu.matmul %146, %147, %cst_38 {dimension_numbers = #tpu.dot_dimension_numbers<[1], [0], [0], [1], [0, 0, 1, 1], [], []>} : vector<8x32xbf16>, vector<32x8xbf16>, vector<8x8xf32> -> vector<8x8xf32>
    %cst_39 = arith.constant 0.176776692 : f32
    %149 = vector.broadcast %cst_39 : f32 to vector<8x8xf32>
    %150 = arith.mulf %148, %149 : vector<8x8xf32>
    %151 = vector.broadcast %140 : vector<1x8xf32> to vector<8x8xf32>
    %152 = arith.addf %150, %151 : vector<8x8xf32>
    %cst_40 = arith.constant dense<0xFF800000> : vector<8xf32>
    %153 = vector.multi_reduction <maximumf>, %152, %cst_40 [1] : vector<8x8xf32> to vector<8xf32>
    %154 = vector.shape_cast %153 : vector<8xf32> to vector<8x1xf32>
    %155 = vector.broadcast %154 : vector<8x1xf32> to vector<8x8xf32>
    %156 = arith.subf %152, %155 : vector<8x8xf32>
    %157 = math.exp %156 : vector<8x8xf32>
    %cst_41 = arith.constant dense<0.000000e+00> : vector<8xf32>
    %158 = vector.multi_reduction <add>, %157, %cst_41 [1] : vector<8x8xf32> to vector<8xf32>
    %159 = vector.shape_cast %158 : vector<8xf32> to vector<8x1xf32>
    %160 = tpu.reciprocal %159 {approx = true} : vector<8x1xf32> -> vector<8x1xf32>
    %161 = vector.broadcast %160 : vector<8x1xf32> to vector<8x8xf32>
    %162 = arith.mulf %157, %161 : vector<8x8xf32>
    %163 = arith.truncf %162 : vector<8x8xf32> to vector<8x8xbf16>
    %cst_42 = arith.constant dense<0.000000e+00> : vector<8x32xf32>
    %164 = tpu.matmul %163, %145, %cst_42 {dimension_numbers = #tpu.dot_dimension_numbers<[1], [0], [0], [1], [0, 0, 1, 1], [], []>} : vector<8x8xbf16>, vector<8x32xbf16>, vector<8x32xf32> -> vector<8x32xf32>
    %165 = vector.extract_strided_slice %137 {offsets = [0, 32], sizes = [8, 32], strides = [1, 1]} : vector<8x128xf32> to vector<8x32xf32>
    %166 = vector.extract_strided_slice %138 {offsets = [0, 32], sizes = [8, 32], strides = [1, 1]} : vector<8x128xf32> to vector<8x32xf32>
    %167 = tpu.transpose %166, [1, 0] : vector<8x32xf32> -> vector<32x8xf32>
    %168 = vector.extract_strided_slice %139 {offsets = [0, 32], sizes = [8, 32], strides = [1, 1]} : vector<8x128xf32> to vector<8x32xf32>
    %169 = arith.truncf %168 : vector<8x32xf32> to vector<8x32xbf16>
    %170 = arith.truncf %165 : vector<8x32xf32> to vector<8x32xbf16>
    %171 = arith.truncf %167 : vector<32x8xf32> to vector<32x8xbf16>
    %cst_43 = arith.constant dense<0.000000e+00> : vector<8x8xf32>
    %172 = tpu.matmul %170, %171, %cst_43 {dimension_numbers = #tpu.dot_dimension_numbers<[1], [0], [0], [1], [0, 0, 1, 1], [], []>} : vector<8x32xbf16>, vector<32x8xbf16>, vector<8x8xf32> -> vector<8x8xf32>
    %cst_44 = arith.constant 0.176776692 : f32
    %173 = vector.broadcast %cst_44 : f32 to vector<8x8xf32>
    %174 = arith.mulf %172, %173 : vector<8x8xf32>
    %175 = vector.broadcast %140 : vector<1x8xf32> to vector<8x8xf32>
    %176 = arith.addf %174, %175 : vector<8x8xf32>
    %cst_45 = arith.constant dense<0xFF800000> : vector<8xf32>
    %177 = vector.multi_reduction <maximumf>, %176, %cst_45 [1] : vector<8x8xf32> to vector<8xf32>
    %178 = vector.shape_cast %177 : vector<8xf32> to vector<8x1xf32>
    %179 = vector.broadcast %178 : vector<8x1xf32> to vector<8x8xf32>
    %180 = arith.subf %176, %179 : vector<8x8xf32>
    %181 = math.exp %180 : vector<8x8xf32>
    %cst_46 = arith.constant dense<0.000000e+00> : vector<8xf32>
    %182 = vector.multi_reduction <add>, %181, %cst_46 [1] : vector<8x8xf32> to vector<8xf32>
    %183 = vector.shape_cast %182 : vector<8xf32> to vector<8x1xf32>
    %184 = tpu.reciprocal %183 {approx = true} : vector<8x1xf32> -> vector<8x1xf32>
    %185 = vector.broadcast %184 : vector<8x1xf32> to vector<8x8xf32>
    %186 = arith.mulf %181, %185 : vector<8x8xf32>
    %187 = arith.truncf %186 : vector<8x8xf32> to vector<8x8xbf16>
    %cst_47 = arith.constant dense<0.000000e+00> : vector<8x32xf32>
    %188 = tpu.matmul %187, %169, %cst_47 {dimension_numbers = #tpu.dot_dimension_numbers<[1], [0], [0], [1], [0, 0, 1, 1], [], []>} : vector<8x8xbf16>, vector<8x32xbf16>, vector<8x32xf32> -> vector<8x32xf32>
    %189 = vector.extract_strided_slice %137 {offsets = [0, 64], sizes = [8, 32], strides = [1, 1]} : vector<8x128xf32> to vector<8x32xf32>
    %190 = vector.extract_strided_slice %138 {offsets = [0, 64], sizes = [8, 32], strides = [1, 1]} : vector<8x128xf32> to vector<8x32xf32>
    %191 = tpu.transpose %190, [1, 0] : vector<8x32xf32> -> vector<32x8xf32>
    %192 = vector.extract_strided_slice %139 {offsets = [0, 64], sizes = [8, 32], strides = [1, 1]} : vector<8x128xf32> to vector<8x32xf32>
    %193 = arith.truncf %192 : vector<8x32xf32> to vector<8x32xbf16>
    %194 = arith.truncf %189 : vector<8x32xf32> to vector<8x32xbf16>
    %195 = arith.truncf %191 : vector<32x8xf32> to vector<32x8xbf16>
    %cst_48 = arith.constant dense<0.000000e+00> : vector<8x8xf32>
    %196 = tpu.matmul %194, %195, %cst_48 {dimension_numbers = #tpu.dot_dimension_numbers<[1], [0], [0], [1], [0, 0, 1, 1], [], []>} : vector<8x32xbf16>, vector<32x8xbf16>, vector<8x8xf32> -> vector<8x8xf32>
    %cst_49 = arith.constant 0.176776692 : f32
    %197 = vector.broadcast %cst_49 : f32 to vector<8x8xf32>
    %198 = arith.mulf %196, %197 : vector<8x8xf32>
    %199 = vector.broadcast %140 : vector<1x8xf32> to vector<8x8xf32>
    %200 = arith.addf %198, %199 : vector<8x8xf32>
    %cst_50 = arith.constant dense<0xFF800000> : vector<8xf32>
    %201 = vector.multi_reduction <maximumf>, %200, %cst_50 [1] : vector<8x8xf32> to vector<8xf32>
    %202 = vector.shape_cast %201 : vector<8xf32> to vector<8x1xf32>
    %203 = vector.broadcast %202 : vector<8x1xf32> to vector<8x8xf32>
    %204 = arith.subf %200, %203 : vector<8x8xf32>
    %205 = math.exp %204 : vector<8x8xf32>
    %cst_51 = arith.constant dense<0.000000e+00> : vector<8xf32>
    %206 = vector.multi_reduction <add>, %205, %cst_51 [1] : vector<8x8xf32> to vector<8xf32>
    %207 = vector.shape_cast %206 : vector<8xf32> to vector<8x1xf32>
    %208 = tpu.reciprocal %207 {approx = true} : vector<8x1xf32> -> vector<8x1xf32>
    %209 = vector.broadcast %208 : vector<8x1xf32> to vector<8x8xf32>
    %210 = arith.mulf %205, %209 : vector<8x8xf32>
    %211 = arith.truncf %210 : vector<8x8xf32> to vector<8x8xbf16>
    %cst_52 = arith.constant dense<0.000000e+00> : vector<8x32xf32>
    %212 = tpu.matmul %211, %193, %cst_52 {dimension_numbers = #tpu.dot_dimension_numbers<[1], [0], [0], [1], [0, 0, 1, 1], [], []>} : vector<8x8xbf16>, vector<8x32xbf16>, vector<8x32xf32> -> vector<8x32xf32>
    %213 = vector.extract_strided_slice %137 {offsets = [0, 96], sizes = [8, 32], strides = [1, 1]} : vector<8x128xf32> to vector<8x32xf32>
    %214 = vector.extract_strided_slice %138 {offsets = [0, 96], sizes = [8, 32], strides = [1, 1]} : vector<8x128xf32> to vector<8x32xf32>
    %215 = tpu.transpose %214, [1, 0] : vector<8x32xf32> -> vector<32x8xf32>
    %216 = vector.extract_strided_slice %139 {offsets = [0, 96], sizes = [8, 32], strides = [1, 1]} : vector<8x128xf32> to vector<8x32xf32>
    %217 = arith.truncf %216 : vector<8x32xf32> to vector<8x32xbf16>
    %218 = arith.truncf %213 : vector<8x32xf32> to vector<8x32xbf16>
    %219 = arith.truncf %215 : vector<32x8xf32> to vector<32x8xbf16>
    %cst_53 = arith.constant dense<0.000000e+00> : vector<8x8xf32>
    %220 = tpu.matmul %218, %219, %cst_53 {dimension_numbers = #tpu.dot_dimension_numbers<[1], [0], [0], [1], [0, 0, 1, 1], [], []>} : vector<8x32xbf16>, vector<32x8xbf16>, vector<8x8xf32> -> vector<8x8xf32>
    %cst_54 = arith.constant 0.176776692 : f32
    %221 = vector.broadcast %cst_54 : f32 to vector<8x8xf32>
    %222 = arith.mulf %220, %221 : vector<8x8xf32>
    %223 = vector.broadcast %140 : vector<1x8xf32> to vector<8x8xf32>
    %224 = arith.addf %222, %223 : vector<8x8xf32>
    %cst_55 = arith.constant dense<0xFF800000> : vector<8xf32>
    %225 = vector.multi_reduction <maximumf>, %224, %cst_55 [1] : vector<8x8xf32> to vector<8xf32>
    %226 = vector.shape_cast %225 : vector<8xf32> to vector<8x1xf32>
    %227 = vector.broadcast %226 : vector<8x1xf32> to vector<8x8xf32>
    %228 = arith.subf %224, %227 : vector<8x8xf32>
    %229 = math.exp %228 : vector<8x8xf32>
    %cst_56 = arith.constant dense<0.000000e+00> : vector<8xf32>
    %230 = vector.multi_reduction <add>, %229, %cst_56 [1] : vector<8x8xf32> to vector<8xf32>
    %231 = vector.shape_cast %230 : vector<8xf32> to vector<8x1xf32>
    %232 = tpu.reciprocal %231 {approx = true} : vector<8x1xf32> -> vector<8x1xf32>
    %233 = vector.broadcast %232 : vector<8x1xf32> to vector<8x8xf32>
    %234 = arith.mulf %229, %233 : vector<8x8xf32>
    %235 = arith.truncf %234 : vector<8x8xf32> to vector<8x8xbf16>
    %cst_57 = arith.constant dense<0.000000e+00> : vector<8x32xf32>
    %236 = tpu.matmul %235, %217, %cst_57 {dimension_numbers = #tpu.dot_dimension_numbers<[1], [0], [0], [1], [0, 0, 1, 1], [], []>} : vector<8x8xbf16>, vector<8x32xbf16>, vector<8x32xf32> -> vector<8x32xf32>
    %237 = tpu.concatenate %164, %188, %212, %236 in 1 : vector<8x32xf32>, vector<8x32xf32>, vector<8x32xf32>, vector<8x32xf32> -> vector<8x128xf32>
    %238 = tpu.concatenate %135, %237 in 0 : vector<8x128xf32>, vector<8x128xf32> -> vector<16x128xf32>
    %c0_58 = arith.constant 0 : index
    %c0_59 = arith.constant 0 : index
    %c0_60 = arith.constant 0 : index
    %239 = vector.load %arg6[%c0_58, %c0_59, %c0_60] : memref<2x128x128xbf16, #tpu.memory_space<vmem>>, vector<1x128x128xbf16>
    %240 = vector.shape_cast %239 : vector<1x128x128xbf16> to vector<128x128xbf16>
    %241 = arith.truncf %238 : vector<16x128xf32> to vector<16x128xbf16>
    %cst_61 = arith.constant dense<0.000000e+00> : vector<16x128xf32>
    %242 = tpu.matmul %241, %240, %cst_61 {dimension_numbers = #tpu.dot_dimension_numbers<[1], [0], [0], [1], [0, 0, 1, 1], [], []>} : vector<16x128xbf16>, vector<128x128xbf16>, vector<16x128xf32> -> vector<16x128xf32>
    %c0_62 = arith.constant 0 : index
    %c0_63 = arith.constant 0 : index
    %c0_64 = arith.constant 0 : index
    %243 = vector.load %arg7[%c0_62, %c0_63, %c0_64] : memref<2x1x128xf32, #tpu.memory_space<vmem>>, vector<1x1x128xf32>
    %244 = vector.shape_cast %243 : vector<1x1x128xf32> to vector<1x128xf32>
    %245 = vector.broadcast %244 : vector<1x128xf32> to vector<16x128xf32>
    %246 = arith.addf %242, %245 : vector<16x128xf32>
    %247 = arith.addf %246, %24 : vector<16x128xf32>
    %c0_65 = arith.constant 0 : index
    %c0_66 = arith.constant 0 : index
    %c0_67 = arith.constant 0 : index
    %248 = vector.load %arg8[%c0_65, %c0_66, %c0_67] : memref<2x1x128xf32, #tpu.memory_space<vmem>>, vector<1x1x128xf32>
    %249 = vector.shape_cast %248 : vector<1x1x128xf32> to vector<1x128xf32>
    %c0_68 = arith.constant 0 : index
    %c0_69 = arith.constant 0 : index
    %c0_70 = arith.constant 0 : index
    %250 = vector.load %arg9[%c0_68, %c0_69, %c0_70] : memref<2x1x128xf32, #tpu.memory_space<vmem>>, vector<1x1x128xf32>
    %251 = vector.shape_cast %250 : vector<1x1x128xf32> to vector<1x128xf32>
    %cst_71 = arith.constant dense<0.000000e+00> : vector<16xf32>
    %252 = vector.multi_reduction <add>, %247, %cst_71 [1] : vector<16x128xf32> to vector<16xf32>
    %253 = vector.shape_cast %252 : vector<16xf32> to vector<16x1xf32>
    %cst_72 = arith.constant 1.280000e+02 : f32
    %254 = vector.broadcast %cst_72 : f32 to vector<16x1xf32>
    %255 = arith.divf %253, %254 : vector<16x1xf32>
    %256 = vector.broadcast %255 : vector<16x1xf32> to vector<16x128xf32>
    %257 = arith.subf %247, %256 : vector<16x128xf32>
    %258 = arith.mulf %257, %257 : vector<16x128xf32>
    %cst_73 = arith.constant dense<0.000000e+00> : vector<16xf32>
    %259 = vector.multi_reduction <add>, %258, %cst_73 [1] : vector<16x128xf32> to vector<16xf32>
    %260 = vector.shape_cast %259 : vector<16xf32> to vector<16x1xf32>
    %cst_74 = arith.constant 1.280000e+02 : f32
    %261 = vector.broadcast %cst_74 : f32 to vector<16x1xf32>
    %262 = arith.divf %260, %261 : vector<16x1xf32>
    %263 = vector.broadcast %255 : vector<16x1xf32> to vector<16x128xf32>
    %264 = arith.subf %247, %263 : vector<16x128xf32>
    %cst_75 = arith.constant 9.99999996E-13 : f32
    %265 = vector.broadcast %cst_75 : f32 to vector<16x1xf32>
    %266 = arith.addf %262, %265 : vector<16x1xf32>
    %267 = math.rsqrt %266 : vector<16x1xf32>
    %268 = vector.broadcast %267 : vector<16x1xf32> to vector<16x128xf32>
    %269 = arith.mulf %264, %268 : vector<16x128xf32>
    %270 = vector.broadcast %249 : vector<1x128xf32> to vector<16x128xf32>
    %271 = arith.mulf %269, %270 : vector<16x128xf32>
    %272 = vector.broadcast %251 : vector<1x128xf32> to vector<16x128xf32>
    %273 = arith.addf %271, %272 : vector<16x128xf32>
    %c0_76 = arith.constant 0 : index
    %c0_77 = arith.constant 0 : index
    %c0_78 = arith.constant 0 : index
    %274 = vector.load %arg10[%c0_76, %c0_77, %c0_78] : memref<2x128x256xbf16, #tpu.memory_space<vmem>>, vector<1x128x256xbf16>
    %275 = vector.shape_cast %274 : vector<1x128x256xbf16> to vector<128x256xbf16>
    %276 = arith.truncf %273 : vector<16x128xf32> to vector<16x128xbf16>
    %cst_79 = arith.constant dense<0.000000e+00> : vector<16x256xf32>
    %277 = tpu.matmul %276, %275, %cst_79 {dimension_numbers = #tpu.dot_dimension_numbers<[1], [0], [0], [1], [0, 0, 1, 1], [], []>} : vector<16x128xbf16>, vector<128x256xbf16>, vector<16x256xf32> -> vector<16x256xf32>
    %c0_80 = arith.constant 0 : index
    %c0_81 = arith.constant 0 : index
    %c0_82 = arith.constant 0 : index
    %278 = vector.load %arg11[%c0_80, %c0_81, %c0_82] : memref<2x1x256xf32, #tpu.memory_space<vmem>>, vector<1x1x256xf32>
    %279 = vector.shape_cast %278 : vector<1x1x256xf32> to vector<1x256xf32>
    %280 = vector.broadcast %279 : vector<1x256xf32> to vector<16x256xf32>
    %281 = arith.addf %277, %280 : vector<16x256xf32>
    %cst_83 = arith.constant 5.000000e-01 : f32
    %282 = vector.broadcast %cst_83 : f32 to vector<16x256xf32>
    %283 = arith.mulf %282, %281 : vector<16x256xf32>
    %cst_84 = arith.constant 4.471500e-02 : f32
    %284 = vector.broadcast %cst_84 : f32 to vector<16x256xf32>
    %285 = arith.mulf %284, %281 : vector<16x256xf32>
    %286 = arith.mulf %285, %281 : vector<16x256xf32>
    %287 = arith.mulf %286, %281 : vector<16x256xf32>
    %288 = arith.addf %281, %287 : vector<16x256xf32>
    %cst_85 = arith.constant 0.797884583 : f32
    %289 = vector.broadcast %cst_85 : f32 to vector<16x256xf32>
    %290 = arith.mulf %289, %288 : vector<16x256xf32>
    %291 = math.tanh %290 : vector<16x256xf32>
    %cst_86 = arith.constant 1.000000e+00 : f32
    %292 = vector.broadcast %cst_86 : f32 to vector<16x256xf32>
    %293 = arith.addf %292, %291 : vector<16x256xf32>
    %294 = arith.mulf %283, %293 : vector<16x256xf32>
    %c0_87 = arith.constant 0 : index
    %c0_88 = arith.constant 0 : index
    %c0_89 = arith.constant 0 : index
    %295 = vector.load %arg12[%c0_87, %c0_88, %c0_89] : memref<2x256x128xbf16, #tpu.memory_space<vmem>>, vector<1x256x128xbf16>
    %296 = vector.shape_cast %295 : vector<1x256x128xbf16> to vector<256x128xbf16>
    %297 = arith.truncf %294 : vector<16x256xf32> to vector<16x256xbf16>
    %cst_90 = arith.constant dense<0.000000e+00> : vector<16x128xf32>
    %298 = tpu.matmul %297, %296, %cst_90 {dimension_numbers = #tpu.dot_dimension_numbers<[1], [0], [0], [1], [0, 0, 1, 1], [], []>} : vector<16x256xbf16>, vector<256x128xbf16>, vector<16x128xf32> -> vector<16x128xf32>
    %c0_91 = arith.constant 0 : index
    %c0_92 = arith.constant 0 : index
    %c0_93 = arith.constant 0 : index
    %299 = vector.load %arg13[%c0_91, %c0_92, %c0_93] : memref<2x1x128xf32, #tpu.memory_space<vmem>>, vector<1x1x128xf32>
    %300 = vector.shape_cast %299 : vector<1x1x128xf32> to vector<1x128xf32>
    %301 = vector.broadcast %300 : vector<1x128xf32> to vector<16x128xf32>
    %302 = arith.addf %298, %301 : vector<16x128xf32>
    %303 = arith.addf %302, %273 : vector<16x128xf32>
    %c0_94 = arith.constant 0 : index
    %c0_95 = arith.constant 0 : index
    %c0_96 = arith.constant 0 : index
    %304 = vector.load %arg14[%c0_94, %c0_95, %c0_96] : memref<2x1x128xf32, #tpu.memory_space<vmem>>, vector<1x1x128xf32>
    %305 = vector.shape_cast %304 : vector<1x1x128xf32> to vector<1x128xf32>
    %c0_97 = arith.constant 0 : index
    %c0_98 = arith.constant 0 : index
    %c0_99 = arith.constant 0 : index
    %306 = vector.load %arg15[%c0_97, %c0_98, %c0_99] : memref<2x1x128xf32, #tpu.memory_space<vmem>>, vector<1x1x128xf32>
    %307 = vector.shape_cast %306 : vector<1x1x128xf32> to vector<1x128xf32>
    %cst_100 = arith.constant dense<0.000000e+00> : vector<16xf32>
    %308 = vector.multi_reduction <add>, %303, %cst_100 [1] : vector<16x128xf32> to vector<16xf32>
    %309 = vector.shape_cast %308 : vector<16xf32> to vector<16x1xf32>
    %cst_101 = arith.constant 1.280000e+02 : f32
    %310 = vector.broadcast %cst_101 : f32 to vector<16x1xf32>
    %311 = arith.divf %309, %310 : vector<16x1xf32>
    %312 = vector.broadcast %311 : vector<16x1xf32> to vector<16x128xf32>
    %313 = arith.subf %303, %312 : vector<16x128xf32>
    %314 = arith.mulf %313, %313 : vector<16x128xf32>
    %cst_102 = arith.constant dense<0.000000e+00> : vector<16xf32>
    %315 = vector.multi_reduction <add>, %314, %cst_102 [1] : vector<16x128xf32> to vector<16xf32>
    %316 = vector.shape_cast %315 : vector<16xf32> to vector<16x1xf32>
    %cst_103 = arith.constant 1.280000e+02 : f32
    %317 = vector.broadcast %cst_103 : f32 to vector<16x1xf32>
    %318 = arith.divf %316, %317 : vector<16x1xf32>
    %319 = vector.broadcast %311 : vector<16x1xf32> to vector<16x128xf32>
    %320 = arith.subf %303, %319 : vector<16x128xf32>
    %cst_104 = arith.constant 9.99999996E-13 : f32
    %321 = vector.broadcast %cst_104 : f32 to vector<16x1xf32>
    %322 = arith.addf %318, %321 : vector<16x1xf32>
    %323 = math.rsqrt %322 : vector<16x1xf32>
    %324 = vector.broadcast %323 : vector<16x1xf32> to vector<16x128xf32>
    %325 = arith.mulf %320, %324 : vector<16x128xf32>
    %326 = vector.broadcast %305 : vector<1x128xf32> to vector<16x128xf32>
    %327 = arith.mulf %325, %326 : vector<16x128xf32>
    %328 = vector.broadcast %307 : vector<1x128xf32> to vector<16x128xf32>
    %329 = arith.addf %327, %328 : vector<16x128xf32>
    %c1 = arith.constant 1 : index
    %c0_105 = arith.constant 0 : index
    %c0_106 = arith.constant 0 : index
    %330 = vector.load %arg4[%c1, %c0_105, %c0_106] : memref<2x128x384xbf16, #tpu.memory_space<vmem>>, vector<1x128x384xbf16>
    %331 = vector.shape_cast %330 : vector<1x128x384xbf16> to vector<128x384xbf16>
    %332 = arith.truncf %329 : vector<16x128xf32> to vector<16x128xbf16>
    %cst_107 = arith.constant dense<0.000000e+00> : vector<16x384xf32>
    %333 = tpu.matmul %332, %331, %cst_107 {dimension_numbers = #tpu.dot_dimension_numbers<[1], [0], [0], [1], [0, 0, 1, 1], [], []>} : vector<16x128xbf16>, vector<128x384xbf16>, vector<16x384xf32> -> vector<16x384xf32>
    %c1_108 = arith.constant 1 : index
    %c0_109 = arith.constant 0 : index
    %c0_110 = arith.constant 0 : index
    %334 = vector.load %arg5[%c1_108, %c0_109, %c0_110] : memref<2x1x384xf32, #tpu.memory_space<vmem>>, vector<1x1x384xf32>
    %335 = vector.shape_cast %334 : vector<1x1x384xf32> to vector<1x384xf32>
    %336 = vector.broadcast %335 : vector<1x384xf32> to vector<16x384xf32>
    %337 = arith.addf %333, %336 : vector<16x384xf32>
    %338 = vector.extract_strided_slice %337 {offsets = [0, 0], sizes = [8, 384], strides = [1, 1]} : vector<16x384xf32> to vector<8x384xf32>
    %339 = vector.extract_strided_slice %338 {offsets = [0, 0], sizes = [8, 128], strides = [1, 1]} : vector<8x384xf32> to vector<8x128xf32>
    %340 = vector.extract_strided_slice %338 {offsets = [0, 128], sizes = [8, 128], strides = [1, 1]} : vector<8x384xf32> to vector<8x128xf32>
    %341 = vector.extract_strided_slice %338 {offsets = [0, 256], sizes = [8, 128], strides = [1, 1]} : vector<8x384xf32> to vector<8x128xf32>
    %342 = vector.extract_strided_slice %25 {offsets = [0, 0], sizes = [1, 8], strides = [1, 1]} : vector<2x8xf32> to vector<1x8xf32>
    %343 = vector.extract_strided_slice %339 {offsets = [0, 0], sizes = [8, 32], strides = [1, 1]} : vector<8x128xf32> to vector<8x32xf32>
    %344 = vector.extract_strided_slice %340 {offsets = [0, 0], sizes = [8, 32], strides = [1, 1]} : vector<8x128xf32> to vector<8x32xf32>
    %345 = tpu.transpose %344, [1, 0] : vector<8x32xf32> -> vector<32x8xf32>
    %346 = vector.extract_strided_slice %341 {offsets = [0, 0], sizes = [8, 32], strides = [1, 1]} : vector<8x128xf32> to vector<8x32xf32>
    %347 = arith.truncf %346 : vector<8x32xf32> to vector<8x32xbf16>
    %348 = arith.truncf %343 : vector<8x32xf32> to vector<8x32xbf16>
    %349 = arith.truncf %345 : vector<32x8xf32> to vector<32x8xbf16>
    %cst_111 = arith.constant dense<0.000000e+00> : vector<8x8xf32>
    %350 = tpu.matmul %348, %349, %cst_111 {dimension_numbers = #tpu.dot_dimension_numbers<[1], [0], [0], [1], [0, 0, 1, 1], [], []>} : vector<8x32xbf16>, vector<32x8xbf16>, vector<8x8xf32> -> vector<8x8xf32>
    %cst_112 = arith.constant 0.176776692 : f32
    %351 = vector.broadcast %cst_112 : f32 to vector<8x8xf32>
    %352 = arith.mulf %350, %351 : vector<8x8xf32>
    %353 = vector.broadcast %342 : vector<1x8xf32> to vector<8x8xf32>
    %354 = arith.addf %352, %353 : vector<8x8xf32>
    %cst_113 = arith.constant dense<0xFF800000> : vector<8xf32>
    %355 = vector.multi_reduction <maximumf>, %354, %cst_113 [1] : vector<8x8xf32> to vector<8xf32>
    %356 = vector.shape_cast %355 : vector<8xf32> to vector<8x1xf32>
    %357 = vector.broadcast %356 : vector<8x1xf32> to vector<8x8xf32>
    %358 = arith.subf %354, %357 : vector<8x8xf32>
    %359 = math.exp %358 : vector<8x8xf32>
    %cst_114 = arith.constant dense<0.000000e+00> : vector<8xf32>
    %360 = vector.multi_reduction <add>, %359, %cst_114 [1] : vector<8x8xf32> to vector<8xf32>
    %361 = vector.shape_cast %360 : vector<8xf32> to vector<8x1xf32>
    %362 = tpu.reciprocal %361 {approx = true} : vector<8x1xf32> -> vector<8x1xf32>
    %363 = vector.broadcast %362 : vector<8x1xf32> to vector<8x8xf32>
    %364 = arith.mulf %359, %363 : vector<8x8xf32>
    %365 = arith.truncf %364 : vector<8x8xf32> to vector<8x8xbf16>
    %cst_115 = arith.constant dense<0.000000e+00> : vector<8x32xf32>
    %366 = tpu.matmul %365, %347, %cst_115 {dimension_numbers = #tpu.dot_dimension_numbers<[1], [0], [0], [1], [0, 0, 1, 1], [], []>} : vector<8x8xbf16>, vector<8x32xbf16>, vector<8x32xf32> -> vector<8x32xf32>
    %367 = vector.extract_strided_slice %339 {offsets = [0, 32], sizes = [8, 32], strides = [1, 1]} : vector<8x128xf32> to vector<8x32xf32>
    %368 = vector.extract_strided_slice %340 {offsets = [0, 32], sizes = [8, 32], strides = [1, 1]} : vector<8x128xf32> to vector<8x32xf32>
    %369 = tpu.transpose %368, [1, 0] : vector<8x32xf32> -> vector<32x8xf32>
    %370 = vector.extract_strided_slice %341 {offsets = [0, 32], sizes = [8, 32], strides = [1, 1]} : vector<8x128xf32> to vector<8x32xf32>
    %371 = arith.truncf %370 : vector<8x32xf32> to vector<8x32xbf16>
    %372 = arith.truncf %367 : vector<8x32xf32> to vector<8x32xbf16>
    %373 = arith.truncf %369 : vector<32x8xf32> to vector<32x8xbf16>
    %cst_116 = arith.constant dense<0.000000e+00> : vector<8x8xf32>
    %374 = tpu.matmul %372, %373, %cst_116 {dimension_numbers = #tpu.dot_dimension_numbers<[1], [0], [0], [1], [0, 0, 1, 1], [], []>} : vector<8x32xbf16>, vector<32x8xbf16>, vector<8x8xf32> -> vector<8x8xf32>
    %cst_117 = arith.constant 0.176776692 : f32
    %375 = vector.broadcast %cst_117 : f32 to vector<8x8xf32>
    %376 = arith.mulf %374, %375 : vector<8x8xf32>
    %377 = vector.broadcast %342 : vector<1x8xf32> to vector<8x8xf32>
    %378 = arith.addf %376, %377 : vector<8x8xf32>
    %cst_118 = arith.constant dense<0xFF800000> : vector<8xf32>
    %379 = vector.multi_reduction <maximumf>, %378, %cst_118 [1] : vector<8x8xf32> to vector<8xf32>
    %380 = vector.shape_cast %379 : vector<8xf32> to vector<8x1xf32>
    %381 = vector.broadcast %380 : vector<8x1xf32> to vector<8x8xf32>
    %382 = arith.subf %378, %381 : vector<8x8xf32>
    %383 = math.exp %382 : vector<8x8xf32>
    %cst_119 = arith.constant dense<0.000000e+00> : vector<8xf32>
    %384 = vector.multi_reduction <add>, %383, %cst_119 [1] : vector<8x8xf32> to vector<8xf32>
    %385 = vector.shape_cast %384 : vector<8xf32> to vector<8x1xf32>
    %386 = tpu.reciprocal %385 {approx = true} : vector<8x1xf32> -> vector<8x1xf32>
    %387 = vector.broadcast %386 : vector<8x1xf32> to vector<8x8xf32>
    %388 = arith.mulf %383, %387 : vector<8x8xf32>
    %389 = arith.truncf %388 : vector<8x8xf32> to vector<8x8xbf16>
    %cst_120 = arith.constant dense<0.000000e+00> : vector<8x32xf32>
    %390 = tpu.matmul %389, %371, %cst_120 {dimension_numbers = #tpu.dot_dimension_numbers<[1], [0], [0], [1], [0, 0, 1, 1], [], []>} : vector<8x8xbf16>, vector<8x32xbf16>, vector<8x32xf32> -> vector<8x32xf32>
    %391 = vector.extract_strided_slice %339 {offsets = [0, 64], sizes = [8, 32], strides = [1, 1]} : vector<8x128xf32> to vector<8x32xf32>
    %392 = vector.extract_strided_slice %340 {offsets = [0, 64], sizes = [8, 32], strides = [1, 1]} : vector<8x128xf32> to vector<8x32xf32>
    %393 = tpu.transpose %392, [1, 0] : vector<8x32xf32> -> vector<32x8xf32>
    %394 = vector.extract_strided_slice %341 {offsets = [0, 64], sizes = [8, 32], strides = [1, 1]} : vector<8x128xf32> to vector<8x32xf32>
    %395 = arith.truncf %394 : vector<8x32xf32> to vector<8x32xbf16>
    %396 = arith.truncf %391 : vector<8x32xf32> to vector<8x32xbf16>
    %397 = arith.truncf %393 : vector<32x8xf32> to vector<32x8xbf16>
    %cst_121 = arith.constant dense<0.000000e+00> : vector<8x8xf32>
    %398 = tpu.matmul %396, %397, %cst_121 {dimension_numbers = #tpu.dot_dimension_numbers<[1], [0], [0], [1], [0, 0, 1, 1], [], []>} : vector<8x32xbf16>, vector<32x8xbf16>, vector<8x8xf32> -> vector<8x8xf32>
    %cst_122 = arith.constant 0.176776692 : f32
    %399 = vector.broadcast %cst_122 : f32 to vector<8x8xf32>
    %400 = arith.mulf %398, %399 : vector<8x8xf32>
    %401 = vector.broadcast %342 : vector<1x8xf32> to vector<8x8xf32>
    %402 = arith.addf %400, %401 : vector<8x8xf32>
    %cst_123 = arith.constant dense<0xFF800000> : vector<8xf32>
    %403 = vector.multi_reduction <maximumf>, %402, %cst_123 [1] : vector<8x8xf32> to vector<8xf32>
    %404 = vector.shape_cast %403 : vector<8xf32> to vector<8x1xf32>
    %405 = vector.broadcast %404 : vector<8x1xf32> to vector<8x8xf32>
    %406 = arith.subf %402, %405 : vector<8x8xf32>
    %407 = math.exp %406 : vector<8x8xf32>
    %cst_124 = arith.constant dense<0.000000e+00> : vector<8xf32>
    %408 = vector.multi_reduction <add>, %407, %cst_124 [1] : vector<8x8xf32> to vector<8xf32>
    %409 = vector.shape_cast %408 : vector<8xf32> to vector<8x1xf32>
    %410 = tpu.reciprocal %409 {approx = true} : vector<8x1xf32> -> vector<8x1xf32>
    %411 = vector.broadcast %410 : vector<8x1xf32> to vector<8x8xf32>
    %412 = arith.mulf %407, %411 : vector<8x8xf32>
    %413 = arith.truncf %412 : vector<8x8xf32> to vector<8x8xbf16>
    %cst_125 = arith.constant dense<0.000000e+00> : vector<8x32xf32>
    %414 = tpu.matmul %413, %395, %cst_125 {dimension_numbers = #tpu.dot_dimension_numbers<[1], [0], [0], [1], [0, 0, 1, 1], [], []>} : vector<8x8xbf16>, vector<8x32xbf16>, vector<8x32xf32> -> vector<8x32xf32>
    %415 = vector.extract_strided_slice %339 {offsets = [0, 96], sizes = [8, 32], strides = [1, 1]} : vector<8x128xf32> to vector<8x32xf32>
    %416 = vector.extract_strided_slice %340 {offsets = [0, 96], sizes = [8, 32], strides = [1, 1]} : vector<8x128xf32> to vector<8x32xf32>
    %417 = tpu.transpose %416, [1, 0] : vector<8x32xf32> -> vector<32x8xf32>
    %418 = vector.extract_strided_slice %341 {offsets = [0, 96], sizes = [8, 32], strides = [1, 1]} : vector<8x128xf32> to vector<8x32xf32>
    %419 = arith.truncf %418 : vector<8x32xf32> to vector<8x32xbf16>
    %420 = arith.truncf %415 : vector<8x32xf32> to vector<8x32xbf16>
    %421 = arith.truncf %417 : vector<32x8xf32> to vector<32x8xbf16>
    %cst_126 = arith.constant dense<0.000000e+00> : vector<8x8xf32>
    %422 = tpu.matmul %420, %421, %cst_126 {dimension_numbers = #tpu.dot_dimension_numbers<[1], [0], [0], [1], [0, 0, 1, 1], [], []>} : vector<8x32xbf16>, vector<32x8xbf16>, vector<8x8xf32> -> vector<8x8xf32>
    %cst_127 = arith.constant 0.176776692 : f32
    %423 = vector.broadcast %cst_127 : f32 to vector<8x8xf32>
    %424 = arith.mulf %422, %423 : vector<8x8xf32>
    %425 = vector.broadcast %342 : vector<1x8xf32> to vector<8x8xf32>
    %426 = arith.addf %424, %425 : vector<8x8xf32>
    %cst_128 = arith.constant dense<0xFF800000> : vector<8xf32>
    %427 = vector.multi_reduction <maximumf>, %426, %cst_128 [1] : vector<8x8xf32> to vector<8xf32>
    %428 = vector.shape_cast %427 : vector<8xf32> to vector<8x1xf32>
    %429 = vector.broadcast %428 : vector<8x1xf32> to vector<8x8xf32>
    %430 = arith.subf %426, %429 : vector<8x8xf32>
    %431 = math.exp %430 : vector<8x8xf32>
    %cst_129 = arith.constant dense<0.000000e+00> : vector<8xf32>
    %432 = vector.multi_reduction <add>, %431, %cst_129 [1] : vector<8x8xf32> to vector<8xf32>
    %433 = vector.shape_cast %432 : vector<8xf32> to vector<8x1xf32>
    %434 = tpu.reciprocal %433 {approx = true} : vector<8x1xf32> -> vector<8x1xf32>
    %435 = vector.broadcast %434 : vector<8x1xf32> to vector<8x8xf32>
    %436 = arith.mulf %431, %435 : vector<8x8xf32>
    %437 = arith.truncf %436 : vector<8x8xf32> to vector<8x8xbf16>
    %cst_130 = arith.constant dense<0.000000e+00> : vector<8x32xf32>
    %438 = tpu.matmul %437, %419, %cst_130 {dimension_numbers = #tpu.dot_dimension_numbers<[1], [0], [0], [1], [0, 0, 1, 1], [], []>} : vector<8x8xbf16>, vector<8x32xbf16>, vector<8x32xf32> -> vector<8x32xf32>
    %439 = tpu.concatenate %366, %390, %414, %438 in 1 : vector<8x32xf32>, vector<8x32xf32>, vector<8x32xf32>, vector<8x32xf32> -> vector<8x128xf32>
    %440 = vector.extract_strided_slice %337 {offsets = [8, 0], sizes = [8, 384], strides = [1, 1]} : vector<16x384xf32> to vector<8x384xf32>
    %441 = vector.extract_strided_slice %440 {offsets = [0, 0], sizes = [8, 128], strides = [1, 1]} : vector<8x384xf32> to vector<8x128xf32>
    %442 = vector.extract_strided_slice %440 {offsets = [0, 128], sizes = [8, 128], strides = [1, 1]} : vector<8x384xf32> to vector<8x128xf32>
    %443 = vector.extract_strided_slice %440 {offsets = [0, 256], sizes = [8, 128], strides = [1, 1]} : vector<8x384xf32> to vector<8x128xf32>
    %444 = vector.extract_strided_slice %25 {offsets = [1, 0], sizes = [1, 8], strides = [1, 1]} : vector<2x8xf32> to vector<1x8xf32>
    %445 = vector.extract_strided_slice %441 {offsets = [0, 0], sizes = [8, 32], strides = [1, 1]} : vector<8x128xf32> to vector<8x32xf32>
    %446 = vector.extract_strided_slice %442 {offsets = [0, 0], sizes = [8, 32], strides = [1, 1]} : vector<8x128xf32> to vector<8x32xf32>
    %447 = tpu.transpose %446, [1, 0] : vector<8x32xf32> -> vector<32x8xf32>
    %448 = vector.extract_strided_slice %443 {offsets = [0, 0], sizes = [8, 32], strides = [1, 1]} : vector<8x128xf32> to vector<8x32xf32>
    %449 = arith.truncf %448 : vector<8x32xf32> to vector<8x32xbf16>
    %450 = arith.truncf %445 : vector<8x32xf32> to vector<8x32xbf16>
    %451 = arith.truncf %447 : vector<32x8xf32> to vector<32x8xbf16>
    %cst_131 = arith.constant dense<0.000000e+00> : vector<8x8xf32>
    %452 = tpu.matmul %450, %451, %cst_131 {dimension_numbers = #tpu.dot_dimension_numbers<[1], [0], [0], [1], [0, 0, 1, 1], [], []>} : vector<8x32xbf16>, vector<32x8xbf16>, vector<8x8xf32> -> vector<8x8xf32>
    %cst_132 = arith.constant 0.176776692 : f32
    %453 = vector.broadcast %cst_132 : f32 to vector<8x8xf32>
    %454 = arith.mulf %452, %453 : vector<8x8xf32>
    %455 = vector.broadcast %444 : vector<1x8xf32> to vector<8x8xf32>
    %456 = arith.addf %454, %455 : vector<8x8xf32>
    %cst_133 = arith.constant dense<0xFF800000> : vector<8xf32>
    %457 = vector.multi_reduction <maximumf>, %456, %cst_133 [1] : vector<8x8xf32> to vector<8xf32>
    %458 = vector.shape_cast %457 : vector<8xf32> to vector<8x1xf32>
    %459 = vector.broadcast %458 : vector<8x1xf32> to vector<8x8xf32>
    %460 = arith.subf %456, %459 : vector<8x8xf32>
    %461 = math.exp %460 : vector<8x8xf32>
    %cst_134 = arith.constant dense<0.000000e+00> : vector<8xf32>
    %462 = vector.multi_reduction <add>, %461, %cst_134 [1] : vector<8x8xf32> to vector<8xf32>
    %463 = vector.shape_cast %462 : vector<8xf32> to vector<8x1xf32>
    %464 = tpu.reciprocal %463 {approx = true} : vector<8x1xf32> -> vector<8x1xf32>
    %465 = vector.broadcast %464 : vector<8x1xf32> to vector<8x8xf32>
    %466 = arith.mulf %461, %465 : vector<8x8xf32>
    %467 = arith.truncf %466 : vector<8x8xf32> to vector<8x8xbf16>
    %cst_135 = arith.constant dense<0.000000e+00> : vector<8x32xf32>
    %468 = tpu.matmul %467, %449, %cst_135 {dimension_numbers = #tpu.dot_dimension_numbers<[1], [0], [0], [1], [0, 0, 1, 1], [], []>} : vector<8x8xbf16>, vector<8x32xbf16>, vector<8x32xf32> -> vector<8x32xf32>
    %469 = vector.extract_strided_slice %441 {offsets = [0, 32], sizes = [8, 32], strides = [1, 1]} : vector<8x128xf32> to vector<8x32xf32>
    %470 = vector.extract_strided_slice %442 {offsets = [0, 32], sizes = [8, 32], strides = [1, 1]} : vector<8x128xf32> to vector<8x32xf32>
    %471 = tpu.transpose %470, [1, 0] : vector<8x32xf32> -> vector<32x8xf32>
    %472 = vector.extract_strided_slice %443 {offsets = [0, 32], sizes = [8, 32], strides = [1, 1]} : vector<8x128xf32> to vector<8x32xf32>
    %473 = arith.truncf %472 : vector<8x32xf32> to vector<8x32xbf16>
    %474 = arith.truncf %469 : vector<8x32xf32> to vector<8x32xbf16>
    %475 = arith.truncf %471 : vector<32x8xf32> to vector<32x8xbf16>
    %cst_136 = arith.constant dense<0.000000e+00> : vector<8x8xf32>
    %476 = tpu.matmul %474, %475, %cst_136 {dimension_numbers = #tpu.dot_dimension_numbers<[1], [0], [0], [1], [0, 0, 1, 1], [], []>} : vector<8x32xbf16>, vector<32x8xbf16>, vector<8x8xf32> -> vector<8x8xf32>
    %cst_137 = arith.constant 0.176776692 : f32
    %477 = vector.broadcast %cst_137 : f32 to vector<8x8xf32>
    %478 = arith.mulf %476, %477 : vector<8x8xf32>
    %479 = vector.broadcast %444 : vector<1x8xf32> to vector<8x8xf32>
    %480 = arith.addf %478, %479 : vector<8x8xf32>
    %cst_138 = arith.constant dense<0xFF800000> : vector<8xf32>
    %481 = vector.multi_reduction <maximumf>, %480, %cst_138 [1] : vector<8x8xf32> to vector<8xf32>
    %482 = vector.shape_cast %481 : vector<8xf32> to vector<8x1xf32>
    %483 = vector.broadcast %482 : vector<8x1xf32> to vector<8x8xf32>
    %484 = arith.subf %480, %483 : vector<8x8xf32>
    %485 = math.exp %484 : vector<8x8xf32>
    %cst_139 = arith.constant dense<0.000000e+00> : vector<8xf32>
    %486 = vector.multi_reduction <add>, %485, %cst_139 [1] : vector<8x8xf32> to vector<8xf32>
    %487 = vector.shape_cast %486 : vector<8xf32> to vector<8x1xf32>
    %488 = tpu.reciprocal %487 {approx = true} : vector<8x1xf32> -> vector<8x1xf32>
    %489 = vector.broadcast %488 : vector<8x1xf32> to vector<8x8xf32>
    %490 = arith.mulf %485, %489 : vector<8x8xf32>
    %491 = arith.truncf %490 : vector<8x8xf32> to vector<8x8xbf16>
    %cst_140 = arith.constant dense<0.000000e+00> : vector<8x32xf32>
    %492 = tpu.matmul %491, %473, %cst_140 {dimension_numbers = #tpu.dot_dimension_numbers<[1], [0], [0], [1], [0, 0, 1, 1], [], []>} : vector<8x8xbf16>, vector<8x32xbf16>, vector<8x32xf32> -> vector<8x32xf32>
    %493 = vector.extract_strided_slice %441 {offsets = [0, 64], sizes = [8, 32], strides = [1, 1]} : vector<8x128xf32> to vector<8x32xf32>
    %494 = vector.extract_strided_slice %442 {offsets = [0, 64], sizes = [8, 32], strides = [1, 1]} : vector<8x128xf32> to vector<8x32xf32>
    %495 = tpu.transpose %494, [1, 0] : vector<8x32xf32> -> vector<32x8xf32>
    %496 = vector.extract_strided_slice %443 {offsets = [0, 64], sizes = [8, 32], strides = [1, 1]} : vector<8x128xf32> to vector<8x32xf32>
    %497 = arith.truncf %496 : vector<8x32xf32> to vector<8x32xbf16>
    %498 = arith.truncf %493 : vector<8x32xf32> to vector<8x32xbf16>
    %499 = arith.truncf %495 : vector<32x8xf32> to vector<32x8xbf16>
    %cst_141 = arith.constant dense<0.000000e+00> : vector<8x8xf32>
    %500 = tpu.matmul %498, %499, %cst_141 {dimension_numbers = #tpu.dot_dimension_numbers<[1], [0], [0], [1], [0, 0, 1, 1], [], []>} : vector<8x32xbf16>, vector<32x8xbf16>, vector<8x8xf32> -> vector<8x8xf32>
    %cst_142 = arith.constant 0.176776692 : f32
    %501 = vector.broadcast %cst_142 : f32 to vector<8x8xf32>
    %502 = arith.mulf %500, %501 : vector<8x8xf32>
    %503 = vector.broadcast %444 : vector<1x8xf32> to vector<8x8xf32>
    %504 = arith.addf %502, %503 : vector<8x8xf32>
    %cst_143 = arith.constant dense<0xFF800000> : vector<8xf32>
    %505 = vector.multi_reduction <maximumf>, %504, %cst_143 [1] : vector<8x8xf32> to vector<8xf32>
    %506 = vector.shape_cast %505 : vector<8xf32> to vector<8x1xf32>
    %507 = vector.broadcast %506 : vector<8x1xf32> to vector<8x8xf32>
    %508 = arith.subf %504, %507 : vector<8x8xf32>
    %509 = math.exp %508 : vector<8x8xf32>
    %cst_144 = arith.constant dense<0.000000e+00> : vector<8xf32>
    %510 = vector.multi_reduction <add>, %509, %cst_144 [1] : vector<8x8xf32> to vector<8xf32>
    %511 = vector.shape_cast %510 : vector<8xf32> to vector<8x1xf32>
    %512 = tpu.reciprocal %511 {approx = true} : vector<8x1xf32> -> vector<8x1xf32>
    %513 = vector.broadcast %512 : vector<8x1xf32> to vector<8x8xf32>
    %514 = arith.mulf %509, %513 : vector<8x8xf32>
    %515 = arith.truncf %514 : vector<8x8xf32> to vector<8x8xbf16>
    %cst_145 = arith.constant dense<0.000000e+00> : vector<8x32xf32>
    %516 = tpu.matmul %515, %497, %cst_145 {dimension_numbers = #tpu.dot_dimension_numbers<[1], [0], [0], [1], [0, 0, 1, 1], [], []>} : vector<8x8xbf16>, vector<8x32xbf16>, vector<8x32xf32> -> vector<8x32xf32>
    %517 = vector.extract_strided_slice %441 {offsets = [0, 96], sizes = [8, 32], strides = [1, 1]} : vector<8x128xf32> to vector<8x32xf32>
    %518 = vector.extract_strided_slice %442 {offsets = [0, 96], sizes = [8, 32], strides = [1, 1]} : vector<8x128xf32> to vector<8x32xf32>
    %519 = tpu.transpose %518, [1, 0] : vector<8x32xf32> -> vector<32x8xf32>
    %520 = vector.extract_strided_slice %443 {offsets = [0, 96], sizes = [8, 32], strides = [1, 1]} : vector<8x128xf32> to vector<8x32xf32>
    %521 = arith.truncf %520 : vector<8x32xf32> to vector<8x32xbf16>
    %522 = arith.truncf %517 : vector<8x32xf32> to vector<8x32xbf16>
    %523 = arith.truncf %519 : vector<32x8xf32> to vector<32x8xbf16>
    %cst_146 = arith.constant dense<0.000000e+00> : vector<8x8xf32>
    %524 = tpu.matmul %522, %523, %cst_146 {dimension_numbers = #tpu.dot_dimension_numbers<[1], [0], [0], [1], [0, 0, 1, 1], [], []>} : vector<8x32xbf16>, vector<32x8xbf16>, vector<8x8xf32> -> vector<8x8xf32>
    %cst_147 = arith.constant 0.176776692 : f32
    %525 = vector.broadcast %cst_147 : f32 to vector<8x8xf32>
    %526 = arith.mulf %524, %525 : vector<8x8xf32>
    %527 = vector.broadcast %444 : vector<1x8xf32> to vector<8x8xf32>
    %528 = arith.addf %526, %527 : vector<8x8xf32>
    %cst_148 = arith.constant dense<0xFF800000> : vector<8xf32>
    %529 = vector.multi_reduction <maximumf>, %528, %cst_148 [1] : vector<8x8xf32> to vector<8xf32>
    %530 = vector.shape_cast %529 : vector<8xf32> to vector<8x1xf32>
    %531 = vector.broadcast %530 : vector<8x1xf32> to vector<8x8xf32>
    %532 = arith.subf %528, %531 : vector<8x8xf32>
    %533 = math.exp %532 : vector<8x8xf32>
    %cst_149 = arith.constant dense<0.000000e+00> : vector<8xf32>
    %534 = vector.multi_reduction <add>, %533, %cst_149 [1] : vector<8x8xf32> to vector<8xf32>
    %535 = vector.shape_cast %534 : vector<8xf32> to vector<8x1xf32>
    %536 = tpu.reciprocal %535 {approx = true} : vector<8x1xf32> -> vector<8x1xf32>
    %537 = vector.broadcast %536 : vector<8x1xf32> to vector<8x8xf32>
    %538 = arith.mulf %533, %537 : vector<8x8xf32>
    %539 = arith.truncf %538 : vector<8x8xf32> to vector<8x8xbf16>
    %cst_150 = arith.constant dense<0.000000e+00> : vector<8x32xf32>
    %540 = tpu.matmul %539, %521, %cst_150 {dimension_numbers = #tpu.dot_dimension_numbers<[1], [0], [0], [1], [0, 0, 1, 1], [], []>} : vector<8x8xbf16>, vector<8x32xbf16>, vector<8x32xf32> -> vector<8x32xf32>
    %541 = tpu.concatenate %468, %492, %516, %540 in 1 : vector<8x32xf32>, vector<8x32xf32>, vector<8x32xf32>, vector<8x32xf32> -> vector<8x128xf32>
    %542 = tpu.concatenate %439, %541 in 0 : vector<8x128xf32>, vector<8x128xf32> -> vector<16x128xf32>
    %c1_151 = arith.constant 1 : index
    %c0_152 = arith.constant 0 : index
    %c0_153 = arith.constant 0 : index
    %543 = vector.load %arg6[%c1_151, %c0_152, %c0_153] : memref<2x128x128xbf16, #tpu.memory_space<vmem>>, vector<1x128x128xbf16>
    %544 = vector.shape_cast %543 : vector<1x128x128xbf16> to vector<128x128xbf16>
    %545 = arith.truncf %542 : vector<16x128xf32> to vector<16x128xbf16>
    %cst_154 = arith.constant dense<0.000000e+00> : vector<16x128xf32>
    %546 = tpu.matmul %545, %544, %cst_154 {dimension_numbers = #tpu.dot_dimension_numbers<[1], [0], [0], [1], [0, 0, 1, 1], [], []>} : vector<16x128xbf16>, vector<128x128xbf16>, vector<16x128xf32> -> vector<16x128xf32>
    %c1_155 = arith.constant 1 : index
    %c0_156 = arith.constant 0 : index
    %c0_157 = arith.constant 0 : index
    %547 = vector.load %arg7[%c1_155, %c0_156, %c0_157] : memref<2x1x128xf32, #tpu.memory_space<vmem>>, vector<1x1x128xf32>
    %548 = vector.shape_cast %547 : vector<1x1x128xf32> to vector<1x128xf32>
    %549 = vector.broadcast %548 : vector<1x128xf32> to vector<16x128xf32>
    %550 = arith.addf %546, %549 : vector<16x128xf32>
    %551 = arith.addf %550, %329 : vector<16x128xf32>
    %c1_158 = arith.constant 1 : index
    %c0_159 = arith.constant 0 : index
    %c0_160 = arith.constant 0 : index
    %552 = vector.load %arg8[%c1_158, %c0_159, %c0_160] : memref<2x1x128xf32, #tpu.memory_space<vmem>>, vector<1x1x128xf32>
    %553 = vector.shape_cast %552 : vector<1x1x128xf32> to vector<1x128xf32>
    %c1_161 = arith.constant 1 : index
    %c0_162 = arith.constant 0 : index
    %c0_163 = arith.constant 0 : index
    %554 = vector.load %arg9[%c1_161, %c0_162, %c0_163] : memref<2x1x128xf32, #tpu.memory_space<vmem>>, vector<1x1x128xf32>
    %555 = vector.shape_cast %554 : vector<1x1x128xf32> to vector<1x128xf32>
    %cst_164 = arith.constant dense<0.000000e+00> : vector<16xf32>
    %556 = vector.multi_reduction <add>, %551, %cst_164 [1] : vector<16x128xf32> to vector<16xf32>
    %557 = vector.shape_cast %556 : vector<16xf32> to vector<16x1xf32>
    %cst_165 = arith.constant 1.280000e+02 : f32
    %558 = vector.broadcast %cst_165 : f32 to vector<16x1xf32>
    %559 = arith.divf %557, %558 : vector<16x1xf32>
    %560 = vector.broadcast %559 : vector<16x1xf32> to vector<16x128xf32>
    %561 = arith.subf %551, %560 : vector<16x128xf32>
    %562 = arith.mulf %561, %561 : vector<16x128xf32>
    %cst_166 = arith.constant dense<0.000000e+00> : vector<16xf32>
    %563 = vector.multi_reduction <add>, %562, %cst_166 [1] : vector<16x128xf32> to vector<16xf32>
    %564 = vector.shape_cast %563 : vector<16xf32> to vector<16x1xf32>
    %cst_167 = arith.constant 1.280000e+02 : f32
    %565 = vector.broadcast %cst_167 : f32 to vector<16x1xf32>
    %566 = arith.divf %564, %565 : vector<16x1xf32>
    %567 = vector.broadcast %559 : vector<16x1xf32> to vector<16x128xf32>
    %568 = arith.subf %551, %567 : vector<16x128xf32>
    %cst_168 = arith.constant 9.99999996E-13 : f32
    %569 = vector.broadcast %cst_168 : f32 to vector<16x1xf32>
    %570 = arith.addf %566, %569 : vector<16x1xf32>
    %571 = math.rsqrt %570 : vector<16x1xf32>
    %572 = vector.broadcast %571 : vector<16x1xf32> to vector<16x128xf32>
    %573 = arith.mulf %568, %572 : vector<16x128xf32>
    %574 = vector.broadcast %553 : vector<1x128xf32> to vector<16x128xf32>
    %575 = arith.mulf %573, %574 : vector<16x128xf32>
    %576 = vector.broadcast %555 : vector<1x128xf32> to vector<16x128xf32>
    %577 = arith.addf %575, %576 : vector<16x128xf32>
    %c1_169 = arith.constant 1 : index
    %c0_170 = arith.constant 0 : index
    %c0_171 = arith.constant 0 : index
    %578 = vector.load %arg10[%c1_169, %c0_170, %c0_171] : memref<2x128x256xbf16, #tpu.memory_space<vmem>>, vector<1x128x256xbf16>
    %579 = vector.shape_cast %578 : vector<1x128x256xbf16> to vector<128x256xbf16>
    %580 = arith.truncf %577 : vector<16x128xf32> to vector<16x128xbf16>
    %cst_172 = arith.constant dense<0.000000e+00> : vector<16x256xf32>
    %581 = tpu.matmul %580, %579, %cst_172 {dimension_numbers = #tpu.dot_dimension_numbers<[1], [0], [0], [1], [0, 0, 1, 1], [], []>} : vector<16x128xbf16>, vector<128x256xbf16>, vector<16x256xf32> -> vector<16x256xf32>
    %c1_173 = arith.constant 1 : index
    %c0_174 = arith.constant 0 : index
    %c0_175 = arith.constant 0 : index
    %582 = vector.load %arg11[%c1_173, %c0_174, %c0_175] : memref<2x1x256xf32, #tpu.memory_space<vmem>>, vector<1x1x256xf32>
    %583 = vector.shape_cast %582 : vector<1x1x256xf32> to vector<1x256xf32>
    %584 = vector.broadcast %583 : vector<1x256xf32> to vector<16x256xf32>
    %585 = arith.addf %581, %584 : vector<16x256xf32>
    %cst_176 = arith.constant 5.000000e-01 : f32
    %586 = vector.broadcast %cst_176 : f32 to vector<16x256xf32>
    %587 = arith.mulf %586, %585 : vector<16x256xf32>
    %cst_177 = arith.constant 4.471500e-02 : f32
    %588 = vector.broadcast %cst_177 : f32 to vector<16x256xf32>
    %589 = arith.mulf %588, %585 : vector<16x256xf32>
    %590 = arith.mulf %589, %585 : vector<16x256xf32>
    %591 = arith.mulf %590, %585 : vector<16x256xf32>
    %592 = arith.addf %585, %591 : vector<16x256xf32>
    %cst_178 = arith.constant 0.797884583 : f32
    %593 = vector.broadcast %cst_178 : f32 to vector<16x256xf32>
    %594 = arith.mulf %593, %592 : vector<16x256xf32>
    %595 = math.tanh %594 : vector<16x256xf32>
    %cst_179 = arith.constant 1.000000e+00 : f32
    %596 = vector.broadcast %cst_179 : f32 to vector<16x256xf32>
    %597 = arith.addf %596, %595 : vector<16x256xf32>
    %598 = arith.mulf %587, %597 : vector<16x256xf32>
    %c1_180 = arith.constant 1 : index
    %c0_181 = arith.constant 0 : index
    %c0_182 = arith.constant 0 : index
    %599 = vector.load %arg12[%c1_180, %c0_181, %c0_182] : memref<2x256x128xbf16, #tpu.memory_space<vmem>>, vector<1x256x128xbf16>
    %600 = vector.shape_cast %599 : vector<1x256x128xbf16> to vector<256x128xbf16>
    %601 = arith.truncf %598 : vector<16x256xf32> to vector<16x256xbf16>
    %cst_183 = arith.constant dense<0.000000e+00> : vector<16x128xf32>
    %602 = tpu.matmul %601, %600, %cst_183 {dimension_numbers = #tpu.dot_dimension_numbers<[1], [0], [0], [1], [0, 0, 1, 1], [], []>} : vector<16x256xbf16>, vector<256x128xbf16>, vector<16x128xf32> -> vector<16x128xf32>
    %c1_184 = arith.constant 1 : index
    %c0_185 = arith.constant 0 : index
    %c0_186 = arith.constant 0 : index
    %603 = vector.load %arg13[%c1_184, %c0_185, %c0_186] : memref<2x1x128xf32, #tpu.memory_space<vmem>>, vector<1x1x128xf32>
    %604 = vector.shape_cast %603 : vector<1x1x128xf32> to vector<1x128xf32>
    %605 = vector.broadcast %604 : vector<1x128xf32> to vector<16x128xf32>
    %606 = arith.addf %602, %605 : vector<16x128xf32>
    %607 = arith.addf %606, %577 : vector<16x128xf32>
    %c1_187 = arith.constant 1 : index
    %c0_188 = arith.constant 0 : index
    %c0_189 = arith.constant 0 : index
    %608 = vector.load %arg14[%c1_187, %c0_188, %c0_189] : memref<2x1x128xf32, #tpu.memory_space<vmem>>, vector<1x1x128xf32>
    %609 = vector.shape_cast %608 : vector<1x1x128xf32> to vector<1x128xf32>
    %c1_190 = arith.constant 1 : index
    %c0_191 = arith.constant 0 : index
    %c0_192 = arith.constant 0 : index
    %610 = vector.load %arg15[%c1_190, %c0_191, %c0_192] : memref<2x1x128xf32, #tpu.memory_space<vmem>>, vector<1x1x128xf32>
    %611 = vector.shape_cast %610 : vector<1x1x128xf32> to vector<1x128xf32>
    %cst_193 = arith.constant dense<0.000000e+00> : vector<16xf32>
    %612 = vector.multi_reduction <add>, %607, %cst_193 [1] : vector<16x128xf32> to vector<16xf32>
    %613 = vector.shape_cast %612 : vector<16xf32> to vector<16x1xf32>
    %cst_194 = arith.constant 1.280000e+02 : f32
    %614 = vector.broadcast %cst_194 : f32 to vector<16x1xf32>
    %615 = arith.divf %613, %614 : vector<16x1xf32>
    %616 = vector.broadcast %615 : vector<16x1xf32> to vector<16x128xf32>
    %617 = arith.subf %607, %616 : vector<16x128xf32>
    %618 = arith.mulf %617, %617 : vector<16x128xf32>
    %cst_195 = arith.constant dense<0.000000e+00> : vector<16xf32>
    %619 = vector.multi_reduction <add>, %618, %cst_195 [1] : vector<16x128xf32> to vector<16xf32>
    %620 = vector.shape_cast %619 : vector<16xf32> to vector<16x1xf32>
    %cst_196 = arith.constant 1.280000e+02 : f32
    %621 = vector.broadcast %cst_196 : f32 to vector<16x1xf32>
    %622 = arith.divf %620, %621 : vector<16x1xf32>
    %623 = vector.broadcast %615 : vector<16x1xf32> to vector<16x128xf32>
    %624 = arith.subf %607, %623 : vector<16x128xf32>
    %cst_197 = arith.constant 9.99999996E-13 : f32
    %625 = vector.broadcast %cst_197 : f32 to vector<16x1xf32>
    %626 = arith.addf %622, %625 : vector<16x1xf32>
    %627 = math.rsqrt %626 : vector<16x1xf32>
    %628 = vector.broadcast %627 : vector<16x1xf32> to vector<16x128xf32>
    %629 = arith.mulf %624, %628 : vector<16x128xf32>
    %630 = vector.broadcast %609 : vector<1x128xf32> to vector<16x128xf32>
    %631 = arith.mulf %629, %630 : vector<16x128xf32>
    %632 = vector.broadcast %611 : vector<1x128xf32> to vector<16x128xf32>
    %633 = arith.addf %631, %632 : vector<16x128xf32>
    %634 = vector.extract_strided_slice %633 {offsets = [0, 0], sizes = [1, 128], strides = [1, 1]} : vector<16x128xf32> to vector<1x128xf32>
    %635 = vector.extract_strided_slice %633 {offsets = [8, 0], sizes = [1, 128], strides = [1, 1]} : vector<16x128xf32> to vector<1x128xf32>
    %636 = tpu.concatenate %634, %635 in 0 : vector<1x128xf32>, vector<1x128xf32> -> vector<2x128xf32>
    %c0_198 = arith.constant 0 : index
    %c0_199 = arith.constant 0 : index
    %637 = vector.load %arg16[%c0_198, %c0_199] : memref<128x128xbf16, #tpu.memory_space<vmem>>, vector<128x128xbf16>
    %638 = arith.truncf %636 : vector<2x128xf32> to vector<2x128xbf16>
    %cst_200 = arith.constant dense<0.000000e+00> : vector<2x128xf32>
    %639 = tpu.matmul %638, %637, %cst_200 {dimension_numbers = #tpu.dot_dimension_numbers<[1], [0], [0], [1], [0, 0, 1, 1], [], []>} : vector<2x128xbf16>, vector<128x128xbf16>, vector<2x128xf32> -> vector<2x128xf32>
    %c0_201 = arith.constant 0 : index
    %c0_202 = arith.constant 0 : index
    %640 = vector.load %arg17[%c0_201, %c0_202] : memref<1x128xf32, #tpu.memory_space<vmem>>, vector<1x128xf32>
    %641 = vector.broadcast %640 : vector<1x128xf32> to vector<2x128xf32>
    %642 = arith.addf %639, %641 : vector<2x128xf32>
    %c0_203 = arith.constant 0 : index
    %c0_204 = arith.constant 0 : index
    %643 = vector.load %arg18[%c0_203, %c0_204] : memref<2x128xf32, #tpu.memory_space<vmem>>, vector<2x128xf32>
    tpu.vector_store %arg18[%c0_203, %c0_204], %642 {strides = array<i32>} : memref<2x128xf32, #tpu.memory_space<vmem>>, vector<2x128xf32>,
    return
  }
}

</mosaic_0001>

<llo_original>
// kernel: forward.1
$region0: #{forward.1}
  #allocation0 [shape = 'u32[]', space=smem, size = 0x4, offset = 0x4, fixed_abs, tag = 'smem constant byte address 0x4 - core index']
  #allocation1 [shape = 'u32[144,128]{1,0:T(1,128)}', space=vmem, size = 0x12000, scoped, tag = 'internal scratch']
  %s0 = inlined_call_operand.vmem [shape: f32[16,128], index: 0, kind: input, shape index: {}]
  %s1 = inlined_call_operand.vmem [shape: f32[2,8], index: 1, kind: input, shape index: {}]
  %s2 = inlined_call_operand.vmem [shape: f32[1,128], index: 2, kind: input, shape index: {}]
  %s3 = inlined_call_operand.vmem [shape: f32[1,128], index: 3, kind: input, shape index: {}]
  %s4 = inlined_call_operand.hbm [shape: bf16[2,128,384], index: 4, kind: input, shape index: {}]
  %s5 = inlined_call_operand.vmem [shape: f32[2,1,384], index: 5, kind: input, shape index: {}]
  %s6 = inlined_call_operand.vmem [shape: bf16[2,128,128], index: 6, kind: input, shape index: {}]
  %s7 = inlined_call_operand.vmem [shape: f32[2,1,128], index: 7, kind: input, shape index: {}]
  %s8 = inlined_call_operand.vmem [shape: f32[2,1,128], index: 8, kind: input, shape index: {}]
  %s9 = inlined_call_operand.vmem [shape: f32[2,1,128], index: 9, kind: input, shape index: {}]
  %s10 = inlined_call_operand.hbm [shape: bf16[2,128,256], index: 10, kind: input, shape index: {}]
  %s11 = inlined_call_operand.vmem [shape: f32[2,1,256], index: 11, kind: input, shape index: {}]
  %s12 = inlined_call_operand.hbm [shape: bf16[2,256,128], index: 12, kind: input, shape index: {}]
  %s13 = inlined_call_operand.vmem [shape: f32[2,1,128], index: 13, kind: input, shape index: {}]
  %s14 = inlined_call_operand.vmem [shape: f32[2,1,128], index: 14, kind: input, shape index: {}]
  %s15 = inlined_call_operand.vmem [shape: f32[2,1,128], index: 15, kind: input, shape index: {}]
  %s16 = inlined_call_operand.vmem [shape: bf16[128,128], index: 16, kind: input, shape index: {}]
  %s17 = inlined_call_operand.vmem [shape: f32[1,128], index: 17, kind: input, shape index: {}]
  %s18 = inlined_call_operand.hbm [shape: f32[2,128], index: 18, kind: output, shape index: {}]
  %s19 = sld [smem:[#allocation0]]
  $region94: #{forward.1} parent=0
    _
  %s21 = ssub.s32 1, %s19
  %s22 = scalar_select 0, %s21, %s19
  $region1: #{forward.1} parent=0
    #allocation2 [shape = 'u8[196608]{0}', space=vmem, size = 0x30000, scoped, tag = 'input window, operand 4, single buffered']
    #allocation3 [shape = 's32[1]{0}', space=sflag, size = 0x4, scoped, tag = 'scoped memory for forward.1']
    #allocation4 [shape = 's32[1]{0}', space=sflag, size = 0x4, scoped, tag = 'scoped memory for forward.1']
    #allocation5 [shape = 'u8[131072]{0}', space=vmem, size = 0x20000, scoped, tag = 'input window, operand 10, single buffered']
    #allocation6 [shape = 's32[1]{0}', space=sflag, size = 0x4, scoped, tag = 'scoped memory for forward.1']
    #allocation7 [shape = 'u8[131072]{0}', space=vmem, size = 0x20000, scoped, tag = 'input window, operand 12, single buffered']
    #allocation8 [shape = 'u8[1024]{0}', space=vmem, size = 0x400, scoped, tag = 'output window, operand 0, single buffered']
    %23 = vsyncpa [#allocation3], 0
    %24 = vsyncpa [#allocation6], 0
    %25 = vsyncpa [#allocation4], 0
    // Predicated region
    $region2: #{forward.1} parent=1 // pred_check
      _
    $region3: #{forward.1} parent=1 // pred_check_branch
      %27 = sbr.rel (0) target = $region5
    $region4: #{forward.1} parent=1 // pred_region
      _
    $region5: #{forward.1} parent=1 // pred_fallthru
      _
    // Predicated region
    $region6: #{forward.1} parent=1 // pred_check
      _
    $region7: #{forward.1} parent=1 // pred_check_branch
      %29 = sbr.rel (0) target = $region9
    $region8: #{forward.1} parent=1 // pred_region
      _
    $region9: #{forward.1} parent=1 // pred_fallthru
      _
    // Predicated region
    $region10: #{forward.1} parent=1 // pred_check
      _
    $region11: #{forward.1} parent=1 // pred_check_branch
      %31 = sbr.rel (0) target = $region13
    $region12: #{forward.1} parent=1 // pred_region
      _
    $region13: #{forward.1} parent=1 // pred_fallthru
      _
    // Predicated region
    $region14: #{forward.1} parent=1 // pred_check
      _
    $region15: #{forward.1} parent=1 // pred_check_branch
      %33 = sbr.rel (0) target = $region17
    $region16: #{forward.1} parent=1 // pred_region
      _
    $region17: #{forward.1} parent=1 // pred_fallthru
      _
    // Predicated region
    $region18: #{forward.1} parent=1 // pred_check
      _
    $region19: #{forward.1} parent=1 // pred_check_branch
      %35 = sbr.rel (0) target = $region21
    $region20: #{forward.1} parent=1 // pred_region
      %s37 = ssub.s32 6144, 6144
      %38 = vsyncadd [#allocation3], %s37
      %s39 = sshll.u32 [#allocation2], 4
      %s40 = int_to_ptr.vmem [resolvable:$true] %s39
      %45 = dma.hbm_to_vmem [thread:$0]  %s4, 6144, %s40, [#allocation3], 192, 192, 12
    $region21: #{forward.1} parent=1 // pred_fallthru
      _
    // Predicated region
    $region22: #{forward.1} parent=1 // pred_check
      _
    $region23: #{forward.1} parent=1 // pred_check_branch
      %47 = sbr.rel (0) target = $region25
    $region24: #{forward.1} parent=1 // pred_region
      _
    $region25: #{forward.1} parent=1 // pred_fallthru
      _
    // Predicated region
    $region26: #{forward.1} parent=1 // pred_check
      _
    $region27: #{forward.1} parent=1 // pred_check_branch
      %49 = sbr.rel (0) target = $region29
    $region28: #{forward.1} parent=1 // pred_region
      _
    $region29: #{forward.1} parent=1 // pred_fallthru
      _
    // Predicated region
    $region30: #{forward.1} parent=1 // pred_check
      _
    $region31: #{forward.1} parent=1 // pred_check_branch
      %51 = sbr.rel (0) target = $region33
    $region32: #{forward.1} parent=1 // pred_region
      _
    $region33: #{forward.1} parent=1 // pred_fallthru
      _
    // Predicated region
    $region34: #{forward.1} parent=1 // pred_check
      _
    $region35: #{forward.1} parent=1 // pred_check_branch
      %53 = sbr.rel (0) target = $region37
    $region36: #{forward.1} parent=1 // pred_region
      _
    $region37: #{forward.1} parent=1 // pred_fallthru
      _
    // Predicated region
    $region38: #{forward.1} parent=1 // pred_check
      _
    $region39: #{forward.1} parent=1 // pred_check_branch
      %55 = sbr.rel (0) target = $region41
    $region40: #{forward.1} parent=1 // pred_region
      _
    $region41: #{forward.1} parent=1 // pred_fallthru
      _
    // Predicated region
    $region42: #{forward.1} parent=1 // pred_check
      _
    $region43: #{forward.1} parent=1 // pred_check_branch
      %57 = sbr.rel (0) target = $region45
    $region44: #{forward.1} parent=1 // pred_region
      %s59 = ssub.s32 4096, 4096
      %60 = vsyncadd [#allocation6], %s59
      %s61 = sshll.u32 [#allocation5], 4
      %s62 = int_to_ptr.vmem [resolvable:$true] %s61
      %67 = dma.hbm_to_vmem [thread:$0]  %s10, 4096, %s62, [#allocation6], 128, 128, 8
    $region45: #{forward.1} parent=1 // pred_fallthru
      _
    // Predicated region
    $region46: #{forward.1} parent=1 // pred_check
      _
    $region47: #{forward.1} parent=1 // pred_check_branch
      %69 = sbr.rel (0) target = $region49
    $region48: #{forward.1} parent=1 // pred_region
      _
    $region49: #{forward.1} parent=1 // pred_fallthru
      _
    // Predicated region
    $region50: #{forward.1} parent=1 // pred_check
      _
    $region51: #{forward.1} parent=1 // pred_check_branch
      %71 = sbr.rel (0) target = $region53
    $region52: #{forward.1} parent=1 // pred_region
      %s73 = ssub.s32 4096, 4096
      %74 = vsyncadd [#allocation6], %s73
      %s75 = sshll.u32 [#allocation7], 4
      %s76 = int_to_ptr.vmem [resolvable:$true] %s75
      %81 = dma.hbm_to_vmem [thread:$0]  %s12, 4096, %s76, [#allocation6], 64, 64, 4
    $region53: #{forward.1} parent=1 // pred_fallthru
      _
    // Predicated region
    $region54: #{forward.1} parent=1 // pred_check
      _
    $region55: #{forward.1} parent=1 // pred_check_branch
      %83 = sbr.rel (0) target = $region57
    $region56: #{forward.1} parent=1 // pred_region
      _
    $region57: #{forward.1} parent=1 // pred_fallthru
      _
    // Predicated region
    $region58: #{forward.1} parent=1 // pred_check
      _
    $region59: #{forward.1} parent=1 // pred_check_branch
      %85 = sbr.rel (0) target = $region61
    $region60: #{forward.1} parent=1 // pred_region
      _
    $region61: #{forward.1} parent=1 // pred_fallthru
      _
    // Predicated region
    $region62: #{forward.1} parent=1 // pred_check
      _
    $region63: #{forward.1} parent=1 // pred_check_branch
      %87 = sbr.rel (0) target = $region65
    $region64: #{forward.1} parent=1 // pred_region
      _
    $region65: #{forward.1} parent=1 // pred_fallthru
      _
    // Predicated region
    $region66: #{forward.1} parent=1 // pred_check
      _
    $region67: #{forward.1} parent=1 // pred_check_branch
      %89 = sbr.rel (0) target = $region69
    $region68: #{forward.1} parent=1 // pred_region
      _
    $region69: #{forward.1} parent=1 // pred_fallthru
      _
    // Predicated region
    $region70: #{forward.1} parent=1 // pred_check
      _
    $region71: #{forward.1} parent=1 // pred_check_branch
      %91 = sbr.rel (0) target = $region73
    $region72: #{forward.1} parent=1 // pred_region
      _
    $region73: #{forward.1} parent=1 // pred_fallthru
      _
    // Predicated region
    $region74: #{forward.1} parent=1 // pred_check
      _
    $region75: #{forward.1} parent=1 // pred_check_branch
      %93 = sbr.rel (0) target = $region77
    $region76: #{forward.1} parent=1 // pred_region
      %94 = dma.done [#allocation3], 6144
    $region77: #{forward.1} parent=1 // pred_fallthru
      _
    // Predicated region
    $region78: #{forward.1} parent=1 // pred_check
      _
    $region79: #{forward.1} parent=1 // pred_check_branch
      %96 = sbr.rel (0) target = $region81
    $region80: #{forward.1} parent=1 // pred_region
      %97 = dma.done [#allocation6], 4096
    $region81: #{forward.1} parent=1 // pred_fallthru
      _
    // Predicated region
    $region82: #{forward.1} parent=1 // pred_check
      _
    $region83: #{forward.1} parent=1 // pred_check_branch
      %99 = sbr.rel (0) target = $region85
    $region84: #{forward.1} parent=1 // pred_region
      %100 = dma.done [#allocation6], 4096
    $region85: #{forward.1} parent=1 // pred_fallthru
      _
    %v102 = vld [vmem:[%s0] sm:$0xff]
    %v103 = vld [vmem:[%s0 + $0x8] sm:$0xff]
    %v104 = vld [vmem:[%s2] sm:$0x1]
    %v105 = vld [vmem:[%s3] sm:$0x1]
    %106 = vadd.xlane.f32.xlu0 %v102
    %v107 = vpop.xlane.xlu0 %106
    %108 = vadd.xlane.f32.xlu0 %v103
    %v109 = vpop.xlane.xlu0 %108
    %v110 = vrcp.pop 128.0
    %v111 = vmul.f32 %v107, %v110
    %v112 = vmul.f32 %v109, %v110
    %v113 = vsub.f32 %v102, %v111
    %v114 = vsub.f32 %v103, %v112
    %v115 = vmul.f32 %v113, %v113
    %v116 = vmul.f32 %v114, %v114
    %117 = vadd.xlane.f32.xlu0 %v115
    %v118 = vpop.xlane.xlu0 %117
    %119 = vadd.xlane.f32.xlu0 %v116
    %v120 = vpop.xlane.xlu0 %119
    %v121 = vmul.f32 %v118, %v110
    %v122 = vmul.f32 %v120, %v110
    %v123 = vadd.f32 %v121, 1e-12
    %v124 = vadd.f32 %v122, 1e-12
    %v125 = vrsqrt.pop %v123
    %v126 = vrsqrt.pop %v124
    %v127 = vmul.f32 %v113, %v125
    %v128 = vmul.f32 %v114, %v126
    %v130 = vlaneseq
    %v131 = vshrl.u32 %v130, 7
    %v132 = vsub.s32 0, %v131
    %v133 = vrot.slane %v104, %v132
    %v135 = vmul.f32 %v127, %v133
    %v136 = vmul.f32 %v128, %v133
    %v138 = vlaneseq
    %v139 = vshrl.u32 %v138, 7
    %v140 = vsub.s32 0, %v139
    %v141 = vrot.slane %v105, %v140
    %v143 = vadd.f32 %v135, %v141
    %v144 = vadd.f32 %v136, %v141
    %v145 = vld [vmem:[%s1] sm:$0x3]
    %v146 = vld [vmem:[#allocation2] sm:$0xff]
    %v147 = vld [vmem:[#allocation2 + $0x8] sm:$0xf]
    %v148 = vld [vmem:[#allocation2 + $0xc] sm:$0xff]
    %v149 = vld [vmem:[#allocation2 + $0x14] sm:$0xf]
    %v150 = vld [vmem:[#allocation2 + $0x18] sm:$0xff]
    %v151 = vld [vmem:[#allocation2 + $0x20] sm:$0xf]
    %v152 = vld [vmem:[#allocation2 + $0x24] sm:$0xff]
    %v153 = vld [vmem:[#allocation2 + $0x2c] sm:$0xf]
    %v154 = vld [vmem:[#allocation2 + $0x30] sm:$0xff]
    %v155 = vld [vmem:[#allocation2 + $0x38] sm:$0xf]
    %v156 = vld [vmem:[#allocation2 + $0x3c] sm:$0xff]
    %v157 = vld [vmem:[#allocation2 + $0x44] sm:$0xf]
    %v158 = vld [vmem:[#allocation2 + $0x48] sm:$0xff]
    %v159 = vld [vmem:[#allocation2 + $0x50] sm:$0xf]
    %v160 = vld [vmem:[#allocation2 + $0x54] sm:$0xff]
    %v161 = vld [vmem:[#allocation2 + $0x5c] sm:$0xf]
    %v162 = vld [vmem:[#allocation2 + $0x60] sm:$0xff]
    %v163 = vld [vmem:[#allocation2 + $0x68] sm:$0xf]
    %v164 = vld [vmem:[#allocation2 + $0x6c] sm:$0xff]
    %v165 = vld [vmem:[#allocation2 + $0x74] sm:$0xf]
    %v166 = vld [vmem:[#allocation2 + $0x78] sm:$0xff]
    %v167 = vld [vmem:[#allocation2 + $0x80] sm:$0xf]
    %v168 = vld [vmem:[#allocation2 + $0x84] sm:$0xff]
    %v169 = vld [vmem:[#allocation2 + $0x8c] sm:$0xf]
    %v170 = vld [vmem:[#allocation2 + $0x90] sm:$0xff]
    %v171 = vld [vmem:[#allocation2 + $0x98] sm:$0xf]
    %v172 = vld [vmem:[#allocation2 + $0x9c] sm:$0xff]
    %v173 = vld [vmem:[#allocation2 + $0xa4] sm:$0xf]
    %v174 = vld [vmem:[#allocation2 + $0xa8] sm:$0xff]
    %v175 = vld [vmem:[#allocation2 + $0xb0] sm:$0xf]
    %v176 = vld [vmem:[#allocation2 + $0xb4] sm:$0xff]
    %v177 = vld [vmem:[#allocation2 + $0xbc] sm:$0xf]
    %v178 = vpack.c.bf16 %v144, %v143
    %v179 = vld [vmem:[%s5] sm:$0x7]
    %v181 = vlaneseq
    %v182 = vshrl.u32 %v181, 7
    %v183 = vsub.s32 0, %v182
    %v184 = vrot.slane %v179, %v183
    %v185 = vlaneseq
    %v186 = vshrl.u32 %v185, 7
    %v187 = vsub.s32 1, %v186
    %v188 = vrot.slane %v179, %v187
    %v189 = vlaneseq
    %v190 = vshrl.u32 %v189, 7
    %v191 = vsub.s32 2, %v190
    %v192 = vrot.slane %v179, %v191
    %v228 = vunpack.c.l.b16 %v146
    %v229 = vunpack.c.h.b16 %v146
    %v230 = vunpack.c.l.b16 %v147
    %v231 = vunpack.c.l.b16 %v148
    %v232 = vunpack.c.h.b16 %v148
    %v233 = vunpack.c.l.b16 %v149
    %v234 = vunpack.c.l.b16 %v150
    %v235 = vunpack.c.h.b16 %v150
    %v236 = vunpack.c.l.b16 %v151
    %v237 = vunpack.c.l.b16 %v152
    %v238 = vunpack.c.h.b16 %v152
    %v239 = vunpack.c.l.b16 %v153
    %v240 = vunpack.c.l.b16 %v154
    %v241 = vunpack.c.h.b16 %v154
    %v242 = vunpack.c.l.b16 %v155
    %v243 = vunpack.c.l.b16 %v156
    %v244 = vunpack.c.h.b16 %v156
    %v245 = vunpack.c.l.b16 %v157
    %v246 = vunpack.c.l.b16 %v158
    %v247 = vunpack.c.h.b16 %v158
    %v248 = vunpack.c.l.b16 %v159
    %v249 = vunpack.c.l.b16 %v160
    %v250 = vunpack.c.h.b16 %v160
    %v251 = vunpack.c.l.b16 %v161
    %v252 = vunpack.c.l.b16 %v162
    %v253 = vunpack.c.h.b16 %v162
    %v254 = vunpack.c.l.b16 %v163
    %v255 = vunpack.c.l.b16 %v164
    %v256 = vunpack.c.h.b16 %v164
    %v257 = vunpack.c.l.b16 %v165
    %v258 = vunpack.c.l.b16 %v166
    %v259 = vunpack.c.h.b16 %v166
    %v260 = vunpack.c.l.b16 %v167
    %v261 = vunpack.c.l.b16 %v168
    %v262 = vunpack.c.h.b16 %v168
    %v263 = vunpack.c.l.b16 %v169
    %v264 = vunpack.c.l.b16 %v170
    %v265 = vunpack.c.h.b16 %v170
    %v266 = vunpack.c.l.b16 %v171
    %v267 = vunpack.c.l.b16 %v172
    %v268 = vunpack.c.h.b16 %v172
    %v269 = vunpack.c.l.b16 %v173
    %v270 = vunpack.c.l.b16 %v174
    %v271 = vunpack.c.h.b16 %v174
    %v272 = vunpack.c.l.b16 %v175
    %v273 = vunpack.c.l.b16 %v176
    %v274 = vunpack.c.h.b16 %v176
    %v275 = vunpack.c.l.b16 %v177
    %v276 = vpack.c.b16 %v231, %v228
    %v277 = vpack.c.b16 %v232, %v229
    %v278 = vpack.c.b16 %v233, %v230
    %v279 = vpack.c.b16 %v237, %v234
    %v280 = vpack.c.b16 %v238, %v235
    %v281 = vpack.c.b16 %v239, %v236
    %v282 = vpack.c.b16 %v243, %v240
    %v283 = vpack.c.b16 %v244, %v241
    %v284 = vpack.c.b16 %v245, %v242
    %v285 = vpack.c.b16 %v249, %v246
    %v286 = vpack.c.b16 %v250, %v247
    %v287 = vpack.c.b16 %v251, %v248
    %v288 = vpack.c.b16 %v255, %v252
    %v289 = vpack.c.b16 %v256, %v253
    %v290 = vpack.c.b16 %v257, %v254
    %v291 = vpack.c.b16 %v261, %v258
    %v292 = vpack.c.b16 %v262, %v259
    %v293 = vpack.c.b16 %v263, %v260
    %v294 = vpack.c.b16 %v267, %v264
    %v295 = vpack.c.b16 %v268, %v265
    %v296 = vpack.c.b16 %v269, %v266
    %v297 = vpack.c.b16 %v273, %v270
    %v298 = vpack.c.b16 %v274, %v271
    %v299 = vpack.c.b16 %v275, %v272
    %324 = vmatprep.subr.bf16.mxu0 %v277
    %325 = vmatpush1.bf16.msra.mxu0 %v276
    %326 = vmatprep.subr.bf16.mxu0 %v280
    %327 = vmatpush1.bf16.msra.mxu0 %v279
    %328 = vmatprep.subr.bf16.mxu0 %v283
    %329 = vmatpush1.bf16.msra.mxu0 %v282
    %330 = vmatprep.subr.bf16.mxu0 %v286
    %331 = vmatpush1.bf16.msra.mxu0 %v285
    %332 = vmatprep.subr.bf16.mxu0 %v289
    %333 = vmatpush1.bf16.msra.mxu0 %v288
    %334 = vmatprep.subr.bf16.mxu0 %v292
    %335 = vmatpush1.bf16.msra.mxu0 %v291
    %336 = vmatprep.subr.bf16.mxu0 %v295
    %337 = vmatpush1.bf16.msra.mxu0 %v294
    %338 = vmatprep.subr.bf16.mxu0 %v298
    %339 = vmatpush1.bf16.msra.mxu0 %v297
    %340 = vmatprep.subr.bf16.mxu0 0
    %341 = vmatpush1.bf16.msra.mxu0 0
    %342 = vmatprep.subr.bf16.mxu0 0
    %343 = vmatpush1.bf16.msra.mxu0 0
    %344 = vmatprep.subr.bf16.mxu0 0
    %345 = vmatpush1.bf16.msra.mxu0 0
    %346 = vmatprep.subr.bf16.mxu0 0
    %347 = vmatpush1.bf16.msra.mxu0 0
    %348 = vmatprep.subr.bf16.mxu0 0
    %349 = vmatpush1.bf16.msra.mxu0 0
    %350 = vmatprep.subr.bf16.mxu0 0
    %351 = vmatpush1.bf16.msra.mxu0 0
    %352 = vmatprep.subr.bf16.mxu0 0
    %353 = vmatpush1.bf16.msra.mxu0 0
    %354 = vmatprep.subr.bf16.mxu0 0
    %355 = vmatpush1.bf16.msra.mxu0 0
    %356 = vmatprep.mubr.bf16.mxu0 0
    %357 = vmatmul.mubr.bf16.gmra.mrb[0].mxu0 %v178
    %v358 = vpop.f32.mrb[0].mxu0
    %v359 = vadd.f32 %v184, %v358
    %v360 = vpop.f32.mrb[0].mxu0
    %v361 = vadd.f32 %v188, %v360
    %v362 = vpop.f32.mrb[0].mxu0
    %v363 = vadd.f32 %v184, %v362
    %v364 = vpop.f32.mrb[0].mxu0
    %v365 = vadd.f32 %v188, %v364
    %366 = vdwg.mxu0
    %367 = vmatprep.subr.bf16.mxu0 0
    %368 = vmatpush1.bf16.msra.mxu0 %v278
    %369 = vmatprep.subr.bf16.mxu0 0
    %370 = vmatpush1.bf16.msra.mxu0 %v281
    %371 = vmatprep.subr.bf16.mxu0 0
    %372 = vmatpush1.bf16.msra.mxu0 %v284
    %373 = vmatprep.subr.bf16.mxu0 0
    %374 = vmatpush1.bf16.msra.mxu0 %v287
    %375 = vmatprep.subr.bf16.mxu0 0
    %376 = vmatpush1.bf16.msra.mxu0 %v290
    %377 = vmatprep.subr.bf16.mxu0 0
    %378 = vmatpush1.bf16.msra.mxu0 %v293
    %379 = vmatprep.subr.bf16.mxu0 0
    %380 = vmatpush1.bf16.msra.mxu0 %v296
    %381 = vmatprep.subr.bf16.mxu0 0
    %382 = vmatpush1.bf16.msra.mxu0 %v299
    %383 = vmatprep.subr.bf16.mxu0 0
    %384 = vmatpush1.bf16.msra.mxu0 0
    %385 = vmatprep.subr.bf16.mxu0 0
    %386 = vmatpush1.bf16.msra.mxu0 0
    %387 = vmatprep.subr.bf16.mxu0 0
    %388 = vmatpush1.bf16.msra.mxu0 0
    %389 = vmatprep.subr.bf16.mxu0 0
    %390 = vmatpush1.bf16.msra.mxu0 0
    %391 = vmatprep.subr.bf16.mxu0 0
    %392 = vmatpush1.bf16.msra.mxu0 0
    %393 = vmatprep.subr.bf16.mxu0 0
    %394 = vmatpush1.bf16.msra.mxu0 0
    %395 = vmatprep.subr.bf16.mxu0 0
    %396 = vmatpush1.bf16.msra.mxu0 0
    %397 = vmatprep.subr.bf16.mxu0 0
    %398 = vmatpush1.bf16.msra.mxu0 0
    %399 = vmatprep.mubr.bf16.mxu0 0
    %400 = vmatmul.mubr.bf16.gmra.mrb[0].mxu0 %v178
    %v401 = vpop.f32.mrb[0].mxu0
    %v402 = vadd.f32 %v192, %v401
    %v403 = vpop.f32.mrb[0].mxu0
    %v404 = vpop.f32.mrb[0].mxu0
    %v405 = vadd.f32 %v192, %v404
    %v406 = vpop.f32.mrb[0].mxu0
    %407 = vdwg.mxu0
    %408 = vxpose.xlu0.b32.start [1/16] %v361, 128
    %409 = vxpose.xlu0.b32.cont [2/16] 0.0, 128
    %410 = vxpose.xlu0.b32.cont [3/16] 0.0, 128
    %411 = vxpose.xlu0.b32.cont [4/16] 0.0, 128
    %412 = vxpose.xlu0.b32.cont [5/16] 0.0, 128
    %413 = vxpose.xlu0.b32.cont [6/16] 0.0, 128
    %414 = vxpose.xlu0.b32.cont [7/16] 0.0, 128
    %415 = vxpose.xlu0.b32.cont [8/16] 0.0, 128
    %416 = vxpose.xlu0.b32.cont [9/16] 0.0, 128
    %417 = vxpose.xlu0.b32.cont [10/16] 0.0, 128
    %418 = vxpose.xlu0.b32.cont [11/16] 0.0, 128
    %419 = vxpose.xlu0.b32.cont [12/16] 0.0, 128
    %420 = vxpose.xlu0.b32.cont [13/16] 0.0, 128
    %421 = vxpose.xlu0.b32.cont [14/16] 0.0, 128
    %422 = vxpose.xlu0.b32.cont [15/16] 0.0, 128
    %423 = vxpose.xlu0.b32.end [16/16] 0.0, 128
    %v424 = vpop.trf.xlu0
    %v425 = vpop.trf.xlu0
    %v426 = vpop.trf.xlu0
    %v427 = vpop.trf.xlu0
    %v428 = vpop.trf.xlu0
    %v429 = vpop.trf.xlu0
    %v430 = vpop.trf.xlu0
    %v431 = vpop.trf.xlu0
    %v432 = vpop.trf.xlu0
    %v433 = vpop.trf.xlu0
    %v434 = vpop.trf.xlu0
    %v435 = vpop.trf.xlu0
    %v436 = vpop.trf.xlu0
    %v437 = vpop.trf.xlu0
    %v438 = vpop.trf.xlu0
    %v439 = vpop.trf.xlu0
    %v440 = vpack.c.bf16 %v402, %v402
    %v441 = vpack.c.bf16 %v359, %v359
    %v442 = vpack.c.bf16 %v425, %v424
    %v443 = vpack.c.bf16 %v427, %v426
    %vm444 = vcmask 261120
    %v446 = vsel %vm444, %v441, 0
    %448 = vmatprep.subr.bf16.mxu0 0
    %449 = vmatpush1.bf16.msra.mxu0 %v442
    %450 = vmatprep.subr.bf16.mxu0 0
    %451 = vmatpush1.bf16.msra.mxu0 %v443
    %452 = vmatprep.subr.bf16.mxu0 0
    %453 = vmatpush1.bf16.msra.mxu0 0
    %454 = vmatprep.subr.bf16.mxu0 0
    %455 = vmatpush1.bf16.msra.mxu0 0
    %456 = vmatprep.subr.bf16.mxu0 0
    %457 = vmatpush1.bf16.msra.mxu0 0
    %458 = vmatprep.subr.bf16.mxu0 0
    %459 = vmatpush1.bf16.msra.mxu0 0
    %460 = vmatprep.subr.bf16.mxu0 0
    %461 = vmatpush1.bf16.msra.mxu0 0
    %462 = vmatprep.subr.bf16.mxu0 0
    %463 = vmatpush1.bf16.msra.mxu0 0
    %464 = vmatprep.subr.bf16.mxu0 0
    %465 = vmatpush1.bf16.msra.mxu0 0
    %466 = vmatprep.subr.bf16.mxu0 0
    %467 = vmatpush1.bf16.msra.mxu0 0
    %468 = vmatprep.subr.bf16.mxu0 0
    %469 = vmatpush1.bf16.msra.mxu0 0
    %470 = vmatprep.subr.bf16.mxu0 0
    %471 = vmatpush1.bf16.msra.mxu0 0
    %472 = vmatprep.subr.bf16.mxu0 0
    %473 = vmatpush1.bf16.msra.mxu0 0
    %474 = vmatprep.subr.bf16.mxu0 0
    %475 = vmatpush1.bf16.msra.mxu0 0
    %476 = vmatprep.subr.bf16.mxu0 0
    %477 = vmatpush1.bf16.msra.mxu0 0
    %478 = vmatprep.subr.bf16.mxu0 0
    %479 = vmatpush1.bf16.msra.mxu0 0
    %480 = vmatprep.mubr.bf16.mxu0 0
    %481 = vmatmul.mubr.bf16.gmra.mrb[0].mxu0 %v446
    %v482 = vpop.f32.mrb[0].mxu0
    %v483 = vadd.f32 0.0, %v482
    %v484 = vpop.f32.mrb[0].mxu0
    %v485 = vpop.f32.mrb[0].mxu0
    %v486 = vpop.f32.mrb[0].mxu0
    %487 = vdwg.mxu0
    %v488 = vmul.f32 %v483, 0.17677669
    %v489 = vlaneseq
    %v490 = vshrl.u32 %v489, 7
    %v491 = vsub.s32 0, %v490
    %v492 = vrot.slane %v145, %v491
    %v493 = vadd.f32 %v488, %v492
    %vm494 = vcmask 64512
    %v495 = vsel %vm494, %v493, -inf
    %496 = vmax.xlane.f32.xlu0 %v495
    %v497 = vpop.xlane.xlu0 %496
    %v498 = vsub.f32 %v493, %v497
    %v499 = vmul.f32 %v498, 1.442695
    %v500 = vpow.pop %v499
    %v501 = vsel %vm494, %v500, 0.0
    %502 = vadd.xlane.f32.xlu0 %v501
    %v503 = vpop.xlane.xlu0 %502
    %v504 = vrcp.pop %v503
    %v505 = vmul.f32 %v500, %v504
    %v506 = vpack.c.bf16 %v505, %v505
    %v508 = vsel %vm494, %v506, 0
    %vm510 = vcmask 1043456
    %v512 = vsel %vm510, %v440, 0
    %514 = vmatprep.subr.bf16.mxu0 0
    %515 = vmatpush1.bf16.msra.mxu0 %v512
    %516 = vmatprep.subr.bf16.mxu0 0
    %517 = vmatpush1.bf16.msra.mxu0 0
    %518 = vmatprep.subr.bf16.mxu0 0
    %519 = vmatpush1.bf16.msra.mxu0 0
    %520 = vmatprep.subr.bf16.mxu0 0
    %521 = vmatpush1.bf16.msra.mxu0 0
    %522 = vmatprep.subr.bf16.mxu0 0
    %523 = vmatpush1.bf16.msra.mxu0 0
    %524 = vmatprep.subr.bf16.mxu0 0
    %525 = vmatpush1.bf16.msra.mxu0 0
    %526 = vmatprep.subr.bf16.mxu0 0
    %527 = vmatpush1.bf16.msra.mxu0 0
    %528 = vmatprep.subr.bf16.mxu0 0
    %529 = vmatpush1.bf16.msra.mxu0 0
    %530 = vmatprep.subr.bf16.mxu0 0
    %531 = vmatpush1.bf16.msra.mxu0 0
    %532 = vmatprep.subr.bf16.mxu0 0
    %533 = vmatpush1.bf16.msra.mxu0 0
    %534 = vmatprep.subr.bf16.mxu0 0
    %535 = vmatpush1.bf16.msra.mxu0 0
    %536 = vmatprep.subr.bf16.mxu0 0
    %537 = vmatpush1.bf16.msra.mxu0 0
    %538 = vmatprep.subr.bf16.mxu0 0
    %539 = vmatpush1.bf16.msra.mxu0 0
    %540 = vmatprep.subr.bf16.mxu0 0
    %541 = vmatpush1.bf16.msra.mxu0 0
    %542 = vmatprep.subr.bf16.mxu0 0
    %543 = vmatpush1.bf16.msra.mxu0 0
    %544 = vmatprep.subr.bf16.mxu0 0
    %545 = vmatpush1.bf16.msra.mxu0 0
    %546 = vmatprep.mubr.bf16.mxu0 0
    %547 = vmatmul.mubr.bf16.gmra.mrb[0].mxu0 %v508
    %v548 = vpop.f32.mrb[0].mxu0
    %v549 = vadd.f32 0.0, %v548
    %v550 = vpop.f32.mrb[0].mxu0
    %v551 = vpop.f32.mrb[0].mxu0
    %v552 = vpop.f32.mrb[0].mxu0
    %553 = vdwg.mxu0
    %555 = vrot.lane.b32.xlu0 %v361, 96
    %v556 = vpop.permute.xlu0 %555
    %558 = vxpose.xlu0.b32.start [1/16] %v556, 128
    %559 = vxpose.xlu0.b32.cont [2/16] 0.0, 128
    %560 = vxpose.xlu0.b32.cont [3/16] 0.0, 128
    %561 = vxpose.xlu0.b32.cont [4/16] 0.0, 128
    %562 = vxpose.xlu0.b32.cont [5/16] 0.0, 128
    %563 = vxpose.xlu0.b32.cont [6/16] 0.0, 128
    %564 = vxpose.xlu0.b32.cont [7/16] 0.0, 128
    %565 = vxpose.xlu0.b32.cont [8/16] 0.0, 128
    %566 = vxpose.xlu0.b32.cont [9/16] 0.0, 128
    %567 = vxpose.xlu0.b32.cont [10/16] 0.0, 128
    %568 = vxpose.xlu0.b32.cont [11/16] 0.0, 128
    %569 = vxpose.xlu0.b32.cont [12/16] 0.0, 128
    %570 = vxpose.xlu0.b32.cont [13/16] 0.0, 128
    %571 = vxpose.xlu0.b32.cont [14/16] 0.0, 128
    %572 = vxpose.xlu0.b32.cont [15/16] 0.0, 128
    %573 = vxpose.xlu0.b32.end [16/16] 0.0, 128
    %v574 = vpop.trf.xlu0
    %v575 = vpop.trf.xlu0
    %v576 = vpop.trf.xlu0
    %v577 = vpop.trf.xlu0
    %v578 = vpop.trf.xlu0
    %v579 = vpop.trf.xlu0
    %v580 = vpop.trf.xlu0
    %v581 = vpop.trf.xlu0
    %v582 = vpop.trf.xlu0
    %v583 = vpop.trf.xlu0
    %v584 = vpop.trf.xlu0
    %v585 = vpop.trf.xlu0
    %v586 = vpop.trf.xlu0
    %v587 = vpop.trf.xlu0
    %v588 = vpop.trf.xlu0
    %v589 = vpop.trf.xlu0
    %v590 = vpack.c.bf16 %v575, %v574
    %v591 = vpack.c.bf16 %v577, %v576
    %593 = vrot.lane.b32.xlu0 %v441, 96
    %v594 = vpop.permute.xlu0 %593
    %v596 = vsel %vm444, %v594, 0
    %598 = vmatprep.subr.bf16.mxu0 0
    %599 = vmatpush1.bf16.msra.mxu0 %v590
    %600 = vmatprep.subr.bf16.mxu0 0
    %601 = vmatpush1.bf16.msra.mxu0 %v591
    %602 = vmatprep.subr.bf16.mxu0 0
    %603 = vmatpush1.bf16.msra.mxu0 0
    %604 = vmatprep.subr.bf16.mxu0 0
    %605 = vmatpush1.bf16.msra.mxu0 0
    %606 = vmatprep.subr.bf16.mxu0 0
    %607 = vmatpush1.bf16.msra.mxu0 0
    %608 = vmatprep.subr.bf16.mxu0 0
    %609 = vmatpush1.bf16.msra.mxu0 0
    %610 = vmatprep.subr.bf16.mxu0 0
    %611 = vmatpush1.bf16.msra.mxu0 0
    %612 = vmatprep.subr.bf16.mxu0 0
    %613 = vmatpush1.bf16.msra.mxu0 0
    %614 = vmatprep.subr.bf16.mxu0 0
    %615 = vmatpush1.bf16.msra.mxu0 0
    %616 = vmatprep.subr.bf16.mxu0 0
    %617 = vmatpush1.bf16.msra.mxu0 0
    %618 = vmatprep.subr.bf16.mxu0 0
    %619 = vmatpush1.bf16.msra.mxu0 0
    %620 = vmatprep.subr.bf16.mxu0 0
    %621 = vmatpush1.bf16.msra.mxu0 0
    %622 = vmatprep.subr.bf16.mxu0 0
    %623 = vmatpush1.bf16.msra.mxu0 0
    %624 = vmatprep.subr.bf16.mxu0 0
    %625 = vmatpush1.bf16.msra.mxu0 0
    %626 = vmatprep.subr.bf16.mxu0 0
    %627 = vmatpush1.bf16.msra.mxu0 0
    %628 = vmatprep.subr.bf16.mxu0 0
    %629 = vmatpush1.bf16.msra.mxu0 0
    %630 = vmatprep.mubr.bf16.mxu0 0
    %631 = vmatmul.mubr.bf16.gmra.mrb[0].mxu0 %v596
    %v632 = vpop.f32.mrb[0].mxu0
    %v633 = vadd.f32 0.0, %v632
    %v634 = vpop.f32.mrb[0].mxu0
    %v635 = vpop.f32.mrb[0].mxu0
    %v636 = vpop.f32.mrb[0].mxu0
    %637 = vdwg.mxu0
    %v638 = vmul.f32 %v633, 0.17677669
    %v639 = vadd.f32 %v638, %v492
    %v640 = vsel %vm494, %v639, -inf
    %641 = vmax.xlane.f32.xlu0 %v640
    %v642 = vpop.xlane.xlu0 %641
    %v643 = vsub.f32 %v639, %v642
    %v644 = vmul.f32 %v643, 1.442695
    %v645 = vpow.pop %v644
    %v646 = vsel %vm494, %v645, 0.0
    %647 = vadd.xlane.f32.xlu0 %v646
    %v648 = vpop.xlane.xlu0 %647
    %v649 = vrcp.pop %v648
    %v650 = vmul.f32 %v645, %v649
    %v651 = vpack.c.bf16 %v650, %v650
    %653 = vrot.lane.b32.xlu0 %v440, 96
    %v654 = vpop.permute.xlu0 %653
    %v656 = vsel %vm494, %v651, 0
    %v659 = vsel %vm510, %v654, 0
    %661 = vmatprep.subr.bf16.mxu0 0
    %662 = vmatpush1.bf16.msra.mxu0 %v659
    %663 = vmatprep.subr.bf16.mxu0 0
    %664 = vmatpush1.bf16.msra.mxu0 0
    %665 = vmatprep.subr.bf16.mxu0 0
    %666 = vmatpush1.bf16.msra.mxu0 0
    %667 = vmatprep.subr.bf16.mxu0 0
    %668 = vmatpush1.bf16.msra.mxu0 0
    %669 = vmatprep.subr.bf16.mxu0 0
    %670 = vmatpush1.bf16.msra.mxu0 0
    %671 = vmatprep.subr.bf16.mxu0 0
    %672 = vmatpush1.bf16.msra.mxu0 0
    %673 = vmatprep.subr.bf16.mxu0 0
    %674 = vmatpush1.bf16.msra.mxu0 0
    %675 = vmatprep.subr.bf16.mxu0 0
    %676 = vmatpush1.bf16.msra.mxu0 0
    %677 = vmatprep.subr.bf16.mxu0 0
    %678 = vmatpush1.bf16.msra.mxu0 0
    %679 = vmatprep.subr.bf16.mxu0 0
    %680 = vmatpush1.bf16.msra.mxu0 0
    %681 = vmatprep.subr.bf16.mxu0 0
    %682 = vmatpush1.bf16.msra.mxu0 0
    %683 = vmatprep.subr.bf16.mxu0 0
    %684 = vmatpush1.bf16.msra.mxu0 0
    %685 = vmatprep.subr.bf16.mxu0 0
    %686 = vmatpush1.bf16.msra.mxu0 0
    %687 = vmatprep.subr.bf16.mxu0 0
    %688 = vmatpush1.bf16.msra.mxu0 0
    %689 = vmatprep.subr.bf16.mxu0 0
    %690 = vmatpush1.bf16.msra.mxu0 0
    %691 = vmatprep.subr.bf16.mxu0 0
    %692 = vmatpush1.bf16.msra.mxu0 0
    %693 = vmatprep.mubr.bf16.mxu0 0
    %694 = vmatmul.mubr.bf16.gmra.mrb[0].mxu0 %v656
    %v695 = vpop.f32.mrb[0].mxu0
    %v696 = vadd.f32 0.0, %v695
    %v697 = vpop.f32.mrb[0].mxu0
    %v698 = vpop.f32.mrb[0].mxu0
    %v699 = vpop.f32.mrb[0].mxu0
    %700 = vdwg.mxu0
    %701 = vrot.lane.b32.xlu0 %v361, 64
    %v702 = vpop.permute.xlu0 %701
    %704 = vxpose.xlu0.b32.start [1/16] %v702, 128
    %705 = vxpose.xlu0.b32.cont [2/16] 0.0, 128
    %706 = vxpose.xlu0.b32.cont [3/16] 0.0, 128
    %707 = vxpose.xlu0.b32.cont [4/16] 0.0, 128
    %708 = vxpose.xlu0.b32.cont [5/16] 0.0, 128
    %709 = vxpose.xlu0.b32.cont [6/16] 0.0, 128
    %710 = vxpose.xlu0.b32.cont [7/16] 0.0, 128
    %711 = vxpose.xlu0.b32.cont [8/16] 0.0, 128
    %712 = vxpose.xlu0.b32.cont [9/16] 0.0, 128
    %713 = vxpose.xlu0.b32.cont [10/16] 0.0, 128
    %714 = vxpose.xlu0.b32.cont [11/16] 0.0, 128
    %715 = vxpose.xlu0.b32.cont [12/16] 0.0, 128
    %716 = vxpose.xlu0.b32.cont [13/16] 0.0, 128
    %717 = vxpose.xlu0.b32.cont [14/16] 0.0, 128
    %718 = vxpose.xlu0.b32.cont [15/16] 0.0, 128
    %719 = vxpose.xlu0.b32.end [16/16] 0.0, 128
    %v720 = vpop.trf.xlu0
    %v721 = vpop.trf.xlu0
    %v722 = vpop.trf.xlu0
    %v723 = vpop.trf.xlu0
    %v724 = vpop.trf.xlu0
    %v725 = vpop.trf.xlu0
    %v726 = vpop.trf.xlu0
    %v727 = vpop.trf.xlu0
    %v728 = vpop.trf.xlu0
    %v729 = vpop.trf.xlu0
    %v730 = vpop.trf.xlu0
    %v731 = vpop.trf.xlu0
    %v732 = vpop.trf.xlu0
    %v733 = vpop.trf.xlu0
    %v734 = vpop.trf.xlu0
    %v735 = vpop.trf.xlu0
    %v736 = vpack.c.bf16 %v721, %v720
    %v737 = vpack.c.bf16 %v723, %v722
    %738 = vrot.lane.b32.xlu0 %v441, 64
    %v739 = vpop.permute.xlu0 %738
    %v741 = vsel %vm444, %v739, 0
    %743 = vmatprep.subr.bf16.mxu0 0
    %744 = vmatpush1.bf16.msra.mxu0 %v736
    %745 = vmatprep.subr.bf16.mxu0 0
    %746 = vmatpush1.bf16.msra.mxu0 %v737
    %747 = vmatprep.subr.bf16.mxu0 0
    %748 = vmatpush1.bf16.msra.mxu0 0
    %749 = vmatprep.subr.bf16.mxu0 0
    %750 = vmatpush1.bf16.msra.mxu0 0
    %751 = vmatprep.subr.bf16.mxu0 0
    %752 = vmatpush1.bf16.msra.mxu0 0
    %753 = vmatprep.subr.bf16.mxu0 0
    %754 = vmatpush1.bf16.msra.mxu0 0
    %755 = vmatprep.subr.bf16.mxu0 0
    %756 = vmatpush1.bf16.msra.mxu0 0
    %757 = vmatprep.subr.bf16.mxu0 0
    %758 = vmatpush1.bf16.msra.mxu0 0
    %759 = vmatprep.subr.bf16.mxu0 0
    %760 = vmatpush1.bf16.msra.mxu0 0
    %761 = vmatprep.subr.bf16.mxu0 0
    %762 = vmatpush1.bf16.msra.mxu0 0
    %763 = vmatprep.subr.bf16.mxu0 0
    %764 = vmatpush1.bf16.msra.mxu0 0
    %765 = vmatprep.subr.bf16.mxu0 0
    %766 = vmatpush1.bf16.msra.mxu0 0
    %767 = vmatprep.subr.bf16.mxu0 0
    %768 = vmatpush1.bf16.msra.mxu0 0
    %769 = vmatprep.subr.bf16.mxu0 0
    %770 = vmatpush1.bf16.msra.mxu0 0
    %771 = vmatprep.subr.bf16.mxu0 0
    %772 = vmatpush1.bf16.msra.mxu0 0
    %773 = vmatprep.subr.bf16.mxu0 0
    %774 = vmatpush1.bf16.msra.mxu0 0
    %775 = vmatprep.mubr.bf16.mxu0 0
    %776 = vmatmul.mubr.bf16.gmra.mrb[0].mxu0 %v741
    %v777 = vpop.f32.mrb[0].mxu0
    %v778 = vadd.f32 0.0, %v777
    %v779 = vpop.f32.mrb[0].mxu0
    %v780 = vpop.f32.mrb[0].mxu0
    %v781 = vpop.f32.mrb[0].mxu0
    %782 = vdwg.mxu0
    %v783 = vmul.f32 %v778, 0.17677669
    %v784 = vadd.f32 %v783, %v492
    %v785 = vsel %vm494, %v784, -inf
    %786 = vmax.xlane.f32.xlu0 %v785
    %v787 = vpop.xlane.xlu0 %786
    %v788 = vsub.f32 %v784, %v787
    %v789 = vmul.f32 %v788, 1.442695
    %v790 = vpow.pop %v789
    %v791 = vsel %vm494, %v790, 0.0
    %792 = vadd.xlane.f32.xlu0 %v791
    %v793 = vpop.xlane.xlu0 %792
    %v794 = vrcp.pop %v793
    %v795 = vmul.f32 %v790, %v794
    %v796 = vpack.c.bf16 %v795, %v795
    %797 = vrot.lane.b32.xlu0 %v440, 64
    %v798 = vpop.permute.xlu0 %797
    %v800 = vsel %vm494, %v796, 0
    %v803 = vsel %vm510, %v798, 0
    %805 = vmatprep.subr.bf16.mxu0 0
    %806 = vmatpush1.bf16.msra.mxu0 %v803
    %807 = vmatprep.subr.bf16.mxu0 0
    %808 = vmatpush1.bf16.msra.mxu0 0
    %809 = vmatprep.subr.bf16.mxu0 0
    %810 = vmatpush1.bf16.msra.mxu0 0
    %811 = vmatprep.subr.bf16.mxu0 0
    %812 = vmatpush1.bf16.msra.mxu0 0
    %813 = vmatprep.subr.bf16.mxu0 0
    %814 = vmatpush1.bf16.msra.mxu0 0
    %815 = vmatprep.subr.bf16.mxu0 0
    %816 = vmatpush1.bf16.msra.mxu0 0
    %817 = vmatprep.subr.bf16.mxu0 0
    %818 = vmatpush1.bf16.msra.mxu0 0
    %819 = vmatprep.subr.bf16.mxu0 0
    %820 = vmatpush1.bf16.msra.mxu0 0
    %821 = vmatprep.subr.bf16.mxu0 0
    %822 = vmatpush1.bf16.msra.mxu0 0
    %823 = vmatprep.subr.bf16.mxu0 0
    %824 = vmatpush1.bf16.msra.mxu0 0
    %825 = vmatprep.subr.bf16.mxu0 0
    %826 = vmatpush1.bf16.msra.mxu0 0
    %827 = vmatprep.subr.bf16.mxu0 0
    %828 = vmatpush1.bf16.msra.mxu0 0
    %829 = vmatprep.subr.bf16.mxu0 0
    %830 = vmatpush1.bf16.msra.mxu0 0
    %831 = vmatprep.subr.bf16.mxu0 0
    %832 = vmatpush1.bf16.msra.mxu0 0
    %833 = vmatprep.subr.bf16.mxu0 0
    %834 = vmatpush1.bf16.msra.mxu0 0
    %835 = vmatprep.subr.bf16.mxu0 0
    %836 = vmatpush1.bf16.msra.mxu0 0
    %837 = vmatprep.mubr.bf16.mxu0 0
    %838 = vmatmul.mubr.bf16.gmra.mrb[0].mxu0 %v800
    %v839 = vpop.f32.mrb[0].mxu0
    %v840 = vadd.f32 0.0, %v839
    %v841 = vpop.f32.mrb[0].mxu0
    %v842 = vpop.f32.mrb[0].mxu0
    %v843 = vpop.f32.mrb[0].mxu0
    %844 = vdwg.mxu0
    %845 = vrot.lane.b32.xlu0 %v361, 32
    %v846 = vpop.permute.xlu0 %845
    %848 = vxpose.xlu0.b32.start [1/16] %v846, 128
    %849 = vxpose.xlu0.b32.cont [2/16] 0.0, 128
    %850 = vxpose.xlu0.b32.cont [3/16] 0.0, 128
    %851 = vxpose.xlu0.b32.cont [4/16] 0.0, 128
    %852 = vxpose.xlu0.b32.cont [5/16] 0.0, 128
    %853 = vxpose.xlu0.b32.cont [6/16] 0.0, 128
    %854 = vxpose.xlu0.b32.cont [7/16] 0.0, 128
    %855 = vxpose.xlu0.b32.cont [8/16] 0.0, 128
    %856 = vxpose.xlu0.b32.cont [9/16] 0.0, 128
    %857 = vxpose.xlu0.b32.cont [10/16] 0.0, 128
    %858 = vxpose.xlu0.b32.cont [11/16] 0.0, 128
    %859 = vxpose.xlu0.b32.cont [12/16] 0.0, 128
    %860 = vxpose.xlu0.b32.cont [13/16] 0.0, 128
    %861 = vxpose.xlu0.b32.cont [14/16] 0.0, 128
    %862 = vxpose.xlu0.b32.cont [15/16] 0.0, 128
    %863 = vxpose.xlu0.b32.end [16/16] 0.0, 128
    %v864 = vpop.trf.xlu0
    %v865 = vpop.trf.xlu0
    %v866 = vpop.trf.xlu0
    %v867 = vpop.trf.xlu0
    %v868 = vpop.trf.xlu0
    %v869 = vpop.trf.xlu0
    %v870 = vpop.trf.xlu0
    %v871 = vpop.trf.xlu0
    %v872 = vpop.trf.xlu0
    %v873 = vpop.trf.xlu0
    %v874 = vpop.trf.xlu0
    %v875 = vpop.trf.xlu0
    %v876 = vpop.trf.xlu0
    %v877 = vpop.trf.xlu0
    %v878 = vpop.trf.xlu0
    %v879 = vpop.trf.xlu0
    %v880 = vpack.c.bf16 %v865, %v864
    %v881 = vpack.c.bf16 %v867, %v866
    %882 = vrot.lane.b32.xlu0 %v441, 32
    %v883 = vpop.permute.xlu0 %882
    %v885 = vsel %vm444, %v883, 0
    %887 = vmatprep.subr.bf16.mxu0 0
    %888 = vmatpush1.bf16.msra.mxu0 %v880
    %889 = vmatprep.subr.bf16.mxu0 0
    %890 = vmatpush1.bf16.msra.mxu0 %v881
    %891 = vmatprep.subr.bf16.mxu0 0
    %892 = vmatpush1.bf16.msra.mxu0 0
    %893 = vmatprep.subr.bf16.mxu0 0
    %894 = vmatpush1.bf16.msra.mxu0 0
    %895 = vmatprep.subr.bf16.mxu0 0
    %896 = vmatpush1.bf16.msra.mxu0 0
    %897 = vmatprep.subr.bf16.mxu0 0
    %898 = vmatpush1.bf16.msra.mxu0 0
    %899 = vmatprep.subr.bf16.mxu0 0
    %900 = vmatpush1.bf16.msra.mxu0 0
    %901 = vmatprep.subr.bf16.mxu0 0
    %902 = vmatpush1.bf16.msra.mxu0 0
    %903 = vmatprep.subr.bf16.mxu0 0
    %904 = vmatpush1.bf16.msra.mxu0 0
    %905 = vmatprep.subr.bf16.mxu0 0
    %906 = vmatpush1.bf16.msra.mxu0 0
    %907 = vmatprep.subr.bf16.mxu0 0
    %908 = vmatpush1.bf16.msra.mxu0 0
    %909 = vmatprep.subr.bf16.mxu0 0
    %910 = vmatpush1.bf16.msra.mxu0 0
    %911 = vmatprep.subr.bf16.mxu0 0
    %912 = vmatpush1.bf16.msra.mxu0 0
    %913 = vmatprep.subr.bf16.mxu0 0
    %914 = vmatpush1.bf16.msra.mxu0 0
    %915 = vmatprep.subr.bf16.mxu0 0
    %916 = vmatpush1.bf16.msra.mxu0 0
    %917 = vmatprep.subr.bf16.mxu0 0
    %918 = vmatpush1.bf16.msra.mxu0 0
    %919 = vmatprep.mubr.bf16.mxu0 0
    %920 = vmatmul.mubr.bf16.gmra.mrb[0].mxu0 %v885
    %v921 = vpop.f32.mrb[0].mxu0
    %v922 = vadd.f32 0.0, %v921
    %v923 = vpop.f32.mrb[0].mxu0
    %v924 = vpop.f32.mrb[0].mxu0
    %v925 = vpop.f32.mrb[0].mxu0
    %926 = vdwg.mxu0
    %v927 = vmul.f32 %v922, 0.17677669
    %v928 = vadd.f32 %v927, %v492
    %v929 = vsel %vm494, %v928, -inf
    %930 = vmax.xlane.f32.xlu0 %v929
    %v931 = vpop.xlane.xlu0 %930
    %v932 = vsub.f32 %v928, %v931
    %v933 = vmul.f32 %v932, 1.442695
    %v934 = vpow.pop %v933
    %v935 = vsel %vm494, %v934, 0.0
    %936 = vadd.xlane.f32.xlu0 %v935
    %v937 = vpop.xlane.xlu0 %936
    %v938 = vrcp.pop %v937
    %v939 = vmul.f32 %v934, %v938
    %v940 = vpack.c.bf16 %v939, %v939
    %941 = vrot.lane.b32.xlu0 %v440, 32
    %v942 = vpop.permute.xlu0 %941
    %v944 = vsel %vm494, %v940, 0
    %v947 = vsel %vm510, %v942, 0
    %949 = vmatprep.subr.bf16.mxu0 0
    %950 = vmatpush1.bf16.msra.mxu0 %v947
    %951 = vmatprep.subr.bf16.mxu0 0
    %952 = vmatpush1.bf16.msra.mxu0 0
    %953 = vmatprep.subr.bf16.mxu0 0
    %954 = vmatpush1.bf16.msra.mxu0 0
    %955 = vmatprep.subr.bf16.mxu0 0
    %956 = vmatpush1.bf16.msra.mxu0 0
    %957 = vmatprep.subr.bf16.mxu0 0
    %958 = vmatpush1.bf16.msra.mxu0 0
    %959 = vmatprep.subr.bf16.mxu0 0
    %960 = vmatpush1.bf16.msra.mxu0 0
    %961 = vmatprep.subr.bf16.mxu0 0
    %962 = vmatpush1.bf16.msra.mxu0 0
    %963 = vmatprep.subr.bf16.mxu0 0
    %964 = vmatpush1.bf16.msra.mxu0 0
    %965 = vmatprep.subr.bf16.mxu0 0
    %966 = vmatpush1.bf16.msra.mxu0 0
    %967 = vmatprep.subr.bf16.mxu0 0
    %968 = vmatpush1.bf16.msra.mxu0 0
    %969 = vmatprep.subr.bf16.mxu0 0
    %970 = vmatpush1.bf16.msra.mxu0 0
    %971 = vmatprep.subr.bf16.mxu0 0
    %972 = vmatpush1.bf16.msra.mxu0 0
    %973 = vmatprep.subr.bf16.mxu0 0
    %974 = vmatpush1.bf16.msra.mxu0 0
    %975 = vmatprep.subr.bf16.mxu0 0
    %976 = vmatpush1.bf16.msra.mxu0 0
    %977 = vmatprep.subr.bf16.mxu0 0
    %978 = vmatpush1.bf16.msra.mxu0 0
    %979 = vmatprep.subr.bf16.mxu0 0
    %980 = vmatpush1.bf16.msra.mxu0 0
    %981 = vmatprep.mubr.bf16.mxu0 0
    %982 = vmatmul.mubr.bf16.gmra.mrb[0].mxu0 %v944
    %v983 = vpop.f32.mrb[0].mxu0
    %v984 = vadd.f32 0.0, %v983
    %v985 = vpop.f32.mrb[0].mxu0
    %v986 = vpop.f32.mrb[0].mxu0
    %v987 = vpop.f32.mrb[0].mxu0
    %988 = vdwg.mxu0
    %990 = vrot.lane.b32.xlu0 %v696, 32
    %v991 = vpop.permute.xlu0 %990
    %994 = vrot.lane.b32.xlu0 %v840, 64
    %v995 = vpop.permute.xlu0 %994
    %998 = vrot.lane.b32.xlu0 %v984, 96
    %v999 = vpop.permute.xlu0 %998
    %v1001 = vsel %vm444, %v549, %v991
    %vm1002 = vcmask 523264
    %v1003 = vsel %vm1002, %v1001, %v995
    %vm1004 = vcmask 785408
    %v1005 = vsel %vm1004, %v1003, %v999
    %1006 = vxpose.xlu0.b32.start [1/16] %v365, 128
    %1007 = vxpose.xlu0.b32.cont [2/16] 0.0, 128
    %1008 = vxpose.xlu0.b32.cont [3/16] 0.0, 128
    %1009 = vxpose.xlu0.b32.cont [4/16] 0.0, 128
    %1010 = vxpose.xlu0.b32.cont [5/16] 0.0, 128
    %1011 = vxpose.xlu0.b32.cont [6/16] 0.0, 128
    %1012 = vxpose.xlu0.b32.cont [7/16] 0.0, 128
    %1013 = vxpose.xlu0.b32.cont [8/16] 0.0, 128
    %1014 = vxpose.xlu0.b32.cont [9/16] 0.0, 128
    %1015 = vxpose.xlu0.b32.cont [10/16] 0.0, 128
    %1016 = vxpose.xlu0.b32.cont [11/16] 0.0, 128
    %1017 = vxpose.xlu0.b32.cont [12/16] 0.0, 128
    %1018 = vxpose.xlu0.b32.cont [13/16] 0.0, 128
    %1019 = vxpose.xlu0.b32.cont [14/16] 0.0, 128
    %1020 = vxpose.xlu0.b32.cont [15/16] 0.0, 128
    %1021 = vxpose.xlu0.b32.end [16/16] 0.0, 128
    %v1022 = vpop.trf.xlu0
    %v1023 = vpop.trf.xlu0
    %v1024 = vpop.trf.xlu0
    %v1025 = vpop.trf.xlu0
    %v1026 = vpop.trf.xlu0
    %v1027 = vpop.trf.xlu0
    %v1028 = vpop.trf.xlu0
    %v1029 = vpop.trf.xlu0
    %v1030 = vpop.trf.xlu0
    %v1031 = vpop.trf.xlu0
    %v1032 = vpop.trf.xlu0
    %v1033 = vpop.trf.xlu0
    %v1034 = vpop.trf.xlu0
    %v1035 = vpop.trf.xlu0
    %v1036 = vpop.trf.xlu0
    %v1037 = vpop.trf.xlu0
    %v1038 = vpack.c.bf16 %v405, %v405
    %v1039 = vpack.c.bf16 %v363, %v363
    %v1040 = vpack.c.bf16 %v1023, %v1022
    %v1041 = vpack.c.bf16 %v1025, %v1024
    %v1043 = vsel %vm444, %v1039, 0
    %1045 = vmatprep.subr.bf16.mxu0 0
    %1046 = vmatpush1.bf16.msra.mxu0 %v1040
    %1047 = vmatprep.subr.bf16.mxu0 0
    %1048 = vmatpush1.bf16.msra.mxu0 %v1041
    %1049 = vmatprep.subr.bf16.mxu0 0
    %1050 = vmatpush1.bf16.msra.mxu0 0
    %1051 = vmatprep.subr.bf16.mxu0 0
    %1052 = vmatpush1.bf16.msra.mxu0 0
    %1053 = vmatprep.subr.bf16.mxu0 0
    %1054 = vmatpush1.bf16.msra.mxu0 0
    %1055 = vmatprep.subr.bf16.mxu0 0
    %1056 = vmatpush1.bf16.msra.mxu0 0
    %1057 = vmatprep.subr.bf16.mxu0 0
    %1058 = vmatpush1.bf16.msra.mxu0 0
    %1059 = vmatprep.subr.bf16.mxu0 0
    %1060 = vmatpush1.bf16.msra.mxu0 0
    %1061 = vmatprep.subr.bf16.mxu0 0
    %1062 = vmatpush1.bf16.msra.mxu0 0
    %1063 = vmatprep.subr.bf16.mxu0 0
    %1064 = vmatpush1.bf16.msra.mxu0 0
    %1065 = vmatprep.subr.bf16.mxu0 0
    %1066 = vmatpush1.bf16.msra.mxu0 0
    %1067 = vmatprep.subr.bf16.mxu0 0
    %1068 = vmatpush1.bf16.msra.mxu0 0
    %1069 = vmatprep.subr.bf16.mxu0 0
    %1070 = vmatpush1.bf16.msra.mxu0 0
    %1071 = vmatprep.subr.bf16.mxu0 0
    %1072 = vmatpush1.bf16.msra.mxu0 0
    %1073 = vmatprep.subr.bf16.mxu0 0
    %1074 = vmatpush1.bf16.msra.mxu0 0
    %1075 = vmatprep.subr.bf16.mxu0 0
    %1076 = vmatpush1.bf16.msra.mxu0 0
    %1077 = vmatprep.mubr.bf16.mxu0 0
    %1078 = vmatmul.mubr.bf16.gmra.mrb[0].mxu0 %v1043
    %v1079 = vpop.f32.mrb[0].mxu0
    %v1080 = vadd.f32 0.0, %v1079
    %v1081 = vpop.f32.mrb[0].mxu0
    %v1082 = vpop.f32.mrb[0].mxu0
    %v1083 = vpop.f32.mrb[0].mxu0
    %1084 = vdwg.mxu0
    %v1085 = vmul.f32 %v1080, 0.17677669
    %v1086 = vlaneseq
    %v1087 = vshrl.u32 %v1086, 7
    %v1088 = vsub.s32 1, %v1087
    %v1089 = vrot.slane %v145, %v1088
    %v1090 = vadd.f32 %v1085, %v1089
    %v1091 = vsel %vm494, %v1090, -inf
    %1092 = vmax.xlane.f32.xlu0 %v1091
    %v1093 = vpop.xlane.xlu0 %1092
    %v1094 = vsub.f32 %v1090, %v1093
    %v1095 = vmul.f32 %v1094, 1.442695
    %v1096 = vpow.pop %v1095
    %v1097 = vsel %vm494, %v1096, 0.0
    %1098 = vadd.xlane.f32.xlu0 %v1097
    %v1099 = vpop.xlane.xlu0 %1098
    %v1100 = vrcp.pop %v1099
    %v1101 = vmul.f32 %v1096, %v1100
    %v1102 = vpack.c.bf16 %v1101, %v1101
    %v1104 = vsel %vm494, %v1102, 0
    %v1107 = vsel %vm510, %v1038, 0
    %1109 = vmatprep.subr.bf16.mxu0 0
    %1110 = vmatpush1.bf16.msra.mxu0 %v1107
    %1111 = vmatprep.subr.bf16.mxu0 0
    %1112 = vmatpush1.bf16.msra.mxu0 0
    %1113 = vmatprep.subr.bf16.mxu0 0
    %1114 = vmatpush1.bf16.msra.mxu0 0
    %1115 = vmatprep.subr.bf16.mxu0 0
    %1116 = vmatpush1.bf16.msra.mxu0 0
    %1117 = vmatprep.subr.bf16.mxu0 0
    %1118 = vmatpush1.bf16.msra.mxu0 0
    %1119 = vmatprep.subr.bf16.mxu0 0
    %1120 = vmatpush1.bf16.msra.mxu0 0
    %1121 = vmatprep.subr.bf16.mxu0 0
    %1122 = vmatpush1.bf16.msra.mxu0 0
    %1123 = vmatprep.subr.bf16.mxu0 0
    %1124 = vmatpush1.bf16.msra.mxu0 0
    %1125 = vmatprep.subr.bf16.mxu0 0
    %1126 = vmatpush1.bf16.msra.mxu0 0
    %1127 = vmatprep.subr.bf16.mxu0 0
    %1128 = vmatpush1.bf16.msra.mxu0 0
    %1129 = vmatprep.subr.bf16.mxu0 0
    %1130 = vmatpush1.bf16.msra.mxu0 0
    %1131 = vmatprep.subr.bf16.mxu0 0
    %1132 = vmatpush1.bf16.msra.mxu0 0
    %1133 = vmatprep.subr.bf16.mxu0 0
    %1134 = vmatpush1.bf16.msra.mxu0 0
    %1135 = vmatprep.subr.bf16.mxu0 0
    %1136 = vmatpush1.bf16.msra.mxu0 0
    %1137 = vmatprep.subr.bf16.mxu0 0
    %1138 = vmatpush1.bf16.msra.mxu0 0
    %1139 = vmatprep.subr.bf16.mxu0 0
    %1140 = vmatpush1.bf16.msra.mxu0 0
    %1141 = vmatprep.mubr.bf16.mxu0 0
    %1142 = vmatmul.mubr.bf16.gmra.mrb[0].mxu0 %v1104
    %v1143 = vpop.f32.mrb[0].mxu0
    %v1144 = vadd.f32 0.0, %v1143
    %v1145 = vpop.f32.mrb[0].mxu0
    %v1146 = vpop.f32.mrb[0].mxu0
    %v1147 = vpop.f32.mrb[0].mxu0
    %1148 = vdwg.mxu0
    %1150 = vrot.lane.b32.xlu0 %v365, 96
    %v1151 = vpop.permute.xlu0 %1150
    %1153 = vxpose.xlu0.b32.start [1/16] %v1151, 128
    %1154 = vxpose.xlu0.b32.cont [2/16] 0.0, 128
    %1155 = vxpose.xlu0.b32.cont [3/16] 0.0, 128
    %1156 = vxpose.xlu0.b32.cont [4/16] 0.0, 128
    %1157 = vxpose.xlu0.b32.cont [5/16] 0.0, 128
    %1158 = vxpose.xlu0.b32.cont [6/16] 0.0, 128
    %1159 = vxpose.xlu0.b32.cont [7/16] 0.0, 128
    %1160 = vxpose.xlu0.b32.cont [8/16] 0.0, 128
    %1161 = vxpose.xlu0.b32.cont [9/16] 0.0, 128
    %1162 = vxpose.xlu0.b32.cont [10/16] 0.0, 128
    %1163 = vxpose.xlu0.b32.cont [11/16] 0.0, 128
    %1164 = vxpose.xlu0.b32.cont [12/16] 0.0, 128
    %1165 = vxpose.xlu0.b32.cont [13/16] 0.0, 128
    %1166 = vxpose.xlu0.b32.cont [14/16] 0.0, 128
    %1167 = vxpose.xlu0.b32.cont [15/16] 0.0, 128
    %1168 = vxpose.xlu0.b32.end [16/16] 0.0, 128
    %v1169 = vpop.trf.xlu0
    %v1170 = vpop.trf.xlu0
    %v1171 = vpop.trf.xlu0
    %v1172 = vpop.trf.xlu0
    %v1173 = vpop.trf.xlu0
    %v1174 = vpop.trf.xlu0
    %v1175 = vpop.trf.xlu0
    %v1176 = vpop.trf.xlu0
    %v1177 = vpop.trf.xlu0
    %v1178 = vpop.trf.xlu0
    %v1179 = vpop.trf.xlu0
    %v1180 = vpop.trf.xlu0
    %v1181 = vpop.trf.xlu0
    %v1182 = vpop.trf.xlu0
    %v1183 = vpop.trf.xlu0
    %v1184 = vpop.trf.xlu0
    %v1185 = vpack.c.bf16 %v1170, %v1169
    %v1186 = vpack.c.bf16 %v1172, %v1171
    %1188 = vrot.lane.b32.xlu0 %v1039, 96
    %v1189 = vpop.permute.xlu0 %1188
    %v1191 = vsel %vm444, %v1189, 0
    %1193 = vmatprep.subr.bf16.mxu0 0
    %1194 = vmatpush1.bf16.msra.mxu0 %v1185
    %1195 = vmatprep.subr.bf16.mxu0 0
    %1196 = vmatpush1.bf16.msra.mxu0 %v1186
    %1197 = vmatprep.subr.bf16.mxu0 0
    %1198 = vmatpush1.bf16.msra.mxu0 0
    %1199 = vmatprep.subr.bf16.mxu0 0
    %1200 = vmatpush1.bf16.msra.mxu0 0
    %1201 = vmatprep.subr.bf16.mxu0 0
    %1202 = vmatpush1.bf16.msra.mxu0 0
    %1203 = vmatprep.subr.bf16.mxu0 0
    %1204 = vmatpush1.bf16.msra.mxu0 0
    %1205 = vmatprep.subr.bf16.mxu0 0
    %1206 = vmatpush1.bf16.msra.mxu0 0
    %1207 = vmatprep.subr.bf16.mxu0 0
    %1208 = vmatpush1.bf16.msra.mxu0 0
    %1209 = vmatprep.subr.bf16.mxu0 0
    %1210 = vmatpush1.bf16.msra.mxu0 0
    %1211 = vmatprep.subr.bf16.mxu0 0
    %1212 = vmatpush1.bf16.msra.mxu0 0
    %1213 = vmatprep.subr.bf16.mxu0 0
    %1214 = vmatpush1.bf16.msra.mxu0 0
    %1215 = vmatprep.subr.bf16.mxu0 0
    %1216 = vmatpush1.bf16.msra.mxu0 0
    %1217 = vmatprep.subr.bf16.mxu0 0
    %1218 = vmatpush1.bf16.msra.mxu0 0
    %1219 = vmatprep.subr.bf16.mxu0 0
    %1220 = vmatpush1.bf16.msra.mxu0 0
    %1221 = vmatprep.subr.bf16.mxu0 0
    %1222 = vmatpush1.bf16.msra.mxu0 0
    %1223 = vmatprep.subr.bf16.mxu0 0
    %1224 = vmatpush1.bf16.msra.mxu0 0
    %1225 = vmatprep.mubr.bf16.mxu0 0
    %1226 = vmatmul.mubr.bf16.gmra.mrb[0].mxu0 %v1191
    %v1227 = vpop.f32.mrb[0].mxu0
    %v1228 = vadd.f32 0.0, %v1227
    %v1229 = vpop.f32.mrb[0].mxu0
    %v1230 = vpop.f32.mrb[0].mxu0
    %v1231 = vpop.f32.mrb[0].mxu0
    %1232 = vdwg.mxu0
    %v1233 = vmul.f32 %v1228, 0.17677669
    %v1234 = vadd.f32 %v1233, %v1089
    %v1235 = vsel %vm494, %v1234, -inf
    %1236 = vmax.xlane.f32.xlu0 %v1235
    %v1237 = vpop.xlane.xlu0 %1236
    %v1238 = vsub.f32 %v1234, %v1237
    %v1239 = vmul.f32 %v1238, 1.442695
    %v1240 = vpow.pop %v1239
    %v1241 = vsel %vm494, %v1240, 0.0
    %1242 = vadd.xlane.f32.xlu0 %v1241
    %v1243 = vpop.xlane.xlu0 %1242
    %v1244 = vrcp.pop %v1243
    %v1245 = vmul.f32 %v1240, %v1244
    %v1246 = vpack.c.bf16 %v1245, %v1245
    %1248 = vrot.lane.b32.xlu0 %v1038, 96
    %v1249 = vpop.permute.xlu0 %1248
    %v1251 = vsel %vm494, %v1246, 0
    %v1254 = vsel %vm510, %v1249, 0
    %1256 = vmatprep.subr.bf16.mxu0 0
    %1257 = vmatpush1.bf16.msra.mxu0 %v1254
    %1258 = vmatprep.subr.bf16.mxu0 0
    %1259 = vmatpush1.bf16.msra.mxu0 0
    %1260 = vmatprep.subr.bf16.mxu0 0
    %1261 = vmatpush1.bf16.msra.mxu0 0
    %1262 = vmatprep.subr.bf16.mxu0 0
    %1263 = vmatpush1.bf16.msra.mxu0 0
    %1264 = vmatprep.subr.bf16.mxu0 0
    %1265 = vmatpush1.bf16.msra.mxu0 0
    %1266 = vmatprep.subr.bf16.mxu0 0
    %1267 = vmatpush1.bf16.msra.mxu0 0
    %1268 = vmatprep.subr.bf16.mxu0 0
    %1269 = vmatpush1.bf16.msra.mxu0 0
    %1270 = vmatprep.subr.bf16.mxu0 0
    %1271 = vmatpush1.bf16.msra.mxu0 0
    %1272 = vmatprep.subr.bf16.mxu0 0
    %1273 = vmatpush1.bf16.msra.mxu0 0
    %1274 = vmatprep.subr.bf16.mxu0 0
    %1275 = vmatpush1.bf16.msra.mxu0 0
    %1276 = vmatprep.subr.bf16.mxu0 0
    %1277 = vmatpush1.bf16.msra.mxu0 0
    %1278 = vmatprep.subr.bf16.mxu0 0
    %1279 = vmatpush1.bf16.msra.mxu0 0
    %1280 = vmatprep.subr.bf16.mxu0 0
    %1281 = vmatpush1.bf16.msra.mxu0 0
    %1282 = vmatprep.subr.bf16.mxu0 0
    %1283 = vmatpush1.bf16.msra.mxu0 0
    %1284 = vmatprep.subr.bf16.mxu0 0
    %1285 = vmatpush1.bf16.msra.mxu0 0
    %1286 = vmatprep.subr.bf16.mxu0 0
    %1287 = vmatpush1.bf16.msra.mxu0 0
    %1288 = vmatprep.mubr.bf16.mxu0 0
    %1289 = vmatmul.mubr.bf16.gmra.mrb[0].mxu0 %v1251
    %v1290 = vpop.f32.mrb[0].mxu0
    %v1291 = vadd.f32 0.0, %v1290
    %v1292 = vpop.f32.mrb[0].mxu0
    %v1293 = vpop.f32.mrb[0].mxu0
    %v1294 = vpop.f32.mrb[0].mxu0
    %1295 = vdwg.mxu0
    %1296 = vrot.lane.b32.xlu0 %v365, 64
    %v1297 = vpop.permute.xlu0 %1296
    %1299 = vxpose.xlu0.b32.start [1/16] %v1297, 128
    %1300 = vxpose.xlu0.b32.cont [2/16] 0.0, 128
    %1301 = vxpose.xlu0.b32.cont [3/16] 0.0, 128
    %1302 = vxpose.xlu0.b32.cont [4/16] 0.0, 128
    %1303 = vxpose.xlu0.b32.cont [5/16] 0.0, 128
    %1304 = vxpose.xlu0.b32.cont [6/16] 0.0, 128
    %1305 = vxpose.xlu0.b32.cont [7/16] 0.0, 128
    %1306 = vxpose.xlu0.b32.cont [8/16] 0.0, 128
    %1307 = vxpose.xlu0.b32.cont [9/16] 0.0, 128
    %1308 = vxpose.xlu0.b32.cont [10/16] 0.0, 128
    %1309 = vxpose.xlu0.b32.cont [11/16] 0.0, 128
    %1310 = vxpose.xlu0.b32.cont [12/16] 0.0, 128
    %1311 = vxpose.xlu0.b32.cont [13/16] 0.0, 128
    %1312 = vxpose.xlu0.b32.cont [14/16] 0.0, 128
    %1313 = vxpose.xlu0.b32.cont [15/16] 0.0, 128
    %1314 = vxpose.xlu0.b32.end [16/16] 0.0, 128
    %v1315 = vpop.trf.xlu0
    %v1316 = vpop.trf.xlu0
    %v1317 = vpop.trf.xlu0
    %v1318 = vpop.trf.xlu0
    %v1319 = vpop.trf.xlu0
    %v1320 = vpop.trf.xlu0
    %v1321 = vpop.trf.xlu0
    %v1322 = vpop.trf.xlu0
    %v1323 = vpop.trf.xlu0
    %v1324 = vpop.trf.xlu0
    %v1325 = vpop.trf.xlu0
    %v1326 = vpop.trf.xlu0
    %v1327 = vpop.trf.xlu0
    %v1328 = vpop.trf.xlu0
    %v1329 = vpop.trf.xlu0
    %v1330 = vpop.trf.xlu0
    %v1331 = vpack.c.bf16 %v1316, %v1315
    %v1332 = vpack.c.bf16 %v1318, %v1317
    %1333 = vrot.lane.b32.xlu0 %v1039, 64
    %v1334 = vpop.permute.xlu0 %1333
    %v1336 = vsel %vm444, %v1334, 0
    %1338 = vmatprep.subr.bf16.mxu0 0
    %1339 = vmatpush1.bf16.msra.mxu0 %v1331
    %1340 = vmatprep.subr.bf16.mxu0 0
    %1341 = vmatpush1.bf16.msra.mxu0 %v1332
    %1342 = vmatprep.subr.bf16.mxu0 0
    %1343 = vmatpush1.bf16.msra.mxu0 0
    %1344 = vmatprep.subr.bf16.mxu0 0
    %1345 = vmatpush1.bf16.msra.mxu0 0
    %1346 = vmatprep.subr.bf16.mxu0 0
    %1347 = vmatpush1.bf16.msra.mxu0 0
    %1348 = vmatprep.subr.bf16.mxu0 0
    %1349 = vmatpush1.bf16.msra.mxu0 0
    %1350 = vmatprep.subr.bf16.mxu0 0
    %1351 = vmatpush1.bf16.msra.mxu0 0
    %1352 = vmatprep.subr.bf16.mxu0 0
    %1353 = vmatpush1.bf16.msra.mxu0 0
    %1354 = vmatprep.subr.bf16.mxu0 0
    %1355 = vmatpush1.bf16.msra.mxu0 0
    %1356 = vmatprep.subr.bf16.mxu0 0
    %1357 = vmatpush1.bf16.msra.mxu0 0
    %1358 = vmatprep.subr.bf16.mxu0 0
    %1359 = vmatpush1.bf16.msra.mxu0 0
    %1360 = vmatprep.subr.bf16.mxu0 0
    %1361 = vmatpush1.bf16.msra.mxu0 0
    %1362 = vmatprep.subr.bf16.mxu0 0
    %1363 = vmatpush1.bf16.msra.mxu0 0
    %1364 = vmatprep.subr.bf16.mxu0 0
    %1365 = vmatpush1.bf16.msra.mxu0 0
    %1366 = vmatprep.subr.bf16.mxu0 0
    %1367 = vmatpush1.bf16.msra.mxu0 0
    %1368 = vmatprep.subr.bf16.mxu0 0
    %1369 = vmatpush1.bf16.msra.mxu0 0
    %1370 = vmatprep.mubr.bf16.mxu0 0
    %1371 = vmatmul.mubr.bf16.gmra.mrb[0].mxu0 %v1336
    %v1372 = vpop.f32.mrb[0].mxu0
    %v1373 = vadd.f32 0.0, %v1372
    %v1374 = vpop.f32.mrb[0].mxu0
    %v1375 = vpop.f32.mrb[0].mxu0
    %v1376 = vpop.f32.mrb[0].mxu0
    %1377 = vdwg.mxu0
    %v1378 = vmul.f32 %v1373, 0.17677669
    %v1379 = vadd.f32 %v1378, %v1089
    %v1380 = vsel %vm494, %v1379, -inf
    %1381 = vmax.xlane.f32.xlu0 %v1380
    %v1382 = vpop.xlane.xlu0 %1381
    %v1383 = vsub.f32 %v1379, %v1382
    %v1384 = vmul.f32 %v1383, 1.442695
    %v1385 = vpow.pop %v1384
    %v1386 = vsel %vm494, %v1385, 0.0
    %1387 = vadd.xlane.f32.xlu0 %v1386
    %v1388 = vpop.xlane.xlu0 %1387
    %v1389 = vrcp.pop %v1388
    %v1390 = vmul.f32 %v1385, %v1389
    %v1391 = vpack.c.bf16 %v1390, %v1390
    %1392 = vrot.lane.b32.xlu0 %v1038, 64
    %v1393 = vpop.permute.xlu0 %1392
    %v1395 = vsel %vm494, %v1391, 0
    %v1398 = vsel %vm510, %v1393, 0
    %1400 = vmatprep.subr.bf16.mxu0 0
    %1401 = vmatpush1.bf16.msra.mxu0 %v1398
    %1402 = vmatprep.subr.bf16.mxu0 0
    %1403 = vmatpush1.bf16.msra.mxu0 0
    %1404 = vmatprep.subr.bf16.mxu0 0
    %1405 = vmatpush1.bf16.msra.mxu0 0
    %1406 = vmatprep.subr.bf16.mxu0 0
    %1407 = vmatpush1.bf16.msra.mxu0 0
    %1408 = vmatprep.subr.bf16.mxu0 0
    %1409 = vmatpush1.bf16.msra.mxu0 0
    %1410 = vmatprep.subr.bf16.mxu0 0
    %1411 = vmatpush1.bf16.msra.mxu0 0
    %1412 = vmatprep.subr.bf16.mxu0 0
    %1413 = vmatpush1.bf16.msra.mxu0 0
    %1414 = vmatprep.subr.bf16.mxu0 0
    %1415 = vmatpush1.bf16.msra.mxu0 0
    %1416 = vmatprep.subr.bf16.mxu0 0
    %1417 = vmatpush1.bf16.msra.mxu0 0
    %1418 = vmatprep.subr.bf16.mxu0 0
    %1419 = vmatpush1.bf16.msra.mxu0 0
    %1420 = vmatprep.subr.bf16.mxu0 0
    %1421 = vmatpush1.bf16.msra.mxu0 0
    %1422 = vmatprep.subr.bf16.mxu0 0
    %1423 = vmatpush1.bf16.msra.mxu0 0
    %1424 = vmatprep.subr.bf16.mxu0 0
    %1425 = vmatpush1.bf16.msra.mxu0 0
    %1426 = vmatprep.subr.bf16.mxu0 0
    %1427 = vmatpush1.bf16.msra.mxu0 0
    %1428 = vmatprep.subr.bf16.mxu0 0
    %1429 = vmatpush1.bf16.msra.mxu0 0
    %1430 = vmatprep.subr.bf16.mxu0 0
    %1431 = vmatpush1.bf16.msra.mxu0 0
    %1432 = vmatprep.mubr.bf16.mxu0 0
    %1433 = vmatmul.mubr.bf16.gmra.mrb[0].mxu0 %v1395
    %v1434 = vpop.f32.mrb[0].mxu0
    %v1435 = vadd.f32 0.0, %v1434
    %v1436 = vpop.f32.mrb[0].mxu0
    %v1437 = vpop.f32.mrb[0].mxu0
    %v1438 = vpop.f32.mrb[0].mxu0
    %1439 = vdwg.mxu0
    %1440 = vrot.lane.b32.xlu0 %v365, 32
    %v1441 = vpop.permute.xlu0 %1440
    %1443 = vxpose.xlu0.b32.start [1/16] %v1441, 128
    %1444 = vxpose.xlu0.b32.cont [2/16] 0.0, 128
    %1445 = vxpose.xlu0.b32.cont [3/16] 0.0, 128
    %1446 = vxpose.xlu0.b32.cont [4/16] 0.0, 128
    %1447 = vxpose.xlu0.b32.cont [5/16] 0.0, 128
    %1448 = vxpose.xlu0.b32.cont [6/16] 0.0, 128
    %1449 = vxpose.xlu0.b32.cont [7/16] 0.0, 128
    %1450 = vxpose.xlu0.b32.cont [8/16] 0.0, 128
    %1451 = vxpose.xlu0.b32.cont [9/16] 0.0, 128
    %1452 = vxpose.xlu0.b32.cont [10/16] 0.0, 128
    %1453 = vxpose.xlu0.b32.cont [11/16] 0.0, 128
    %1454 = vxpose.xlu0.b32.cont [12/16] 0.0, 128
    %1455 = vxpose.xlu0.b32.cont [13/16] 0.0, 128
    %1456 = vxpose.xlu0.b32.cont [14/16] 0.0, 128
    %1457 = vxpose.xlu0.b32.cont [15/16] 0.0, 128
    %1458 = vxpose.xlu0.b32.end [16/16] 0.0, 128
    %v1459 = vpop.trf.xlu0
    %v1460 = vpop.trf.xlu0
    %v1461 = vpop.trf.xlu0
    %v1462 = vpop.trf.xlu0
    %v1463 = vpop.trf.xlu0
    %v1464 = vpop.trf.xlu0
    %v1465 = vpop.trf.xlu0
    %v1466 = vpop.trf.xlu0
    %v1467 = vpop.trf.xlu0
    %v1468 = vpop.trf.xlu0
    %v1469 = vpop.trf.xlu0
    %v1470 = vpop.trf.xlu0
    %v1471 = vpop.trf.xlu0
    %v1472 = vpop.trf.xlu0
    %v1473 = vpop.trf.xlu0
    %v1474 = vpop.trf.xlu0
    %v1475 = vpack.c.bf16 %v1460, %v1459
    %v1476 = vpack.c.bf16 %v1462, %v1461
    %1477 = vrot.lane.b32.xlu0 %v1039, 32
    %v1478 = vpop.permute.xlu0 %1477
    %v1480 = vsel %vm444, %v1478, 0
    %1482 = vmatprep.subr.bf16.mxu0 0
    %1483 = vmatpush1.bf16.msra.mxu0 %v1475
    %1484 = vmatprep.subr.bf16.mxu0 0
    %1485 = vmatpush1.bf16.msra.mxu0 %v1476
    %1486 = vmatprep.subr.bf16.mxu0 0
    %1487 = vmatpush1.bf16.msra.mxu0 0
    %1488 = vmatprep.subr.bf16.mxu0 0
    %1489 = vmatpush1.bf16.msra.mxu0 0
    %1490 = vmatprep.subr.bf16.mxu0 0
    %1491 = vmatpush1.bf16.msra.mxu0 0
    %1492 = vmatprep.subr.bf16.mxu0 0
    %1493 = vmatpush1.bf16.msra.mxu0 0
    %1494 = vmatprep.subr.bf16.mxu0 0
    %1495 = vmatpush1.bf16.msra.mxu0 0
    %1496 = vmatprep.subr.bf16.mxu0 0
    %1497 = vmatpush1.bf16.msra.mxu0 0
    %1498 = vmatprep.subr.bf16.mxu0 0
    %1499 = vmatpush1.bf16.msra.mxu0 0
    %1500 = vmatprep.subr.bf16.mxu0 0
    %1501 = vmatpush1.bf16.msra.mxu0 0
    %1502 = vmatprep.subr.bf16.mxu0 0
    %1503 = vmatpush1.bf16.msra.mxu0 0
    %1504 = vmatprep.subr.bf16.mxu0 0
    %1505 = vmatpush1.bf16.msra.mxu0 0
    %1506 = vmatprep.subr.bf16.mxu0 0
    %1507 = vmatpush1.bf16.msra.mxu0 0
    %1508 = vmatprep.subr.bf16.mxu0 0
    %1509 = vmatpush1.bf16.msra.mxu0 0
    %1510 = vmatprep.subr.bf16.mxu0 0
    %1511 = vmatpush1.bf16.msra.mxu0 0
    %1512 = vmatprep.subr.bf16.mxu0 0
    %1513 = vmatpush1.bf16.msra.mxu0 0
    %1514 = vmatprep.mubr.bf16.mxu0 0
    %1515 = vmatmul.mubr.bf16.gmra.mrb[0].mxu0 %v1480
    %v1516 = vpop.f32.mrb[0].mxu0
    %v1517 = vadd.f32 0.0, %v1516
    %v1518 = vpop.f32.mrb[0].mxu0
    %v1519 = vpop.f32.mrb[0].mxu0
    %v1520 = vpop.f32.mrb[0].mxu0
    %1521 = vdwg.mxu0
    %v1522 = vmul.f32 %v1517, 0.17677669
    %v1523 = vadd.f32 %v1522, %v1089
    %v1524 = vsel %vm494, %v1523, -inf
    %1525 = vmax.xlane.f32.xlu0 %v1524
    %v1526 = vpop.xlane.xlu0 %1525
    %v1527 = vsub.f32 %v1523, %v1526
    %v1528 = vmul.f32 %v1527, 1.442695
    %v1529 = vpow.pop %v1528
    %v1530 = vsel %vm494, %v1529, 0.0
    %1531 = vadd.xlane.f32.xlu0 %v1530
    %v1532 = vpop.xlane.xlu0 %1531
    %v1533 = vrcp.pop %v1532
    %v1534 = vmul.f32 %v1529, %v1533
    %v1535 = vpack.c.bf16 %v1534, %v1534
    %1536 = vrot.lane.b32.xlu0 %v1038, 32
    %v1537 = vpop.permute.xlu0 %1536
    %v1539 = vsel %vm494, %v1535, 0
    %v1542 = vsel %vm510, %v1537, 0
    %1544 = vmatprep.subr.bf16.mxu0 0
    %1545 = vmatpush1.bf16.msra.mxu0 %v1542
    %1546 = vmatprep.subr.bf16.mxu0 0
    %1547 = vmatpush1.bf16.msra.mxu0 0
    %1548 = vmatprep.subr.bf16.mxu0 0
    %1549 = vmatpush1.bf16.msra.mxu0 0
    %1550 = vmatprep.subr.bf16.mxu0 0
    %1551 = vmatpush1.bf16.msra.mxu0 0
    %1552 = vmatprep.subr.bf16.mxu0 0
    %1553 = vmatpush1.bf16.msra.mxu0 0
    %1554 = vmatprep.subr.bf16.mxu0 0
    %1555 = vmatpush1.bf16.msra.mxu0 0
    %1556 = vmatprep.subr.bf16.mxu0 0
    %1557 = vmatpush1.bf16.msra.mxu0 0
    %1558 = vmatprep.subr.bf16.mxu0 0
    %1559 = vmatpush1.bf16.msra.mxu0 0
    %1560 = vmatprep.subr.bf16.mxu0 0
    %1561 = vmatpush1.bf16.msra.mxu0 0
    %1562 = vmatprep.subr.bf16.mxu0 0
    %1563 = vmatpush1.bf16.msra.mxu0 0
    %1564 = vmatprep.subr.bf16.mxu0 0
    %1565 = vmatpush1.bf16.msra.mxu0 0
    %1566 = vmatprep.subr.bf16.mxu0 0
    %1567 = vmatpush1.bf16.msra.mxu0 0
    %1568 = vmatprep.subr.bf16.mxu0 0
    %1569 = vmatpush1.bf16.msra.mxu0 0
    %1570 = vmatprep.subr.bf16.mxu0 0
    %1571 = vmatpush1.bf16.msra.mxu0 0
    %1572 = vmatprep.subr.bf16.mxu0 0
    %1573 = vmatpush1.bf16.msra.mxu0 0
    %1574 = vmatprep.subr.bf16.mxu0 0
    %1575 = vmatpush1.bf16.msra.mxu0 0
    %1576 = vmatprep.mubr.bf16.mxu0 0
    %1577 = vmatmul.mubr.bf16.gmra.mrb[0].mxu0 %v1539
    %v1578 = vpop.f32.mrb[0].mxu0
    %v1579 = vadd.f32 0.0, %v1578
    %v1580 = vpop.f32.mrb[0].mxu0
    %v1581 = vpop.f32.mrb[0].mxu0
    %v1582 = vpop.f32.mrb[0].mxu0
    %1583 = vdwg.mxu0
    %1585 = vrot.lane.b32.xlu0 %v1291, 32
    %v1586 = vpop.permute.xlu0 %1585
    %1589 = vrot.lane.b32.xlu0 %v1435, 64
    %v1590 = vpop.permute.xlu0 %1589
    %1593 = vrot.lane.b32.xlu0 %v1579, 96
    %v1594 = vpop.permute.xlu0 %1593
    %v1596 = vsel %vm444, %v1144, %v1586
    %v1597 = vsel %vm1002, %v1596, %v1590
    %v1598 = vsel %vm1004, %v1597, %v1594
    %v1599 = vld [vmem:[%s6] sm:$0xf]
    %v1600 = vld [vmem:[%s6 + $0x4] sm:$0xf]
    %v1601 = vld [vmem:[%s6 + $0x8] sm:$0xf]
    %v1602 = vld [vmem:[%s6 + $0xc] sm:$0xf]
    %v1603 = vld [vmem:[%s6 + $0x10] sm:$0xf]
    %v1604 = vld [vmem:[%s6 + $0x14] sm:$0xf]
    %v1605 = vld [vmem:[%s6 + $0x18] sm:$0xf]
    %v1606 = vld [vmem:[%s6 + $0x1c] sm:$0xf]
    %v1607 = vld [vmem:[%s6 + $0x20] sm:$0xf]
    %v1608 = vld [vmem:[%s6 + $0x24] sm:$0xf]
    %v1609 = vld [vmem:[%s6 + $0x28] sm:$0xf]
    %v1610 = vld [vmem:[%s6 + $0x2c] sm:$0xf]
    %v1611 = vld [vmem:[%s6 + $0x30] sm:$0xf]
    %v1612 = vld [vmem:[%s6 + $0x34] sm:$0xf]
    %v1613 = vld [vmem:[%s6 + $0x38] sm:$0xf]
    %v1614 = vld [vmem:[%s6 + $0x3c] sm:$0xf]
    %v1615 = vpack.c.bf16 %v1598, %v1005
    %v1616 = vld [vmem:[%s7] sm:$0x1]
    %v1618 = vlaneseq
    %v1619 = vshrl.u32 %v1618, 7
    %v1620 = vsub.s32 0, %v1619
    %v1621 = vrot.slane %v1616, %v1620
    %v1639 = vunpack.c.l.b16 %v1599
    %v1640 = vunpack.c.l.b16 %v1600
    %v1641 = vunpack.c.l.b16 %v1601
    %v1642 = vunpack.c.l.b16 %v1602
    %v1643 = vunpack.c.l.b16 %v1603
    %v1644 = vunpack.c.l.b16 %v1604
    %v1645 = vunpack.c.l.b16 %v1605
    %v1646 = vunpack.c.l.b16 %v1606
    %v1647 = vunpack.c.l.b16 %v1607
    %v1648 = vunpack.c.l.b16 %v1608
    %v1649 = vunpack.c.l.b16 %v1609
    %v1650 = vunpack.c.l.b16 %v1610
    %v1651 = vunpack.c.l.b16 %v1611
    %v1652 = vunpack.c.l.b16 %v1612
    %v1653 = vunpack.c.l.b16 %v1613
    %v1654 = vunpack.c.l.b16 %v1614
    %v1655 = vpack.c.b16 %v1640, %v1639
    %v1656 = vpack.c.b16 %v1642, %v1641
    %v1657 = vpack.c.b16 %v1644, %v1643
    %v1658 = vpack.c.b16 %v1646, %v1645
    %v1659 = vpack.c.b16 %v1648, %v1647
    %v1660 = vpack.c.b16 %v1650, %v1649
    %v1661 = vpack.c.b16 %v1652, %v1651
    %v1662 = vpack.c.b16 %v1654, %v1653
    %1671 = vmatprep.subr.bf16.mxu0 0
    %1672 = vmatpush1.bf16.msra.mxu0 %v1655
    %1673 = vmatprep.subr.bf16.mxu0 0
    %1674 = vmatpush1.bf16.msra.mxu0 %v1656
    %1675 = vmatprep.subr.bf16.mxu0 0
    %1676 = vmatpush1.bf16.msra.mxu0 %v1657
    %1677 = vmatprep.subr.bf16.mxu0 0
    %1678 = vmatpush1.bf16.msra.mxu0 %v1658
    %1679 = vmatprep.subr.bf16.mxu0 0
    %1680 = vmatpush1.bf16.msra.mxu0 %v1659
    %1681 = vmatprep.subr.bf16.mxu0 0
    %1682 = vmatpush1.bf16.msra.mxu0 %v1660
    %1683 = vmatprep.subr.bf16.mxu0 0
    %1684 = vmatpush1.bf16.msra.mxu0 %v1661
    %1685 = vmatprep.subr.bf16.mxu0 0
    %1686 = vmatpush1.bf16.msra.mxu0 %v1662
    %1687 = vmatprep.subr.bf16.mxu0 0
    %1688 = vmatpush1.bf16.msra.mxu0 0
    %1689 = vmatprep.subr.bf16.mxu0 0
    %1690 = vmatpush1.bf16.msra.mxu0 0
    %1691 = vmatprep.subr.bf16.mxu0 0
    %1692 = vmatpush1.bf16.msra.mxu0 0
    %1693 = vmatprep.subr.bf16.mxu0 0
    %1694 = vmatpush1.bf16.msra.mxu0 0
    %1695 = vmatprep.subr.bf16.mxu0 0
    %1696 = vmatpush1.bf16.msra.mxu0 0
    %1697 = vmatprep.subr.bf16.mxu0 0
    %1698 = vmatpush1.bf16.msra.mxu0 0
    %1699 = vmatprep.subr.bf16.mxu0 0
    %1700 = vmatpush1.bf16.msra.mxu0 0
    %1701 = vmatprep.subr.bf16.mxu0 0
    %1702 = vmatpush1.bf16.msra.mxu0 0
    %1703 = vmatprep.mubr.bf16.mxu0 0
    %1704 = vmatmul.mubr.bf16.gmra.mrb[0].mxu0 %v1615
    %v1705 = vpop.f32.mrb[0].mxu0
    %v1706 = vadd.f32 %v1621, %v1705
    %v1707 = vpop.f32.mrb[0].mxu0
    %v1708 = vpop.f32.mrb[0].mxu0
    %v1709 = vadd.f32 %v1621, %v1708
    %v1710 = vpop.f32.mrb[0].mxu0
    %1711 = vdwg.mxu0
    %v1712 = vadd.f32 %v1706, %v143
    %v1713 = vadd.f32 %v1709, %v144
    %v1714 = vld [vmem:[%s8] sm:$0x1]
    %v1715 = vld [vmem:[%s9] sm:$0x1]
    %1716 = vadd.xlane.f32.xlu0 %v1712
    %v1717 = vpop.xlane.xlu0 %1716
    %1718 = vadd.xlane.f32.xlu0 %v1713
    %v1719 = vpop.xlane.xlu0 %1718
    %v1720 = vmul.f32 %v1717, %v110
    %v1721 = vmul.f32 %v1719, %v110
    %v1722 = vsub.f32 %v1712, %v1720
    %v1723 = vsub.f32 %v1713, %v1721
    %v1724 = vmul.f32 %v1722, %v1722
    %v1725 = vmul.f32 %v1723, %v1723
    %1726 = vadd.xlane.f32.xlu0 %v1724
    %v1727 = vpop.xlane.xlu0 %1726
    %1728 = vadd.xlane.f32.xlu0 %v1725
    %v1729 = vpop.xlane.xlu0 %1728
    %v1730 = vmul.f32 %v1727, %v110
    %v1731 = vmul.f32 %v1729, %v110
    %v1732 = vadd.f32 %v1730, 1e-12
    %v1733 = vadd.f32 %v1731, 1e-12
    %v1734 = vrsqrt.pop %v1732
    %v1735 = vrsqrt.pop %v1733
    %v1736 = vmul.f32 %v1722, %v1734
    %v1737 = vmul.f32 %v1723, %v1735
    %v1739 = vlaneseq
    %v1740 = vshrl.u32 %v1739, 7
    %v1741 = vsub.s32 0, %v1740
    %v1742 = vrot.slane %v1714, %v1741
    %v1744 = vmul.f32 %v1736, %v1742
    %v1745 = vmul.f32 %v1737, %v1742
    %v1747 = vlaneseq
    %v1748 = vshrl.u32 %v1747, 7
    %v1749 = vsub.s32 0, %v1748
    %v1750 = vrot.slane %v1715, %v1749
    %v1752 = vadd.f32 %v1744, %v1750
    %v1753 = vadd.f32 %v1745, %v1750
    %v1754 = vld [vmem:[#allocation5] sm:$0xff]
    %v1755 = vld [vmem:[#allocation5 + $0x8] sm:$0xff]
    %v1756 = vld [vmem:[#allocation5 + $0x10] sm:$0xff]
    %v1757 = vld [vmem:[#allocation5 + $0x18] sm:$0xff]
    %v1758 = vld [vmem:[#allocation5 + $0x20] sm:$0xff]
    %v1759 = vld [vmem:[#allocation5 + $0x28] sm:$0xff]
    %v1760 = vld [vmem:[#allocation5 + $0x30] sm:$0xff]
    %v1761 = vld [vmem:[#allocation5 + $0x38] sm:$0xff]
    %v1762 = vld [vmem:[#allocation5 + $0x40] sm:$0xff]
    %v1763 = vld [vmem:[#allocation5 + $0x48] sm:$0xff]
    %v1764 = vld [vmem:[#allocation5 + $0x50] sm:$0xff]
    %v1765 = vld [vmem:[#allocation5 + $0x58] sm:$0xff]
    %v1766 = vld [vmem:[#allocation5 + $0x60] sm:$0xff]
    %v1767 = vld [vmem:[#allocation5 + $0x68] sm:$0xff]
    %v1768 = vld [vmem:[#allocation5 + $0x70] sm:$0xff]
    %v1769 = vld [vmem:[#allocation5 + $0x78] sm:$0xff]
    %v1770 = vpack.c.bf16 %v1753, %v1752
    %v1771 = vld [vmem:[%s11] sm:$0x3]
    %v1773 = vlaneseq
    %v1774 = vshrl.u32 %v1773, 7
    %v1775 = vsub.s32 0, %v1774
    %v1776 = vrot.slane %v1771, %v1775
    %v1777 = vlaneseq
    %v1778 = vshrl.u32 %v1777, 7
    %v1779 = vsub.s32 1, %v1778
    %v1780 = vrot.slane %v1771, %v1779
    %v1799 = vunpack.c.l.b16 %v1754
    %v1800 = vunpack.c.h.b16 %v1754
    %v1801 = vunpack.c.l.b16 %v1755
    %v1802 = vunpack.c.h.b16 %v1755
    %v1803 = vunpack.c.l.b16 %v1756
    %v1804 = vunpack.c.h.b16 %v1756
    %v1805 = vunpack.c.l.b16 %v1757
    %v1806 = vunpack.c.h.b16 %v1757
    %v1807 = vunpack.c.l.b16 %v1758
    %v1808 = vunpack.c.h.b16 %v1758
    %v1809 = vunpack.c.l.b16 %v1759
    %v1810 = vunpack.c.h.b16 %v1759
    %v1811 = vunpack.c.l.b16 %v1760
    %v1812 = vunpack.c.h.b16 %v1760
    %v1813 = vunpack.c.l.b16 %v1761
    %v1814 = vunpack.c.h.b16 %v1761
    %v1815 = vunpack.c.l.b16 %v1762
    %v1816 = vunpack.c.h.b16 %v1762
    %v1817 = vunpack.c.l.b16 %v1763
    %v1818 = vunpack.c.h.b16 %v1763
    %v1819 = vunpack.c.l.b16 %v1764
    %v1820 = vunpack.c.h.b16 %v1764
    %v1821 = vunpack.c.l.b16 %v1765
    %v1822 = vunpack.c.h.b16 %v1765
    %v1823 = vunpack.c.l.b16 %v1766
    %v1824 = vunpack.c.h.b16 %v1766
    %v1825 = vunpack.c.l.b16 %v1767
    %v1826 = vunpack.c.h.b16 %v1767
    %v1827 = vunpack.c.l.b16 %v1768
    %v1828 = vunpack.c.h.b16 %v1768
    %v1829 = vunpack.c.l.b16 %v1769
    %v1830 = vunpack.c.h.b16 %v1769
    %v1831 = vpack.c.b16 %v1801, %v1799
    %v1832 = vpack.c.b16 %v1802, %v1800
    %v1833 = vpack.c.b16 %v1805, %v1803
    %v1834 = vpack.c.b16 %v1806, %v1804
    %v1835 = vpack.c.b16 %v1809, %v1807
    %v1836 = vpack.c.b16 %v1810, %v1808
    %v1837 = vpack.c.b16 %v1813, %v1811
    %v1838 = vpack.c.b16 %v1814, %v1812
    %v1839 = vpack.c.b16 %v1817, %v1815
    %v1840 = vpack.c.b16 %v1818, %v1816
    %v1841 = vpack.c.b16 %v1821, %v1819
    %v1842 = vpack.c.b16 %v1822, %v1820
    %v1843 = vpack.c.b16 %v1825, %v1823
    %v1844 = vpack.c.b16 %v1826, %v1824
    %v1845 = vpack.c.b16 %v1829, %v1827
    %v1846 = vpack.c.b16 %v1830, %v1828
    %1863 = vmatprep.subr.bf16.mxu0 %v1832
    %1864 = vmatpush1.bf16.msra.mxu0 %v1831
    %1865 = vmatprep.subr.bf16.mxu0 %v1834
    %1866 = vmatpush1.bf16.msra.mxu0 %v1833
    %1867 = vmatprep.subr.bf16.mxu0 %v1836
    %1868 = vmatpush1.bf16.msra.mxu0 %v1835
    %1869 = vmatprep.subr.bf16.mxu0 %v1838
    %1870 = vmatpush1.bf16.msra.mxu0 %v1837
    %1871 = vmatprep.subr.bf16.mxu0 %v1840
    %1872 = vmatpush1.bf16.msra.mxu0 %v1839
    %1873 = vmatprep.subr.bf16.mxu0 %v1842
    %1874 = vmatpush1.bf16.msra.mxu0 %v1841
    %1875 = vmatprep.subr.bf16.mxu0 %v1844
    %1876 = vmatpush1.bf16.msra.mxu0 %v1843
    %1877 = vmatprep.subr.bf16.mxu0 %v1846
    %1878 = vmatpush1.bf16.msra.mxu0 %v1845
    %1879 = vmatprep.subr.bf16.mxu0 0
    %1880 = vmatpush1.bf16.msra.mxu0 0
    %1881 = vmatprep.subr.bf16.mxu0 0
    %1882 = vmatpush1.bf16.msra.mxu0 0
    %1883 = vmatprep.subr.bf16.mxu0 0
    %1884 = vmatpush1.bf16.msra.mxu0 0
    %1885 = vmatprep.subr.bf16.mxu0 0
    %1886 = vmatpush1.bf16.msra.mxu0 0
    %1887 = vmatprep.subr.bf16.mxu0 0
    %1888 = vmatpush1.bf16.msra.mxu0 0
    %1889 = vmatprep.subr.bf16.mxu0 0
    %1890 = vmatpush1.bf16.msra.mxu0 0
    %1891 = vmatprep.subr.bf16.mxu0 0
    %1892 = vmatpush1.bf16.msra.mxu0 0
    %1893 = vmatprep.subr.bf16.mxu0 0
    %1894 = vmatpush1.bf16.msra.mxu0 0
    %1895 = vmatprep.mubr.bf16.mxu0 0
    %1896 = vmatmul.mubr.bf16.gmra.mrb[0].mxu0 %v1770
    %v1897 = vpop.f32.mrb[0].mxu0
    %v1898 = vadd.f32 %v1776, %v1897
    %v1899 = vpop.f32.mrb[0].mxu0
    %v1900 = vadd.f32 %v1780, %v1899
    %v1901 = vpop.f32.mrb[0].mxu0
    %v1902 = vadd.f32 %v1776, %v1901
    %v1903 = vpop.f32.mrb[0].mxu0
    %v1904 = vadd.f32 %v1780, %v1903
    %1905 = vdwg.mxu0
    %v1906 = vmul.f32 %v1898, 0.5
    %v1907 = vmul.f32 %v1900, 0.5
    %v1908 = vmul.f32 %v1902, 0.5
    %v1909 = vmul.f32 %v1904, 0.5
    %v1910 = vmul.f32 %v1898, 0.044715
    %v1911 = vmul.f32 %v1900, 0.044715
    %v1912 = vmul.f32 %v1902, 0.044715
    %v1913 = vmul.f32 %v1904, 0.044715
    %v1914 = vmul.f32 %v1910, %v1898
    %v1915 = vmul.f32 %v1911, %v1900
    %v1916 = vmul.f32 %v1912, %v1902
    %v1917 = vmul.f32 %v1913, %v1904
    %v1918 = vmul.f32 %v1914, %v1898
    %v1919 = vmul.f32 %v1915, %v1900
    %v1920 = vmul.f32 %v1916, %v1902
    %v1921 = vmul.f32 %v1917, %v1904
    %v1922 = vadd.f32 %v1898, %v1918
    %v1923 = vadd.f32 %v1900, %v1919
    %v1924 = vadd.f32 %v1902, %v1920
    %v1925 = vadd.f32 %v1904, %v1921
    %v1926 = vmul.f32 %v1922, 0.7978846
    %v1927 = vmul.f32 %v1923, 0.7978846
    %v1928 = vmul.f32 %v1924, 0.7978846
    %v1929 = vmul.f32 %v1925, 0.7978846
    %v1930 = vtanh.pop %v1926
    %v1931 = vtanh.pop %v1927
    %v1932 = vtanh.pop %v1928
    %v1933 = vtanh.pop %v1929
    %v1934 = vadd.f32 %v1930, 1.0
    %v1935 = vadd.f32 %v1931, 1.0
    %v1936 = vadd.f32 %v1932, 1.0
    %v1937 = vadd.f32 %v1933, 1.0
    %v1938 = vmul.f32 %v1906, %v1934
    %v1939 = vmul.f32 %v1907, %v1935
    %v1940 = vmul.f32 %v1908, %v1936
    %v1941 = vmul.f32 %v1909, %v1937
    %v1942 = vld [vmem:[#allocation7] sm:$0xf]
    %v1943 = vld [vmem:[#allocation7 + $0x4] sm:$0xf]
    %v1944 = vld [vmem:[#allocation7 + $0x8] sm:$0xf]
    %v1945 = vld [vmem:[#allocation7 + $0xc] sm:$0xf]
    %v1946 = vld [vmem:[#allocation7 + $0x10] sm:$0xf]
    %v1947 = vld [vmem:[#allocation7 + $0x14] sm:$0xf]
    %v1948 = vld [vmem:[#allocation7 + $0x18] sm:$0xf]
    %v1949 = vld [vmem:[#allocation7 + $0x1c] sm:$0xf]
    %v1950 = vld [vmem:[#allocation7 + $0x20] sm:$0xf]
    %v1951 = vld [vmem:[#allocation7 + $0x24] sm:$0xf]
    %v1952 = vld [vmem:[#allocation7 + $0x28] sm:$0xf]
    %v1953 = vld [vmem:[#allocation7 + $0x2c] sm:$0xf]
    %v1954 = vld [vmem:[#allocation7 + $0x30] sm:$0xf]
    %v1955 = vld [vmem:[#allocation7 + $0x34] sm:$0xf]
    %v1956 = vld [vmem:[#allocation7 + $0x38] sm:$0xf]
    %v1957 = vld [vmem:[#allocation7 + $0x3c] sm:$0xf]
    %v1958 = vld [vmem:[#allocation7 + $0x40] sm:$0xf]
    %v1959 = vld [vmem:[#allocation7 + $0x44] sm:$0xf]
    %v1960 = vld [vmem:[#allocation7 + $0x48] sm:$0xf]
    %v1961 = vld [vmem:[#allocation7 + $0x4c] sm:$0xf]
    %v1962 = vld [vmem:[#allocation7 + $0x50] sm:$0xf]
    %v1963 = vld [vmem:[#allocation7 + $0x54] sm:$0xf]
    %v1964 = vld [vmem:[#allocation7 + $0x58] sm:$0xf]
    %v1965 = vld [vmem:[#allocation7 + $0x5c] sm:$0xf]
    %v1966 = vld [vmem:[#allocation7 + $0x60] sm:$0xf]
    %v1967 = vld [vmem:[#allocation7 + $0x64] sm:$0xf]
    %v1968 = vld [vmem:[#allocation7 + $0x68] sm:$0xf]
    %v1969 = vld [vmem:[#allocation7 + $0x6c] sm:$0xf]
    %v1970 = vld [vmem:[#allocation7 + $0x70] sm:$0xf]
    %v1971 = vld [vmem:[#allocation7 + $0x74] sm:$0xf]
    %v1972 = vld [vmem:[#allocation7 + $0x78] sm:$0xf]
    %v1973 = vld [vmem:[#allocation7 + $0x7c] sm:$0xf]
    %v1974 = vpack.c.bf16 %v1940, %v1938
    %v1975 = vpack.c.bf16 %v1941, %v1939
    %v1976 = vld [vmem:[%s13] sm:$0x1]
    %v1978 = vlaneseq
    %v1979 = vshrl.u32 %v1978, 7
    %v1980 = vsub.s32 0, %v1979
    %v1981 = vrot.slane %v1976, %v1980
    %v2015 = vunpack.c.l.b16 %v1942
    %v2016 = vunpack.c.l.b16 %v1943
    %v2017 = vunpack.c.l.b16 %v1944
    %v2018 = vunpack.c.l.b16 %v1945
    %v2019 = vunpack.c.l.b16 %v1946
    %v2020 = vunpack.c.l.b16 %v1947
    %v2021 = vunpack.c.l.b16 %v1948
    %v2022 = vunpack.c.l.b16 %v1949
    %v2023 = vunpack.c.l.b16 %v1950
    %v2024 = vunpack.c.l.b16 %v1951
    %v2025 = vunpack.c.l.b16 %v1952
    %v2026 = vunpack.c.l.b16 %v1953
    %v2027 = vunpack.c.l.b16 %v1954
    %v2028 = vunpack.c.l.b16 %v1955
    %v2029 = vunpack.c.l.b16 %v1956
    %v2030 = vunpack.c.l.b16 %v1957
    %v2031 = vunpack.c.l.b16 %v1958
    %v2032 = vunpack.c.l.b16 %v1959
    %v2033 = vunpack.c.l.b16 %v1960
    %v2034 = vunpack.c.l.b16 %v1961
    %v2035 = vunpack.c.l.b16 %v1962
    %v2036 = vunpack.c.l.b16 %v1963
    %v2037 = vunpack.c.l.b16 %v1964
    %v2038 = vunpack.c.l.b16 %v1965
    %v2039 = vunpack.c.l.b16 %v1966
    %v2040 = vunpack.c.l.b16 %v1967
    %v2041 = vunpack.c.l.b16 %v1968
    %v2042 = vunpack.c.l.b16 %v1969
    %v2043 = vunpack.c.l.b16 %v1970
    %v2044 = vunpack.c.l.b16 %v1971
    %v2045 = vunpack.c.l.b16 %v1972
    %v2046 = vunpack.c.l.b16 %v1973
    %v2047 = vpack.c.b16 %v2016, %v2015
    %v2048 = vpack.c.b16 %v2018, %v2017
    %v2049 = vpack.c.b16 %v2020, %v2019
    %v2050 = vpack.c.b16 %v2022, %v2021
    %v2051 = vpack.c.b16 %v2024, %v2023
    %v2052 = vpack.c.b16 %v2026, %v2025
    %v2053 = vpack.c.b16 %v2028, %v2027
    %v2054 = vpack.c.b16 %v2030, %v2029
    %v2055 = vpack.c.b16 %v2032, %v2031
    %v2056 = vpack.c.b16 %v2034, %v2033
    %v2057 = vpack.c.b16 %v2036, %v2035
    %v2058 = vpack.c.b16 %v2038, %v2037
    %v2059 = vpack.c.b16 %v2040, %v2039
    %v2060 = vpack.c.b16 %v2042, %v2041
    %v2061 = vpack.c.b16 %v2044, %v2043
    %v2062 = vpack.c.b16 %v2046, %v2045
    %2079 = vmatprep.subr.bf16.mxu0 0
    %2080 = vmatpush1.bf16.msra.mxu0 %v2047
    %2081 = vmatprep.subr.bf16.mxu0 0
    %2082 = vmatpush1.bf16.msra.mxu0 %v2048
    %2083 = vmatprep.subr.bf16.mxu0 0
    %2084 = vmatpush1.bf16.msra.mxu0 %v2049
    %2085 = vmatprep.subr.bf16.mxu0 0
    %2086 = vmatpush1.bf16.msra.mxu0 %v2050
    %2087 = vmatprep.subr.bf16.mxu0 0
    %2088 = vmatpush1.bf16.msra.mxu0 %v2051
    %2089 = vmatprep.subr.bf16.mxu0 0
    %2090 = vmatpush1.bf16.msra.mxu0 %v2052
    %2091 = vmatprep.subr.bf16.mxu0 0
    %2092 = vmatpush1.bf16.msra.mxu0 %v2053
    %2093 = vmatprep.subr.bf16.mxu0 0
    %2094 = vmatpush1.bf16.msra.mxu0 %v2054
    %2095 = vmatprep.subr.bf16.mxu0 0
    %2096 = vmatpush1.bf16.msra.mxu0 %v2055
    %2097 = vmatprep.subr.bf16.mxu0 0
    %2098 = vmatpush1.bf16.msra.mxu0 %v2056
    %2099 = vmatprep.subr.bf16.mxu0 0
    %2100 = vmatpush1.bf16.msra.mxu0 %v2057
    %2101 = vmatprep.subr.bf16.mxu0 0
    %2102 = vmatpush1.bf16.msra.mxu0 %v2058
    %2103 = vmatprep.subr.bf16.mxu0 0
    %2104 = vmatpush1.bf16.msra.mxu0 %v2059
    %2105 = vmatprep.subr.bf16.mxu0 0
    %2106 = vmatpush1.bf16.msra.mxu0 %v2060
    %2107 = vmatprep.subr.bf16.mxu0 0
    %2108 = vmatpush1.bf16.msra.mxu0 %v2061
    %2109 = vmatprep.subr.bf16.mxu0 0
    %2110 = vmatpush1.bf16.msra.mxu0 %v2062
    %2111 = vmatprep.mubr.bf16.mxu0 %v1975
    %2112 = vmatmul.mubr.bf16.gmra.mrb[0].mxu0 %v1974
    %v2113 = vpop.f32.mrb[0].mxu0
    %v2114 = vadd.f32 %v1981, %v2113
    %v2115 = vpop.f32.mrb[0].mxu0
    %v2116 = vpop.f32.mrb[0].mxu0
    %v2117 = vadd.f32 %v1981, %v2116
    %v2118 = vpop.f32.mrb[0].mxu0
    %2119 = vdwg.mxu0
    %v2120 = vadd.f32 %v2114, %v1752
    %v2121 = vadd.f32 %v2117, %v1753
    %v2122 = vld [vmem:[%s14] sm:$0x1]
    %v2123 = vld [vmem:[%s15] sm:$0x1]
    %2124 = vadd.xlane.f32.xlu0 %v2120
    %v2125 = vpop.xlane.xlu0 %2124
    %2126 = vadd.xlane.f32.xlu0 %v2121
    %v2127 = vpop.xlane.xlu0 %2126
    %v2128 = vmul.f32 %v2125, %v110
    %v2129 = vmul.f32 %v2127, %v110
    %v2130 = vsub.f32 %v2120, %v2128
    %v2131 = vsub.f32 %v2121, %v2129
    %v2132 = vmul.f32 %v2130, %v2130
    %v2133 = vmul.f32 %v2131, %v2131
    %2134 = vadd.xlane.f32.xlu0 %v2132
    %v2135 = vpop.xlane.xlu0 %2134
    %2136 = vadd.xlane.f32.xlu0 %v2133
    %v2137 = vpop.xlane.xlu0 %2136
    %v2138 = vmul.f32 %v2135, %v110
    %v2139 = vmul.f32 %v2137, %v110
    %v2140 = vadd.f32 %v2138, 1e-12
    %v2141 = vadd.f32 %v2139, 1e-12
    %v2142 = vrsqrt.pop %v2140
    %v2143 = vrsqrt.pop %v2141
    %v2144 = vmul.f32 %v2130, %v2142
    %v2145 = vmul.f32 %v2131, %v2143
    %v2147 = vlaneseq
    %v2148 = vshrl.u32 %v2147, 7
    %v2149 = vsub.s32 0, %v2148
    %v2150 = vrot.slane %v2122, %v2149
    %v2152 = vmul.f32 %v2144, %v2150
    %v2153 = vmul.f32 %v2145, %v2150
    %v2155 = vlaneseq
    %v2156 = vshrl.u32 %v2155, 7
    %v2157 = vsub.s32 0, %v2156
    %v2158 = vrot.slane %v2123, %v2157
    %v2160 = vadd.f32 %v2152, %v2158
    %v2161 = vadd.f32 %v2153, %v2158
    %s2162 = scalar_lea.vmem [#allocation2], 192
    %v2163 = vld [vmem:[%s2162] sm:$0xff]
    %v2164 = vld [vmem:[%s2162 + $0x8] sm:$0xf]
    %v2165 = vld [vmem:[%s2162 + $0xc] sm:$0xff]
    %v2166 = vld [vmem:[%s2162 + $0x14] sm:$0xf]
    %v2167 = vld [vmem:[%s2162 + $0x18] sm:$0xff]
    %v2168 = vld [vmem:[%s2162 + $0x20] sm:$0xf]
    %v2169 = vld [vmem:[%s2162 + $0x24] sm:$0xff]
    %v2170 = vld [vmem:[%s2162 + $0x2c] sm:$0xf]
    %v2171 = vld [vmem:[%s2162 + $0x30] sm:$0xff]
    %v2172 = vld [vmem:[%s2162 + $0x38] sm:$0xf]
    %v2173 = vld [vmem:[%s2162 + $0x3c] sm:$0xff]
    %v2174 = vld [vmem:[%s2162 + $0x44] sm:$0xf]
    %v2175 = vld [vmem:[%s2162 + $0x48] sm:$0xff]
    %v2176 = vld [vmem:[%s2162 + $0x50] sm:$0xf]
    %v2177 = vld [vmem:[%s2162 + $0x54] sm:$0xff]
    %v2178 = vld [vmem:[%s2162 + $0x5c] sm:$0xf]
    %v2179 = vld [vmem:[%s2162 + $0x60] sm:$0xff]
    %v2180 = vld [vmem:[%s2162 + $0x68] sm:$0xf]
    %v2181 = vld [vmem:[%s2162 + $0x6c] sm:$0xff]
    %v2182 = vld [vmem:[%s2162 + $0x74] sm:$0xf]
    %v2183 = vld [vmem:[%s2162 + $0x78] sm:$0xff]
    %v2184 = vld [vmem:[%s2162 + $0x80] sm:$0xf]
    %v2185 = vld [vmem:[%s2162 + $0x84] sm:$0xff]
    %v2186 = vld [vmem:[%s2162 + $0x8c] sm:$0xf]
    %v2187 = vld [vmem:[%s2162 + $0x90] sm:$0xff]
    %v2188 = vld [vmem:[%s2162 + $0x98] sm:$0xf]
    %v2189 = vld [vmem:[%s2162 + $0x9c] sm:$0xff]
    %v2190 = vld [vmem:[%s2162 + $0xa4] sm:$0xf]
    %v2191 = vld [vmem:[%s2162 + $0xa8] sm:$0xff]
    %v2192 = vld [vmem:[%s2162 + $0xb0] sm:$0xf]
    %v2193 = vld [vmem:[%s2162 + $0xb4] sm:$0xff]
    %v2194 = vld [vmem:[%s2162 + $0xbc] sm:$0xf]
    %v2195 = vpack.c.bf16 %v2161, %v2160
    %s2196 = scalar_lea.vmem %s5, 3
    %v2197 = vld [vmem:[%s2196] sm:$0x7]
    %v2199 = vlaneseq
    %v2200 = vshrl.u32 %v2199, 7
    %v2201 = vsub.s32 0, %v2200
    %v2202 = vrot.slane %v2197, %v2201
    %v2203 = vlaneseq
    %v2204 = vshrl.u32 %v2203, 7
    %v2205 = vsub.s32 1, %v2204
    %v2206 = vrot.slane %v2197, %v2205
    %v2207 = vlaneseq
    %v2208 = vshrl.u32 %v2207, 7
    %v2209 = vsub.s32 2, %v2208
    %v2210 = vrot.slane %v2197, %v2209
    %v2246 = vunpack.c.l.b16 %v2163
    %v2247 = vunpack.c.h.b16 %v2163
    %v2248 = vunpack.c.l.b16 %v2164
    %v2249 = vunpack.c.l.b16 %v2165
    %v2250 = vunpack.c.h.b16 %v2165
    %v2251 = vunpack.c.l.b16 %v2166
    %v2252 = vunpack.c.l.b16 %v2167
    %v2253 = vunpack.c.h.b16 %v2167
    %v2254 = vunpack.c.l.b16 %v2168
    %v2255 = vunpack.c.l.b16 %v2169
    %v2256 = vunpack.c.h.b16 %v2169
    %v2257 = vunpack.c.l.b16 %v2170
    %v2258 = vunpack.c.l.b16 %v2171
    %v2259 = vunpack.c.h.b16 %v2171
    %v2260 = vunpack.c.l.b16 %v2172
    %v2261 = vunpack.c.l.b16 %v2173
    %v2262 = vunpack.c.h.b16 %v2173
    %v2263 = vunpack.c.l.b16 %v2174
    %v2264 = vunpack.c.l.b16 %v2175
    %v2265 = vunpack.c.h.b16 %v2175
    %v2266 = vunpack.c.l.b16 %v2176
    %v2267 = vunpack.c.l.b16 %v2177
    %v2268 = vunpack.c.h.b16 %v2177
    %v2269 = vunpack.c.l.b16 %v2178
    %v2270 = vunpack.c.l.b16 %v2179
    %v2271 = vunpack.c.h.b16 %v2179
    %v2272 = vunpack.c.l.b16 %v2180
    %v2273 = vunpack.c.l.b16 %v2181
    %v2274 = vunpack.c.h.b16 %v2181
    %v2275 = vunpack.c.l.b16 %v2182
    %v2276 = vunpack.c.l.b16 %v2183
    %v2277 = vunpack.c.h.b16 %v2183
    %v2278 = vunpack.c.l.b16 %v2184
    %v2279 = vunpack.c.l.b16 %v2185
    %v2280 = vunpack.c.h.b16 %v2185
    %v2281 = vunpack.c.l.b16 %v2186
    %v2282 = vunpack.c.l.b16 %v2187
    %v2283 = vunpack.c.h.b16 %v2187
    %v2284 = vunpack.c.l.b16 %v2188
    %v2285 = vunpack.c.l.b16 %v2189
    %v2286 = vunpack.c.h.b16 %v2189
    %v2287 = vunpack.c.l.b16 %v2190
    %v2288 = vunpack.c.l.b16 %v2191
    %v2289 = vunpack.c.h.b16 %v2191
    %v2290 = vunpack.c.l.b16 %v2192
    %v2291 = vunpack.c.l.b16 %v2193
    %v2292 = vunpack.c.h.b16 %v2193
    %v2293 = vunpack.c.l.b16 %v2194
    %v2294 = vpack.c.b16 %v2249, %v2246
    %v2295 = vpack.c.b16 %v2250, %v2247
    %v2296 = vpack.c.b16 %v2251, %v2248
    %v2297 = vpack.c.b16 %v2255, %v2252
    %v2298 = vpack.c.b16 %v2256, %v2253
    %v2299 = vpack.c.b16 %v2257, %v2254
    %v2300 = vpack.c.b16 %v2261, %v2258
    %v2301 = vpack.c.b16 %v2262, %v2259
    %v2302 = vpack.c.b16 %v2263, %v2260
    %v2303 = vpack.c.b16 %v2267, %v2264
    %v2304 = vpack.c.b16 %v2268, %v2265
    %v2305 = vpack.c.b16 %v2269, %v2266
    %v2306 = vpack.c.b16 %v2273, %v2270
    %v2307 = vpack.c.b16 %v2274, %v2271
    %v2308 = vpack.c.b16 %v2275, %v2272
    %v2309 = vpack.c.b16 %v2279, %v2276
    %v2310 = vpack.c.b16 %v2280, %v2277
    %v2311 = vpack.c.b16 %v2281, %v2278
    %v2312 = vpack.c.b16 %v2285, %v2282
    %v2313 = vpack.c.b16 %v2286, %v2283
    %v2314 = vpack.c.b16 %v2287, %v2284
    %v2315 = vpack.c.b16 %v2291, %v2288
    %v2316 = vpack.c.b16 %v2292, %v2289
    %v2317 = vpack.c.b16 %v2293, %v2290
    %2342 = vmatprep.subr.bf16.mxu0 %v2295
    %2343 = vmatpush1.bf16.msra.mxu0 %v2294
    %2344 = vmatprep.subr.bf16.mxu0 %v2298
    %2345 = vmatpush1.bf16.msra.mxu0 %v2297
    %2346 = vmatprep.subr.bf16.mxu0 %v2301
    %2347 = vmatpush1.bf16.msra.mxu0 %v2300
    %2348 = vmatprep.subr.bf16.mxu0 %v2304
    %2349 = vmatpush1.bf16.msra.mxu0 %v2303
    %2350 = vmatprep.subr.bf16.mxu0 %v2307
    %2351 = vmatpush1.bf16.msra.mxu0 %v2306
    %2352 = vmatprep.subr.bf16.mxu0 %v2310
    %2353 = vmatpush1.bf16.msra.mxu0 %v2309
    %2354 = vmatprep.subr.bf16.mxu0 %v2313
    %2355 = vmatpush1.bf16.msra.mxu0 %v2312
    %2356 = vmatprep.subr.bf16.mxu0 %v2316
    %2357 = vmatpush1.bf16.msra.mxu0 %v2315
    %2358 = vmatprep.subr.bf16.mxu0 0
    %2359 = vmatpush1.bf16.msra.mxu0 0
    %2360 = vmatprep.subr.bf16.mxu0 0
    %2361 = vmatpush1.bf16.msra.mxu0 0
    %2362 = vmatprep.subr.bf16.mxu0 0
    %2363 = vmatpush1.bf16.msra.mxu0 0
    %2364 = vmatprep.subr.bf16.mxu0 0
    %2365 = vmatpush1.bf16.msra.mxu0 0
    %2366 = vmatprep.subr.bf16.mxu0 0
    %2367 = vmatpush1.bf16.msra.mxu0 0
    %2368 = vmatprep.subr.bf16.mxu0 0
    %2369 = vmatpush1.bf16.msra.mxu0 0
    %2370 = vmatprep.subr.bf16.mxu0 0
    %2371 = vmatpush1.bf16.msra.mxu0 0
    %2372 = vmatprep.subr.bf16.mxu0 0
    %2373 = vmatpush1.bf16.msra.mxu0 0
    %2374 = vmatprep.mubr.bf16.mxu0 0
    %2375 = vmatmul.mubr.bf16.gmra.mrb[0].mxu0 %v2195
    %v2376 = vpop.f32.mrb[0].mxu0
    %v2377 = vadd.f32 %v2202, %v2376
    %v2378 = vpop.f32.mrb[0].mxu0
    %v2379 = vadd.f32 %v2206, %v2378
    %v2380 = vpop.f32.mrb[0].mxu0
    %v2381 = vadd.f32 %v2202, %v2380
    %v2382 = vpop.f32.mrb[0].mxu0
    %v2383 = vadd.f32 %v2206, %v2382
    %2384 = vdwg.mxu0
    %2385 = vmatprep.subr.bf16.mxu0 0
    %2386 = vmatpush1.bf16.msra.mxu0 %v2296
    %2387 = vmatprep.subr.bf16.mxu0 0
    %2388 = vmatpush1.bf16.msra.mxu0 %v2299
    %2389 = vmatprep.subr.bf16.mxu0 0
    %2390 = vmatpush1.bf16.msra.mxu0 %v2302
    %2391 = vmatprep.subr.bf16.mxu0 0
    %2392 = vmatpush1.bf16.msra.mxu0 %v2305
    %2393 = vmatprep.subr.bf16.mxu0 0
    %2394 = vmatpush1.bf16.msra.mxu0 %v2308
    %2395 = vmatprep.subr.bf16.mxu0 0
    %2396 = vmatpush1.bf16.msra.mxu0 %v2311
    %2397 = vmatprep.subr.bf16.mxu0 0
    %2398 = vmatpush1.bf16.msra.mxu0 %v2314
    %2399 = vmatprep.subr.bf16.mxu0 0
    %2400 = vmatpush1.bf16.msra.mxu0 %v2317
    %2401 = vmatprep.subr.bf16.mxu0 0
    %2402 = vmatpush1.bf16.msra.mxu0 0
    %2403 = vmatprep.subr.bf16.mxu0 0
    %2404 = vmatpush1.bf16.msra.mxu0 0
    %2405 = vmatprep.subr.bf16.mxu0 0
    %2406 = vmatpush1.bf16.msra.mxu0 0
    %2407 = vmatprep.subr.bf16.mxu0 0
    %2408 = vmatpush1.bf16.msra.mxu0 0
    %2409 = vmatprep.subr.bf16.mxu0 0
    %2410 = vmatpush1.bf16.msra.mxu0 0
    %2411 = vmatprep.subr.bf16.mxu0 0
    %2412 = vmatpush1.bf16.msra.mxu0 0
    %2413 = vmatprep.subr.bf16.mxu0 0
    %2414 = vmatpush1.bf16.msra.mxu0 0
    %2415 = vmatprep.subr.bf16.mxu0 0
    %2416 = vmatpush1.bf16.msra.mxu0 0
    %2417 = vmatprep.mubr.bf16.mxu0 0
    %2418 = vmatmul.mubr.bf16.gmra.mrb[0].mxu0 %v2195
    %v2419 = vpop.f32.mrb[0].mxu0
    %v2420 = vadd.f32 %v2210, %v2419
    %v2421 = vpop.f32.mrb[0].mxu0
    %v2422 = vpop.f32.mrb[0].mxu0
    %v2423 = vadd.f32 %v2210, %v2422
    %v2424 = vpop.f32.mrb[0].mxu0
    %2425 = vdwg.mxu0
    %2426 = vxpose.xlu0.b32.start [1/16] %v2379, 128
    %2427 = vxpose.xlu0.b32.cont [2/16] 0.0, 128
    %2428 = vxpose.xlu0.b32.cont [3/16] 0.0, 128
    %2429 = vxpose.xlu0.b32.cont [4/16] 0.0, 128
    %2430 = vxpose.xlu0.b32.cont [5/16] 0.0, 128
    %2431 = vxpose.xlu0.b32.cont [6/16] 0.0, 128
    %2432 = vxpose.xlu0.b32.cont [7/16] 0.0, 128
    %2433 = vxpose.xlu0.b32.cont [8/16] 0.0, 128
    %2434 = vxpose.xlu0.b32.cont [9/16] 0.0, 128
    %2435 = vxpose.xlu0.b32.cont [10/16] 0.0, 128
    %2436 = vxpose.xlu0.b32.cont [11/16] 0.0, 128
    %2437 = vxpose.xlu0.b32.cont [12/16] 0.0, 128
    %2438 = vxpose.xlu0.b32.cont [13/16] 0.0, 128
    %2439 = vxpose.xlu0.b32.cont [14/16] 0.0, 128
    %2440 = vxpose.xlu0.b32.cont [15/16] 0.0, 128
    %2441 = vxpose.xlu0.b32.end [16/16] 0.0, 128
    %v2442 = vpop.trf.xlu0
    %v2443 = vpop.trf.xlu0
    %v2444 = vpop.trf.xlu0
    %v2445 = vpop.trf.xlu0
    %v2446 = vpop.trf.xlu0
    %v2447 = vpop.trf.xlu0
    %v2448 = vpop.trf.xlu0
    %v2449 = vpop.trf.xlu0
    %v2450 = vpop.trf.xlu0
    %v2451 = vpop.trf.xlu0
    %v2452 = vpop.trf.xlu0
    %v2453 = vpop.trf.xlu0
    %v2454 = vpop.trf.xlu0
    %v2455 = vpop.trf.xlu0
    %v2456 = vpop.trf.xlu0
    %v2457 = vpop.trf.xlu0
    %v2458 = vpack.c.bf16 %v2420, %v2420
    %v2459 = vpack.c.bf16 %v2377, %v2377
    %v2460 = vpack.c.bf16 %v2443, %v2442
    %v2461 = vpack.c.bf16 %v2445, %v2444
    %v2463 = vsel %vm444, %v2459, 0
    %2465 = vmatprep.subr.bf16.mxu0 0
    %2466 = vmatpush1.bf16.msra.mxu0 %v2460
    %2467 = vmatprep.subr.bf16.mxu0 0
    %2468 = vmatpush1.bf16.msra.mxu0 %v2461
    %2469 = vmatprep.subr.bf16.mxu0 0
    %2470 = vmatpush1.bf16.msra.mxu0 0
    %2471 = vmatprep.subr.bf16.mxu0 0
    %2472 = vmatpush1.bf16.msra.mxu0 0
    %2473 = vmatprep.subr.bf16.mxu0 0
    %2474 = vmatpush1.bf16.msra.mxu0 0
    %2475 = vmatprep.subr.bf16.mxu0 0
    %2476 = vmatpush1.bf16.msra.mxu0 0
    %2477 = vmatprep.subr.bf16.mxu0 0
    %2478 = vmatpush1.bf16.msra.mxu0 0
    %2479 = vmatprep.subr.bf16.mxu0 0
    %2480 = vmatpush1.bf16.msra.mxu0 0
    %2481 = vmatprep.subr.bf16.mxu0 0
    %2482 = vmatpush1.bf16.msra.mxu0 0
    %2483 = vmatprep.subr.bf16.mxu0 0
    %2484 = vmatpush1.bf16.msra.mxu0 0
    %2485 = vmatprep.subr.bf16.mxu0 0
    %2486 = vmatpush1.bf16.msra.mxu0 0
    %2487 = vmatprep.subr.bf16.mxu0 0
    %2488 = vmatpush1.bf16.msra.mxu0 0
    %2489 = vmatprep.subr.bf16.mxu0 0
    %2490 = vmatpush1.bf16.msra.mxu0 0
    %2491 = vmatprep.subr.bf16.mxu0 0
    %2492 = vmatpush1.bf16.msra.mxu0 0
    %2493 = vmatprep.subr.bf16.mxu0 0
    %2494 = vmatpush1.bf16.msra.mxu0 0
    %2495 = vmatprep.subr.bf16.mxu0 0
    %2496 = vmatpush1.bf16.msra.mxu0 0
    %2497 = vmatprep.mubr.bf16.mxu0 0
    %2498 = vmatmul.mubr.bf16.gmra.mrb[0].mxu0 %v2463
    %v2499 = vpop.f32.mrb[0].mxu0
    %v2500 = vadd.f32 0.0, %v2499
    %v2501 = vpop.f32.mrb[0].mxu0
    %v2502 = vpop.f32.mrb[0].mxu0
    %v2503 = vpop.f32.mrb[0].mxu0
    %2504 = vdwg.mxu0
    %v2505 = vmul.f32 %v2500, 0.17677669
    %v2506 = vadd.f32 %v2505, %v492
    %v2507 = vsel %vm494, %v2506, -inf
    %2508 = vmax.xlane.f32.xlu0 %v2507
    %v2509 = vpop.xlane.xlu0 %2508
    %v2510 = vsub.f32 %v2506, %v2509
    %v2511 = vmul.f32 %v2510, 1.442695
    %v2512 = vpow.pop %v2511
    %v2513 = vsel %vm494, %v2512, 0.0
    %2514 = vadd.xlane.f32.xlu0 %v2513
    %v2515 = vpop.xlane.xlu0 %2514
    %v2516 = vrcp.pop %v2515
    %v2517 = vmul.f32 %v2512, %v2516
    %v2518 = vpack.c.bf16 %v2517, %v2517
    %v2520 = vsel %vm494, %v2518, 0
    %v2523 = vsel %vm510, %v2458, 0
    %2525 = vmatprep.subr.bf16.mxu0 0
    %2526 = vmatpush1.bf16.msra.mxu0 %v2523
    %2527 = vmatprep.subr.bf16.mxu0 0
    %2528 = vmatpush1.bf16.msra.mxu0 0
    %2529 = vmatprep.subr.bf16.mxu0 0
    %2530 = vmatpush1.bf16.msra.mxu0 0
    %2531 = vmatprep.subr.bf16.mxu0 0
    %2532 = vmatpush1.bf16.msra.mxu0 0
    %2533 = vmatprep.subr.bf16.mxu0 0
    %2534 = vmatpush1.bf16.msra.mxu0 0
    %2535 = vmatprep.subr.bf16.mxu0 0
    %2536 = vmatpush1.bf16.msra.mxu0 0
    %2537 = vmatprep.subr.bf16.mxu0 0
    %2538 = vmatpush1.bf16.msra.mxu0 0
    %2539 = vmatprep.subr.bf16.mxu0 0
    %2540 = vmatpush1.bf16.msra.mxu0 0
    %2541 = vmatprep.subr.bf16.mxu0 0
    %2542 = vmatpush1.bf16.msra.mxu0 0
    %2543 = vmatprep.subr.bf16.mxu0 0
    %2544 = vmatpush1.bf16.msra.mxu0 0
    %2545 = vmatprep.subr.bf16.mxu0 0
    %2546 = vmatpush1.bf16.msra.mxu0 0
    %2547 = vmatprep.subr.bf16.mxu0 0
    %2548 = vmatpush1.bf16.msra.mxu0 0
    %2549 = vmatprep.subr.bf16.mxu0 0
    %2550 = vmatpush1.bf16.msra.mxu0 0
    %2551 = vmatprep.subr.bf16.mxu0 0
    %2552 = vmatpush1.bf16.msra.mxu0 0
    %2553 = vmatprep.subr.bf16.mxu0 0
    %2554 = vmatpush1.bf16.msra.mxu0 0
    %2555 = vmatprep.subr.bf16.mxu0 0
    %2556 = vmatpush1.bf16.msra.mxu0 0
    %2557 = vmatprep.mubr.bf16.mxu0 0
    %2558 = vmatmul.mubr.bf16.gmra.mrb[0].mxu0 %v2520
    %v2559 = vpop.f32.mrb[0].mxu0
    %v2560 = vadd.f32 0.0, %v2559
    %v2561 = vpop.f32.mrb[0].mxu0
    %v2562 = vpop.f32.mrb[0].mxu0
    %v2563 = vpop.f32.mrb[0].mxu0
    %2564 = vdwg.mxu0
    %2566 = vrot.lane.b32.xlu0 %v2379, 96
    %v2567 = vpop.permute.xlu0 %2566
    %2569 = vxpose.xlu0.b32.start [1/16] %v2567, 128
    %2570 = vxpose.xlu0.b32.cont [2/16] 0.0, 128
    %2571 = vxpose.xlu0.b32.cont [3/16] 0.0, 128
    %2572 = vxpose.xlu0.b32.cont [4/16] 0.0, 128
    %2573 = vxpose.xlu0.b32.cont [5/16] 0.0, 128
    %2574 = vxpose.xlu0.b32.cont [6/16] 0.0, 128
    %2575 = vxpose.xlu0.b32.cont [7/16] 0.0, 128
    %2576 = vxpose.xlu0.b32.cont [8/16] 0.0, 128
    %2577 = vxpose.xlu0.b32.cont [9/16] 0.0, 128
    %2578 = vxpose.xlu0.b32.cont [10/16] 0.0, 128
    %2579 = vxpose.xlu0.b32.cont [11/16] 0.0, 128
    %2580 = vxpose.xlu0.b32.cont [12/16] 0.0, 128
    %2581 = vxpose.xlu0.b32.cont [13/16] 0.0, 128
    %2582 = vxpose.xlu0.b32.cont [14/16] 0.0, 128
    %2583 = vxpose.xlu0.b32.cont [15/16] 0.0, 128
    %2584 = vxpose.xlu0.b32.end [16/16] 0.0, 128
    %v2585 = vpop.trf.xlu0
    %v2586 = vpop.trf.xlu0
    %v2587 = vpop.trf.xlu0
    %v2588 = vpop.trf.xlu0
    %v2589 = vpop.trf.xlu0
    %v2590 = vpop.trf.xlu0
    %v2591 = vpop.trf.xlu0
    %v2592 = vpop.trf.xlu0
    %v2593 = vpop.trf.xlu0
    %v2594 = vpop.trf.xlu0
    %v2595 = vpop.trf.xlu0
    %v2596 = vpop.trf.xlu0
    %v2597 = vpop.trf.xlu0
    %v2598 = vpop.trf.xlu0
    %v2599 = vpop.trf.xlu0
    %v2600 = vpop.trf.xlu0
    %v2601 = vpack.c.bf16 %v2586, %v2585
    %v2602 = vpack.c.bf16 %v2588, %v2587
    %2604 = vrot.lane.b32.xlu0 %v2459, 96
    %v2605 = vpop.permute.xlu0 %2604
    %v2607 = vsel %vm444, %v2605, 0
    %2609 = vmatprep.subr.bf16.mxu0 0
    %2610 = vmatpush1.bf16.msra.mxu0 %v2601
    %2611 = vmatprep.subr.bf16.mxu0 0
    %2612 = vmatpush1.bf16.msra.mxu0 %v2602
    %2613 = vmatprep.subr.bf16.mxu0 0
    %2614 = vmatpush1.bf16.msra.mxu0 0
    %2615 = vmatprep.subr.bf16.mxu0 0
    %2616 = vmatpush1.bf16.msra.mxu0 0
    %2617 = vmatprep.subr.bf16.mxu0 0
    %2618 = vmatpush1.bf16.msra.mxu0 0
    %2619 = vmatprep.subr.bf16.mxu0 0
    %2620 = vmatpush1.bf16.msra.mxu0 0
    %2621 = vmatprep.subr.bf16.mxu0 0
    %2622 = vmatpush1.bf16.msra.mxu0 0
    %2623 = vmatprep.subr.bf16.mxu0 0
    %2624 = vmatpush1.bf16.msra.mxu0 0
    %2625 = vmatprep.subr.bf16.mxu0 0
    %2626 = vmatpush1.bf16.msra.mxu0 0
    %2627 = vmatprep.subr.bf16.mxu0 0
    %2628 = vmatpush1.bf16.msra.mxu0 0
    %2629 = vmatprep.subr.bf16.mxu0 0
    %2630 = vmatpush1.bf16.msra.mxu0 0
    %2631 = vmatprep.subr.bf16.mxu0 0
    %2632 = vmatpush1.bf16.msra.mxu0 0
    %2633 = vmatprep.subr.bf16.mxu0 0
    %2634 = vmatpush1.bf16.msra.mxu0 0
    %2635 = vmatprep.subr.bf16.mxu0 0
    %2636 = vmatpush1.bf16.msra.mxu0 0
    %2637 = vmatprep.subr.bf16.mxu0 0
    %2638 = vmatpush1.bf16.msra.mxu0 0
    %2639 = vmatprep.subr.bf16.mxu0 0
    %2640 = vmatpush1.bf16.msra.mxu0 0
    %2641 = vmatprep.mubr.bf16.mxu0 0
    %2642 = vmatmul.mubr.bf16.gmra.mrb[0].mxu0 %v2607
    %v2643 = vpop.f32.mrb[0].mxu0
    %v2644 = vadd.f32 0.0, %v2643
    %v2645 = vpop.f32.mrb[0].mxu0
    %v2646 = vpop.f32.mrb[0].mxu0
    %v2647 = vpop.f32.mrb[0].mxu0
    %2648 = vdwg.mxu0
    %v2649 = vmul.f32 %v2644, 0.17677669
    %v2650 = vadd.f32 %v2649, %v492
    %v2651 = vsel %vm494, %v2650, -inf
    %2652 = vmax.xlane.f32.xlu0 %v2651
    %v2653 = vpop.xlane.xlu0 %2652
    %v2654 = vsub.f32 %v2650, %v2653
    %v2655 = vmul.f32 %v2654, 1.442695
    %v2656 = vpow.pop %v2655
    %v2657 = vsel %vm494, %v2656, 0.0
    %2658 = vadd.xlane.f32.xlu0 %v2657
    %v2659 = vpop.xlane.xlu0 %2658
    %v2660 = vrcp.pop %v2659
    %v2661 = vmul.f32 %v2656, %v2660
    %v2662 = vpack.c.bf16 %v2661, %v2661
    %2664 = vrot.lane.b32.xlu0 %v2458, 96
    %v2665 = vpop.permute.xlu0 %2664
    %v2667 = vsel %vm494, %v2662, 0
    %v2670 = vsel %vm510, %v2665, 0
    %2672 = vmatprep.subr.bf16.mxu0 0
    %2673 = vmatpush1.bf16.msra.mxu0 %v2670
    %2674 = vmatprep.subr.bf16.mxu0 0
    %2675 = vmatpush1.bf16.msra.mxu0 0
    %2676 = vmatprep.subr.bf16.mxu0 0
    %2677 = vmatpush1.bf16.msra.mxu0 0
    %2678 = vmatprep.subr.bf16.mxu0 0
    %2679 = vmatpush1.bf16.msra.mxu0 0
    %2680 = vmatprep.subr.bf16.mxu0 0
    %2681 = vmatpush1.bf16.msra.mxu0 0
    %2682 = vmatprep.subr.bf16.mxu0 0
    %2683 = vmatpush1.bf16.msra.mxu0 0
    %2684 = vmatprep.subr.bf16.mxu0 0
    %2685 = vmatpush1.bf16.msra.mxu0 0
    %2686 = vmatprep.subr.bf16.mxu0 0
    %2687 = vmatpush1.bf16.msra.mxu0 0
    %2688 = vmatprep.subr.bf16.mxu0 0
    %2689 = vmatpush1.bf16.msra.mxu0 0
    %2690 = vmatprep.subr.bf16.mxu0 0
    %2691 = vmatpush1.bf16.msra.mxu0 0
    %2692 = vmatprep.subr.bf16.mxu0 0
    %2693 = vmatpush1.bf16.msra.mxu0 0
    %2694 = vmatprep.subr.bf16.mxu0 0
    %2695 = vmatpush1.bf16.msra.mxu0 0
    %2696 = vmatprep.subr.bf16.mxu0 0
    %2697 = vmatpush1.bf16.msra.mxu0 0
    %2698 = vmatprep.subr.bf16.mxu0 0
    %2699 = vmatpush1.bf16.msra.mxu0 0
    %2700 = vmatprep.subr.bf16.mxu0 0
    %2701 = vmatpush1.bf16.msra.mxu0 0
    %2702 = vmatprep.subr.bf16.mxu0 0
    %2703 = vmatpush1.bf16.msra.mxu0 0
    %2704 = vmatprep.mubr.bf16.mxu0 0
    %2705 = vmatmul.mubr.bf16.gmra.mrb[0].mxu0 %v2667
    %v2706 = vpop.f32.mrb[0].mxu0
    %v2707 = vadd.f32 0.0, %v2706
    %v2708 = vpop.f32.mrb[0].mxu0
    %v2709 = vpop.f32.mrb[0].mxu0
    %v2710 = vpop.f32.mrb[0].mxu0
    %2711 = vdwg.mxu0
    %2712 = vrot.lane.b32.xlu0 %v2379, 64
    %v2713 = vpop.permute.xlu0 %2712
    %2715 = vxpose.xlu0.b32.start [1/16] %v2713, 128
    %2716 = vxpose.xlu0.b32.cont [2/16] 0.0, 128
    %2717 = vxpose.xlu0.b32.cont [3/16] 0.0, 128
    %2718 = vxpose.xlu0.b32.cont [4/16] 0.0, 128
    %2719 = vxpose.xlu0.b32.cont [5/16] 0.0, 128
    %2720 = vxpose.xlu0.b32.cont [6/16] 0.0, 128
    %2721 = vxpose.xlu0.b32.cont [7/16] 0.0, 128
    %2722 = vxpose.xlu0.b32.cont [8/16] 0.0, 128
    %2723 = vxpose.xlu0.b32.cont [9/16] 0.0, 128
    %2724 = vxpose.xlu0.b32.cont [10/16] 0.0, 128
    %2725 = vxpose.xlu0.b32.cont [11/16] 0.0, 128
    %2726 = vxpose.xlu0.b32.cont [12/16] 0.0, 128
    %2727 = vxpose.xlu0.b32.cont [13/16] 0.0, 128
    %2728 = vxpose.xlu0.b32.cont [14/16] 0.0, 128
    %2729 = vxpose.xlu0.b32.cont [15/16] 0.0, 128
    %2730 = vxpose.xlu0.b32.end [16/16] 0.0, 128
    %v2731 = vpop.trf.xlu0
    %v2732 = vpop.trf.xlu0
    %v2733 = vpop.trf.xlu0
    %v2734 = vpop.trf.xlu0
    %v2735 = vpop.trf.xlu0
    %v2736 = vpop.trf.xlu0
    %v2737 = vpop.trf.xlu0
    %v2738 = vpop.trf.xlu0
    %v2739 = vpop.trf.xlu0
    %v2740 = vpop.trf.xlu0
    %v2741 = vpop.trf.xlu0
    %v2742 = vpop.trf.xlu0
    %v2743 = vpop.trf.xlu0
    %v2744 = vpop.trf.xlu0
    %v2745 = vpop.trf.xlu0
    %v2746 = vpop.trf.xlu0
    %v2747 = vpack.c.bf16 %v2732, %v2731
    %v2748 = vpack.c.bf16 %v2734, %v2733
    %2749 = vrot.lane.b32.xlu0 %v2459, 64
    %v2750 = vpop.permute.xlu0 %2749
    %v2752 = vsel %vm444, %v2750, 0
    %2754 = vmatprep.subr.bf16.mxu0 0
    %2755 = vmatpush1.bf16.msra.mxu0 %v2747
    %2756 = vmatprep.subr.bf16.mxu0 0
    %2757 = vmatpush1.bf16.msra.mxu0 %v2748
    %2758 = vmatprep.subr.bf16.mxu0 0
    %2759 = vmatpush1.bf16.msra.mxu0 0
    %2760 = vmatprep.subr.bf16.mxu0 0
    %2761 = vmatpush1.bf16.msra.mxu0 0
    %2762 = vmatprep.subr.bf16.mxu0 0
    %2763 = vmatpush1.bf16.msra.mxu0 0
    %2764 = vmatprep.subr.bf16.mxu0 0
    %2765 = vmatpush1.bf16.msra.mxu0 0
    %2766 = vmatprep.subr.bf16.mxu0 0
    %2767 = vmatpush1.bf16.msra.mxu0 0
    %2768 = vmatprep.subr.bf16.mxu0 0
    %2769 = vmatpush1.bf16.msra.mxu0 0
    %2770 = vmatprep.subr.bf16.mxu0 0
    %2771 = vmatpush1.bf16.msra.mxu0 0
    %2772 = vmatprep.subr.bf16.mxu0 0
    %2773 = vmatpush1.bf16.msra.mxu0 0
    %2774 = vmatprep.subr.bf16.mxu0 0
    %2775 = vmatpush1.bf16.msra.mxu0 0
    %2776 = vmatprep.subr.bf16.mxu0 0
    %2777 = vmatpush1.bf16.msra.mxu0 0
    %2778 = vmatprep.subr.bf16.mxu0 0
    %2779 = vmatpush1.bf16.msra.mxu0 0
    %2780 = vmatprep.subr.bf16.mxu0 0
    %2781 = vmatpush1.bf16.msra.mxu0 0
    %2782 = vmatprep.subr.bf16.mxu0 0
    %2783 = vmatpush1.bf16.msra.mxu0 0
    %2784 = vmatprep.subr.bf16.mxu0 0
    %2785 = vmatpush1.bf16.msra.mxu0 0
    %2786 = vmatprep.mubr.bf16.mxu0 0
    %2787 = vmatmul.mubr.bf16.gmra.mrb[0].mxu0 %v2752
    %v2788 = vpop.f32.mrb[0].mxu0
    %v2789 = vadd.f32 0.0, %v2788
    %v2790 = vpop.f32.mrb[0].mxu0
    %v2791 = vpop.f32.mrb[0].mxu0
    %v2792 = vpop.f32.mrb[0].mxu0
    %2793 = vdwg.mxu0
    %v2794 = vmul.f32 %v2789, 0.17677669
    %v2795 = vadd.f32 %v2794, %v492
    %v2796 = vsel %vm494, %v2795, -inf
    %2797 = vmax.xlane.f32.xlu0 %v2796
    %v2798 = vpop.xlane.xlu0 %2797
    %v2799 = vsub.f32 %v2795, %v2798
    %v2800 = vmul.f32 %v2799, 1.442695
    %v2801 = vpow.pop %v2800
    %v2802 = vsel %vm494, %v2801, 0.0
    %2803 = vadd.xlane.f32.xlu0 %v2802
    %v2804 = vpop.xlane.xlu0 %2803
    %v2805 = vrcp.pop %v2804
    %v2806 = vmul.f32 %v2801, %v2805
    %v2807 = vpack.c.bf16 %v2806, %v2806
    %2808 = vrot.lane.b32.xlu0 %v2458, 64
    %v2809 = vpop.permute.xlu0 %2808
    %v2811 = vsel %vm494, %v2807, 0
    %v2814 = vsel %vm510, %v2809, 0
    %2816 = vmatprep.subr.bf16.mxu0 0
    %2817 = vmatpush1.bf16.msra.mxu0 %v2814
    %2818 = vmatprep.subr.bf16.mxu0 0
    %2819 = vmatpush1.bf16.msra.mxu0 0
    %2820 = vmatprep.subr.bf16.mxu0 0
    %2821 = vmatpush1.bf16.msra.mxu0 0
    %2822 = vmatprep.subr.bf16.mxu0 0
    %2823 = vmatpush1.bf16.msra.mxu0 0
    %2824 = vmatprep.subr.bf16.mxu0 0
    %2825 = vmatpush1.bf16.msra.mxu0 0
    %2826 = vmatprep.subr.bf16.mxu0 0
    %2827 = vmatpush1.bf16.msra.mxu0 0
    %2828 = vmatprep.subr.bf16.mxu0 0
    %2829 = vmatpush1.bf16.msra.mxu0 0
    %2830 = vmatprep.subr.bf16.mxu0 0
    %2831 = vmatpush1.bf16.msra.mxu0 0
    %2832 = vmatprep.subr.bf16.mxu0 0
    %2833 = vmatpush1.bf16.msra.mxu0 0
    %2834 = vmatprep.subr.bf16.mxu0 0
    %2835 = vmatpush1.bf16.msra.mxu0 0
    %2836 = vmatprep.subr.bf16.mxu0 0
    %2837 = vmatpush1.bf16.msra.mxu0 0
    %2838 = vmatprep.subr.bf16.mxu0 0
    %2839 = vmatpush1.bf16.msra.mxu0 0
    %2840 = vmatprep.subr.bf16.mxu0 0
    %2841 = vmatpush1.bf16.msra.mxu0 0
    %2842 = vmatprep.subr.bf16.mxu0 0
    %2843 = vmatpush1.bf16.msra.mxu0 0
    %2844 = vmatprep.subr.bf16.mxu0 0
    %2845 = vmatpush1.bf16.msra.mxu0 0
    %2846 = vmatprep.subr.bf16.mxu0 0
    %2847 = vmatpush1.bf16.msra.mxu0 0
    %2848 = vmatprep.mubr.bf16.mxu0 0
    %2849 = vmatmul.mubr.bf16.gmra.mrb[0].mxu0 %v2811
    %v2850 = vpop.f32.mrb[0].mxu0
    %v2851 = vadd.f32 0.0, %v2850
    %v2852 = vpop.f32.mrb[0].mxu0
    %v2853 = vpop.f32.mrb[0].mxu0
    %v2854 = vpop.f32.mrb[0].mxu0
    %2855 = vdwg.mxu0
    %2856 = vrot.lane.b32.xlu0 %v2379, 32
    %v2857 = vpop.permute.xlu0 %2856
    %2859 = vxpose.xlu0.b32.start [1/16] %v2857, 128
    %2860 = vxpose.xlu0.b32.cont [2/16] 0.0, 128
    %2861 = vxpose.xlu0.b32.cont [3/16] 0.0, 128
    %2862 = vxpose.xlu0.b32.cont [4/16] 0.0, 128
    %2863 = vxpose.xlu0.b32.cont [5/16] 0.0, 128
    %2864 = vxpose.xlu0.b32.cont [6/16] 0.0, 128
    %2865 = vxpose.xlu0.b32.cont [7/16] 0.0, 128
    %2866 = vxpose.xlu0.b32.cont [8/16] 0.0, 128
    %2867 = vxpose.xlu0.b32.cont [9/16] 0.0, 128
    %2868 = vxpose.xlu0.b32.cont [10/16] 0.0, 128
    %2869 = vxpose.xlu0.b32.cont [11/16] 0.0, 128
    %2870 = vxpose.xlu0.b32.cont [12/16] 0.0, 128
    %2871 = vxpose.xlu0.b32.cont [13/16] 0.0, 128
    %2872 = vxpose.xlu0.b32.cont [14/16] 0.0, 128
    %2873 = vxpose.xlu0.b32.cont [15/16] 0.0, 128
    %2874 = vxpose.xlu0.b32.end [16/16] 0.0, 128
    %v2875 = vpop.trf.xlu0
    %v2876 = vpop.trf.xlu0
    %v2877 = vpop.trf.xlu0
    %v2878 = vpop.trf.xlu0
    %v2879 = vpop.trf.xlu0
    %v2880 = vpop.trf.xlu0
    %v2881 = vpop.trf.xlu0
    %v2882 = vpop.trf.xlu0
    %v2883 = vpop.trf.xlu0
    %v2884 = vpop.trf.xlu0
    %v2885 = vpop.trf.xlu0
    %v2886 = vpop.trf.xlu0
    %v2887 = vpop.trf.xlu0
    %v2888 = vpop.trf.xlu0
    %v2889 = vpop.trf.xlu0
    %v2890 = vpop.trf.xlu0
    %v2891 = vpack.c.bf16 %v2876, %v2875
    %v2892 = vpack.c.bf16 %v2878, %v2877
    %2893 = vrot.lane.b32.xlu0 %v2459, 32
    %v2894 = vpop.permute.xlu0 %2893
    %v2896 = vsel %vm444, %v2894, 0
    %2898 = vmatprep.subr.bf16.mxu0 0
    %2899 = vmatpush1.bf16.msra.mxu0 %v2891
    %2900 = vmatprep.subr.bf16.mxu0 0
    %2901 = vmatpush1.bf16.msra.mxu0 %v2892
    %2902 = vmatprep.subr.bf16.mxu0 0
    %2903 = vmatpush1.bf16.msra.mxu0 0
    %2904 = vmatprep.subr.bf16.mxu0 0
    %2905 = vmatpush1.bf16.msra.mxu0 0
    %2906 = vmatprep.subr.bf16.mxu0 0
    %2907 = vmatpush1.bf16.msra.mxu0 0
    %2908 = vmatprep.subr.bf16.mxu0 0
    %2909 = vmatpush1.bf16.msra.mxu0 0
    %2910 = vmatprep.subr.bf16.mxu0 0
    %2911 = vmatpush1.bf16.msra.mxu0 0
    %2912 = vmatprep.subr.bf16.mxu0 0
    %2913 = vmatpush1.bf16.msra.mxu0 0
    %2914 = vmatprep.subr.bf16.mxu0 0
    %2915 = vmatpush1.bf16.msra.mxu0 0
    %2916 = vmatprep.subr.bf16.mxu0 0
    %2917 = vmatpush1.bf16.msra.mxu0 0
    %2918 = vmatprep.subr.bf16.mxu0 0
    %2919 = vmatpush1.bf16.msra.mxu0 0
    %2920 = vmatprep.subr.bf16.mxu0 0
    %2921 = vmatpush1.bf16.msra.mxu0 0
    %2922 = vmatprep.subr.bf16.mxu0 0
    %2923 = vmatpush1.bf16.msra.mxu0 0
    %2924 = vmatprep.subr.bf16.mxu0 0
    %2925 = vmatpush1.bf16.msra.mxu0 0
    %2926 = vmatprep.subr.bf16.mxu0 0
    %2927 = vmatpush1.bf16.msra.mxu0 0
    %2928 = vmatprep.subr.bf16.mxu0 0
    %2929 = vmatpush1.bf16.msra.mxu0 0
    %2930 = vmatprep.mubr.bf16.mxu0 0
    %2931 = vmatmul.mubr.bf16.gmra.mrb[0].mxu0 %v2896
    %v2932 = vpop.f32.mrb[0].mxu0
    %v2933 = vadd.f32 0.0, %v2932
    %v2934 = vpop.f32.mrb[0].mxu0
    %v2935 = vpop.f32.mrb[0].mxu0
    %v2936 = vpop.f32.mrb[0].mxu0
    %2937 = vdwg.mxu0
    %v2938 = vmul.f32 %v2933, 0.17677669
    %v2939 = vadd.f32 %v2938, %v492
    %v2940 = vsel %vm494, %v2939, -inf
    %2941 = vmax.xlane.f32.xlu0 %v2940
    %v2942 = vpop.xlane.xlu0 %2941
    %v2943 = vsub.f32 %v2939, %v2942
    %v2944 = vmul.f32 %v2943, 1.442695
    %v2945 = vpow.pop %v2944
    %v2946 = vsel %vm494, %v2945, 0.0
    %2947 = vadd.xlane.f32.xlu0 %v2946
    %v2948 = vpop.xlane.xlu0 %2947
    %v2949 = vrcp.pop %v2948
    %v2950 = vmul.f32 %v2945, %v2949
    %v2951 = vpack.c.bf16 %v2950, %v2950
    %2952 = vrot.lane.b32.xlu0 %v2458, 32
    %v2953 = vpop.permute.xlu0 %2952
    %v2955 = vsel %vm494, %v2951, 0
    %v2958 = vsel %vm510, %v2953, 0
    %2960 = vmatprep.subr.bf16.mxu0 0
    %2961 = vmatpush1.bf16.msra.mxu0 %v2958
    %2962 = vmatprep.subr.bf16.mxu0 0
    %2963 = vmatpush1.bf16.msra.mxu0 0
    %2964 = vmatprep.subr.bf16.mxu0 0
    %2965 = vmatpush1.bf16.msra.mxu0 0
    %2966 = vmatprep.subr.bf16.mxu0 0
    %2967 = vmatpush1.bf16.msra.mxu0 0
    %2968 = vmatprep.subr.bf16.mxu0 0
    %2969 = vmatpush1.bf16.msra.mxu0 0
    %2970 = vmatprep.subr.bf16.mxu0 0
    %2971 = vmatpush1.bf16.msra.mxu0 0
    %2972 = vmatprep.subr.bf16.mxu0 0
    %2973 = vmatpush1.bf16.msra.mxu0 0
    %2974 = vmatprep.subr.bf16.mxu0 0
    %2975 = vmatpush1.bf16.msra.mxu0 0
    %2976 = vmatprep.subr.bf16.mxu0 0
    %2977 = vmatpush1.bf16.msra.mxu0 0
    %2978 = vmatprep.subr.bf16.mxu0 0
    %2979 = vmatpush1.bf16.msra.mxu0 0
    %2980 = vmatprep.subr.bf16.mxu0 0
    %2981 = vmatpush1.bf16.msra.mxu0 0
    %2982 = vmatprep.subr.bf16.mxu0 0
    %2983 = vmatpush1.bf16.msra.mxu0 0
    %2984 = vmatprep.subr.bf16.mxu0 0
    %2985 = vmatpush1.bf16.msra.mxu0 0
    %2986 = vmatprep.subr.bf16.mxu0 0
    %2987 = vmatpush1.bf16.msra.mxu0 0
    %2988 = vmatprep.subr.bf16.mxu0 0
    %2989 = vmatpush1.bf16.msra.mxu0 0
    %2990 = vmatprep.subr.bf16.mxu0 0
    %2991 = vmatpush1.bf16.msra.mxu0 0
    %2992 = vmatprep.mubr.bf16.mxu0 0
    %2993 = vmatmul.mubr.bf16.gmra.mrb[0].mxu0 %v2955
    %v2994 = vpop.f32.mrb[0].mxu0
    %v2995 = vadd.f32 0.0, %v2994
    %v2996 = vpop.f32.mrb[0].mxu0
    %v2997 = vpop.f32.mrb[0].mxu0
    %v2998 = vpop.f32.mrb[0].mxu0
    %2999 = vdwg.mxu0
    %3001 = vrot.lane.b32.xlu0 %v2707, 32
    %v3002 = vpop.permute.xlu0 %3001
    %3005 = vrot.lane.b32.xlu0 %v2851, 64
    %v3006 = vpop.permute.xlu0 %3005
    %3009 = vrot.lane.b32.xlu0 %v2995, 96
    %v3010 = vpop.permute.xlu0 %3009
    %v3012 = vsel %vm444, %v2560, %v3002
    %v3013 = vsel %vm1002, %v3012, %v3006
    %v3014 = vsel %vm1004, %v3013, %v3010
    %3015 = vxpose.xlu0.b32.start [1/16] %v2383, 128
    %3016 = vxpose.xlu0.b32.cont [2/16] 0.0, 128
    %3017 = vxpose.xlu0.b32.cont [3/16] 0.0, 128
    %3018 = vxpose.xlu0.b32.cont [4/16] 0.0, 128
    %3019 = vxpose.xlu0.b32.cont [5/16] 0.0, 128
    %3020 = vxpose.xlu0.b32.cont [6/16] 0.0, 128
    %3021 = vxpose.xlu0.b32.cont [7/16] 0.0, 128
    %3022 = vxpose.xlu0.b32.cont [8/16] 0.0, 128
    %3023 = vxpose.xlu0.b32.cont [9/16] 0.0, 128
    %3024 = vxpose.xlu0.b32.cont [10/16] 0.0, 128
    %3025 = vxpose.xlu0.b32.cont [11/16] 0.0, 128
    %3026 = vxpose.xlu0.b32.cont [12/16] 0.0, 128
    %3027 = vxpose.xlu0.b32.cont [13/16] 0.0, 128
    %3028 = vxpose.xlu0.b32.cont [14/16] 0.0, 128
    %3029 = vxpose.xlu0.b32.cont [15/16] 0.0, 128
    %3030 = vxpose.xlu0.b32.end [16/16] 0.0, 128
    %v3031 = vpop.trf.xlu0
    %v3032 = vpop.trf.xlu0
    %v3033 = vpop.trf.xlu0
    %v3034 = vpop.trf.xlu0
    %v3035 = vpop.trf.xlu0
    %v3036 = vpop.trf.xlu0
    %v3037 = vpop.trf.xlu0
    %v3038 = vpop.trf.xlu0
    %v3039 = vpop.trf.xlu0
    %v3040 = vpop.trf.xlu0
    %v3041 = vpop.trf.xlu0
    %v3042 = vpop.trf.xlu0
    %v3043 = vpop.trf.xlu0
    %v3044 = vpop.trf.xlu0
    %v3045 = vpop.trf.xlu0
    %v3046 = vpop.trf.xlu0
    %v3047 = vpack.c.bf16 %v2423, %v2423
    %v3048 = vpack.c.bf16 %v2381, %v2381
    %v3049 = vpack.c.bf16 %v3032, %v3031
    %v3050 = vpack.c.bf16 %v3034, %v3033
    %v3052 = vsel %vm444, %v3048, 0
    %3054 = vmatprep.subr.bf16.mxu0 0
    %3055 = vmatpush1.bf16.msra.mxu0 %v3049
    %3056 = vmatprep.subr.bf16.mxu0 0
    %3057 = vmatpush1.bf16.msra.mxu0 %v3050
    %3058 = vmatprep.subr.bf16.mxu0 0
    %3059 = vmatpush1.bf16.msra.mxu0 0
    %3060 = vmatprep.subr.bf16.mxu0 0
    %3061 = vmatpush1.bf16.msra.mxu0 0
    %3062 = vmatprep.subr.bf16.mxu0 0
    %3063 = vmatpush1.bf16.msra.mxu0 0
    %3064 = vmatprep.subr.bf16.mxu0 0
    %3065 = vmatpush1.bf16.msra.mxu0 0
    %3066 = vmatprep.subr.bf16.mxu0 0
    %3067 = vmatpush1.bf16.msra.mxu0 0
    %3068 = vmatprep.subr.bf16.mxu0 0
    %3069 = vmatpush1.bf16.msra.mxu0 0
    %3070 = vmatprep.subr.bf16.mxu0 0
    %3071 = vmatpush1.bf16.msra.mxu0 0
    %3072 = vmatprep.subr.bf16.mxu0 0
    %3073 = vmatpush1.bf16.msra.mxu0 0
    %3074 = vmatprep.subr.bf16.mxu0 0
    %3075 = vmatpush1.bf16.msra.mxu0 0
    %3076 = vmatprep.subr.bf16.mxu0 0
    %3077 = vmatpush1.bf16.msra.mxu0 0
    %3078 = vmatprep.subr.bf16.mxu0 0
    %3079 = vmatpush1.bf16.msra.mxu0 0
    %3080 = vmatprep.subr.bf16.mxu0 0
    %3081 = vmatpush1.bf16.msra.mxu0 0
    %3082 = vmatprep.subr.bf16.mxu0 0
    %3083 = vmatpush1.bf16.msra.mxu0 0
    %3084 = vmatprep.subr.bf16.mxu0 0
    %3085 = vmatpush1.bf16.msra.mxu0 0
    %3086 = vmatprep.mubr.bf16.mxu0 0
    %3087 = vmatmul.mubr.bf16.gmra.mrb[0].mxu0 %v3052
    %v3088 = vpop.f32.mrb[0].mxu0
    %v3089 = vadd.f32 0.0, %v3088
    %v3090 = vpop.f32.mrb[0].mxu0
    %v3091 = vpop.f32.mrb[0].mxu0
    %v3092 = vpop.f32.mrb[0].mxu0
    %3093 = vdwg.mxu0
    %v3094 = vmul.f32 %v3089, 0.17677669
    %v3095 = vadd.f32 %v3094, %v1089
    %v3096 = vsel %vm494, %v3095, -inf
    %3097 = vmax.xlane.f32.xlu0 %v3096
    %v3098 = vpop.xlane.xlu0 %3097
    %v3099 = vsub.f32 %v3095, %v3098
    %v3100 = vmul.f32 %v3099, 1.442695
    %v3101 = vpow.pop %v3100
    %v3102 = vsel %vm494, %v3101, 0.0
    %3103 = vadd.xlane.f32.xlu0 %v3102
    %v3104 = vpop.xlane.xlu0 %3103
    %v3105 = vrcp.pop %v3104
    %v3106 = vmul.f32 %v3101, %v3105
    %v3107 = vpack.c.bf16 %v3106, %v3106
    %v3109 = vsel %vm494, %v3107, 0
    %v3112 = vsel %vm510, %v3047, 0
    %3114 = vmatprep.subr.bf16.mxu0 0
    %3115 = vmatpush1.bf16.msra.mxu0 %v3112
    %3116 = vmatprep.subr.bf16.mxu0 0
    %3117 = vmatpush1.bf16.msra.mxu0 0
    %3118 = vmatprep.subr.bf16.mxu0 0
    %3119 = vmatpush1.bf16.msra.mxu0 0
    %3120 = vmatprep.subr.bf16.mxu0 0
    %3121 = vmatpush1.bf16.msra.mxu0 0
    %3122 = vmatprep.subr.bf16.mxu0 0
    %3123 = vmatpush1.bf16.msra.mxu0 0
    %3124 = vmatprep.subr.bf16.mxu0 0
    %3125 = vmatpush1.bf16.msra.mxu0 0
    %3126 = vmatprep.subr.bf16.mxu0 0
    %3127 = vmatpush1.bf16.msra.mxu0 0
    %3128 = vmatprep.subr.bf16.mxu0 0
    %3129 = vmatpush1.bf16.msra.mxu0 0
    %3130 = vmatprep.subr.bf16.mxu0 0
    %3131 = vmatpush1.bf16.msra.mxu0 0
    %3132 = vmatprep.subr.bf16.mxu0 0
    %3133 = vmatpush1.bf16.msra.mxu0 0
    %3134 = vmatprep.subr.bf16.mxu0 0
    %3135 = vmatpush1.bf16.msra.mxu0 0
    %3136 = vmatprep.subr.bf16.mxu0 0
    %3137 = vmatpush1.bf16.msra.mxu0 0
    %3138 = vmatprep.subr.bf16.mxu0 0
    %3139 = vmatpush1.bf16.msra.mxu0 0
    %3140 = vmatprep.subr.bf16.mxu0 0
    %3141 = vmatpush1.bf16.msra.mxu0 0
    %3142 = vmatprep.subr.bf16.mxu0 0
    %3143 = vmatpush1.bf16.msra.mxu0 0
    %3144 = vmatprep.subr.bf16.mxu0 0
    %3145 = vmatpush1.bf16.msra.mxu0 0
    %3146 = vmatprep.mubr.bf16.mxu0 0
    %3147 = vmatmul.mubr.bf16.gmra.mrb[0].mxu0 %v3109
    %v3148 = vpop.f32.mrb[0].mxu0
    %v3149 = vadd.f32 0.0, %v3148
    %v3150 = vpop.f32.mrb[0].mxu0
    %v3151 = vpop.f32.mrb[0].mxu0
    %v3152 = vpop.f32.mrb[0].mxu0
    %3153 = vdwg.mxu0
    %3155 = vrot.lane.b32.xlu0 %v2383, 96
    %v3156 = vpop.permute.xlu0 %3155
    %3158 = vxpose.xlu0.b32.start [1/16] %v3156, 128
    %3159 = vxpose.xlu0.b32.cont [2/16] 0.0, 128
    %3160 = vxpose.xlu0.b32.cont [3/16] 0.0, 128
    %3161 = vxpose.xlu0.b32.cont [4/16] 0.0, 128
    %3162 = vxpose.xlu0.b32.cont [5/16] 0.0, 128
    %3163 = vxpose.xlu0.b32.cont [6/16] 0.0, 128
    %3164 = vxpose.xlu0.b32.cont [7/16] 0.0, 128
    %3165 = vxpose.xlu0.b32.cont [8/16] 0.0, 128
    %3166 = vxpose.xlu0.b32.cont [9/16] 0.0, 128
    %3167 = vxpose.xlu0.b32.cont [10/16] 0.0, 128
    %3168 = vxpose.xlu0.b32.cont [11/16] 0.0, 128
    %3169 = vxpose.xlu0.b32.cont [12/16] 0.0, 128
    %3170 = vxpose.xlu0.b32.cont [13/16] 0.0, 128
    %3171 = vxpose.xlu0.b32.cont [14/16] 0.0, 128
    %3172 = vxpose.xlu0.b32.cont [15/16] 0.0, 128
    %3173 = vxpose.xlu0.b32.end [16/16] 0.0, 128
    %v3174 = vpop.trf.xlu0
    %v3175 = vpop.trf.xlu0
    %v3176 = vpop.trf.xlu0
    %v3177 = vpop.trf.xlu0
    %v3178 = vpop.trf.xlu0
    %v3179 = vpop.trf.xlu0
    %v3180 = vpop.trf.xlu0
    %v3181 = vpop.trf.xlu0
    %v3182 = vpop.trf.xlu0
    %v3183 = vpop.trf.xlu0
    %v3184 = vpop.trf.xlu0
    %v3185 = vpop.trf.xlu0
    %v3186 = vpop.trf.xlu0
    %v3187 = vpop.trf.xlu0
    %v3188 = vpop.trf.xlu0
    %v3189 = vpop.trf.xlu0
    %v3190 = vpack.c.bf16 %v3175, %v3174
    %v3191 = vpack.c.bf16 %v3177, %v3176
    %3193 = vrot.lane.b32.xlu0 %v3048, 96
    %v3194 = vpop.permute.xlu0 %3193
    %v3196 = vsel %vm444, %v3194, 0
    %3198 = vmatprep.subr.bf16.mxu0 0
    %3199 = vmatpush1.bf16.msra.mxu0 %v3190
    %3200 = vmatprep.subr.bf16.mxu0 0
    %3201 = vmatpush1.bf16.msra.mxu0 %v3191
    %3202 = vmatprep.subr.bf16.mxu0 0
    %3203 = vmatpush1.bf16.msra.mxu0 0
    %3204 = vmatprep.subr.bf16.mxu0 0
    %3205 = vmatpush1.bf16.msra.mxu0 0
    %3206 = vmatprep.subr.bf16.mxu0 0
    %3207 = vmatpush1.bf16.msra.mxu0 0
    %3208 = vmatprep.subr.bf16.mxu0 0
    %3209 = vmatpush1.bf16.msra.mxu0 0
    %3210 = vmatprep.subr.bf16.mxu0 0
    %3211 = vmatpush1.bf16.msra.mxu0 0
    %3212 = vmatprep.subr.bf16.mxu0 0
    %3213 = vmatpush1.bf16.msra.mxu0 0
    %3214 = vmatprep.subr.bf16.mxu0 0
    %3215 = vmatpush1.bf16.msra.mxu0 0
    %3216 = vmatprep.subr.bf16.mxu0 0
    %3217 = vmatpush1.bf16.msra.mxu0 0
    %3218 = vmatprep.subr.bf16.mxu0 0
    %3219 = vmatpush1.bf16.msra.mxu0 0
    %3220 = vmatprep.subr.bf16.mxu0 0
    %3221 = vmatpush1.bf16.msra.mxu0 0
    %3222 = vmatprep.subr.bf16.mxu0 0
    %3223 = vmatpush1.bf16.msra.mxu0 0
    %3224 = vmatprep.subr.bf16.mxu0 0
    %3225 = vmatpush1.bf16.msra.mxu0 0
    %3226 = vmatprep.subr.bf16.mxu0 0
    %3227 = vmatpush1.bf16.msra.mxu0 0
    %3228 = vmatprep.subr.bf16.mxu0 0
    %3229 = vmatpush1.bf16.msra.mxu0 0
    %3230 = vmatprep.mubr.bf16.mxu0 0
    %3231 = vmatmul.mubr.bf16.gmra.mrb[0].mxu0 %v3196
    %v3232 = vpop.f32.mrb[0].mxu0
    %v3233 = vadd.f32 0.0, %v3232
    %v3234 = vpop.f32.mrb[0].mxu0
    %v3235 = vpop.f32.mrb[0].mxu0
    %v3236 = vpop.f32.mrb[0].mxu0
    %3237 = vdwg.mxu0
    %v3238 = vmul.f32 %v3233, 0.17677669
    %v3239 = vadd.f32 %v3238, %v1089
    %v3240 = vsel %vm494, %v3239, -inf
    %3241 = vmax.xlane.f32.xlu0 %v3240
    %v3242 = vpop.xlane.xlu0 %3241
    %v3243 = vsub.f32 %v3239, %v3242
    %v3244 = vmul.f32 %v3243, 1.442695
    %v3245 = vpow.pop %v3244
    %v3246 = vsel %vm494, %v3245, 0.0
    %3247 = vadd.xlane.f32.xlu0 %v3246
    %v3248 = vpop.xlane.xlu0 %3247
    %v3249 = vrcp.pop %v3248
    %v3250 = vmul.f32 %v3245, %v3249
    %v3251 = vpack.c.bf16 %v3250, %v3250
    %3253 = vrot.lane.b32.xlu0 %v3047, 96
    %v3254 = vpop.permute.xlu0 %3253
    %v3256 = vsel %vm494, %v3251, 0
    %v3259 = vsel %vm510, %v3254, 0
    %3261 = vmatprep.subr.bf16.mxu0 0
    %3262 = vmatpush1.bf16.msra.mxu0 %v3259
    %3263 = vmatprep.subr.bf16.mxu0 0
    %3264 = vmatpush1.bf16.msra.mxu0 0
    %3265 = vmatprep.subr.bf16.mxu0 0
    %3266 = vmatpush1.bf16.msra.mxu0 0
    %3267 = vmatprep.subr.bf16.mxu0 0
    %3268 = vmatpush1.bf16.msra.mxu0 0
    %3269 = vmatprep.subr.bf16.mxu0 0
    %3270 = vmatpush1.bf16.msra.mxu0 0
    %3271 = vmatprep.subr.bf16.mxu0 0
    %3272 = vmatpush1.bf16.msra.mxu0 0
    %3273 = vmatprep.subr.bf16.mxu0 0
    %3274 = vmatpush1.bf16.msra.mxu0 0
    %3275 = vmatprep.subr.bf16.mxu0 0
    %3276 = vmatpush1.bf16.msra.mxu0 0
    %3277 = vmatprep.subr.bf16.mxu0 0
    %3278 = vmatpush1.bf16.msra.mxu0 0
    %3279 = vmatprep.subr.bf16.mxu0 0
    %3280 = vmatpush1.bf16.msra.mxu0 0
    %3281 = vmatprep.subr.bf16.mxu0 0
    %3282 = vmatpush1.bf16.msra.mxu0 0
    %3283 = vmatprep.subr.bf16.mxu0 0
    %3284 = vmatpush1.bf16.msra.mxu0 0
    %3285 = vmatprep.subr.bf16.mxu0 0
    %3286 = vmatpush1.bf16.msra.mxu0 0
    %3287 = vmatprep.subr.bf16.mxu0 0
    %3288 = vmatpush1.bf16.msra.mxu0 0
    %3289 = vmatprep.subr.bf16.mxu0 0
    %3290 = vmatpush1.bf16.msra.mxu0 0
    %3291 = vmatprep.subr.bf16.mxu0 0
    %3292 = vmatpush1.bf16.msra.mxu0 0
    %3293 = vmatprep.mubr.bf16.mxu0 0
    %3294 = vmatmul.mubr.bf16.gmra.mrb[0].mxu0 %v3256
    %v3295 = vpop.f32.mrb[0].mxu0
    %v3296 = vadd.f32 0.0, %v3295
    %v3297 = vpop.f32.mrb[0].mxu0
    %v3298 = vpop.f32.mrb[0].mxu0
    %v3299 = vpop.f32.mrb[0].mxu0
    %3300 = vdwg.mxu0
    %3301 = vrot.lane.b32.xlu0 %v2383, 64
    %v3302 = vpop.permute.xlu0 %3301
    %3304 = vxpose.xlu0.b32.start [1/16] %v3302, 128
    %3305 = vxpose.xlu0.b32.cont [2/16] 0.0, 128
    %3306 = vxpose.xlu0.b32.cont [3/16] 0.0, 128
    %3307 = vxpose.xlu0.b32.cont [4/16] 0.0, 128
    %3308 = vxpose.xlu0.b32.cont [5/16] 0.0, 128
    %3309 = vxpose.xlu0.b32.cont [6/16] 0.0, 128
    %3310 = vxpose.xlu0.b32.cont [7/16] 0.0, 128
    %3311 = vxpose.xlu0.b32.cont [8/16] 0.0, 128
    %3312 = vxpose.xlu0.b32.cont [9/16] 0.0, 128
    %3313 = vxpose.xlu0.b32.cont [10/16] 0.0, 128
    %3314 = vxpose.xlu0.b32.cont [11/16] 0.0, 128
    %3315 = vxpose.xlu0.b32.cont [12/16] 0.0, 128
    %3316 = vxpose.xlu0.b32.cont [13/16] 0.0, 128
    %3317 = vxpose.xlu0.b32.cont [14/16] 0.0, 128
    %3318 = vxpose.xlu0.b32.cont [15/16] 0.0, 128
    %3319 = vxpose.xlu0.b32.end [16/16] 0.0, 128
    %v3320 = vpop.trf.xlu0
    %v3321 = vpop.trf.xlu0
    %v3322 = vpop.trf.xlu0
    %v3323 = vpop.trf.xlu0
    %v3324 = vpop.trf.xlu0
    %v3325 = vpop.trf.xlu0
    %v3326 = vpop.trf.xlu0
    %v3327 = vpop.trf.xlu0
    %v3328 = vpop.trf.xlu0
    %v3329 = vpop.trf.xlu0
    %v3330 = vpop.trf.xlu0
    %v3331 = vpop.trf.xlu0
    %v3332 = vpop.trf.xlu0
    %v3333 = vpop.trf.xlu0
    %v3334 = vpop.trf.xlu0
    %v3335 = vpop.trf.xlu0
    %v3336 = vpack.c.bf16 %v3321, %v3320
    %v3337 = vpack.c.bf16 %v3323, %v3322
    %3338 = vrot.lane.b32.xlu0 %v3048, 64
    %v3339 = vpop.permute.xlu0 %3338
    %v3341 = vsel %vm444, %v3339, 0
    %3343 = vmatprep.subr.bf16.mxu0 0
    %3344 = vmatpush1.bf16.msra.mxu0 %v3336
    %3345 = vmatprep.subr.bf16.mxu0 0
    %3346 = vmatpush1.bf16.msra.mxu0 %v3337
    %3347 = vmatprep.subr.bf16.mxu0 0
    %3348 = vmatpush1.bf16.msra.mxu0 0
    %3349 = vmatprep.subr.bf16.mxu0 0
    %3350 = vmatpush1.bf16.msra.mxu0 0
    %3351 = vmatprep.subr.bf16.mxu0 0
    %3352 = vmatpush1.bf16.msra.mxu0 0
    %3353 = vmatprep.subr.bf16.mxu0 0
    %3354 = vmatpush1.bf16.msra.mxu0 0
    %3355 = vmatprep.subr.bf16.mxu0 0
    %3356 = vmatpush1.bf16.msra.mxu0 0
    %3357 = vmatprep.subr.bf16.mxu0 0
    %3358 = vmatpush1.bf16.msra.mxu0 0
    %3359 = vmatprep.subr.bf16.mxu0 0
    %3360 = vmatpush1.bf16.msra.mxu0 0
    %3361 = vmatprep.subr.bf16.mxu0 0
    %3362 = vmatpush1.bf16.msra.mxu0 0
    %3363 = vmatprep.subr.bf16.mxu0 0
    %3364 = vmatpush1.bf16.msra.mxu0 0
    %3365 = vmatprep.subr.bf16.mxu0 0
    %3366 = vmatpush1.bf16.msra.mxu0 0
    %3367 = vmatprep.subr.bf16.mxu0 0
    %3368 = vmatpush1.bf16.msra.mxu0 0
    %3369 = vmatprep.subr.bf16.mxu0 0
    %3370 = vmatpush1.bf16.msra.mxu0 0
    %3371 = vmatprep.subr.bf16.mxu0 0
    %3372 = vmatpush1.bf16.msra.mxu0 0
    %3373 = vmatprep.subr.bf16.mxu0 0
    %3374 = vmatpush1.bf16.msra.mxu0 0
    %3375 = vmatprep.mubr.bf16.mxu0 0
    %3376 = vmatmul.mubr.bf16.gmra.mrb[0].mxu0 %v3341
    %v3377 = vpop.f32.mrb[0].mxu0
    %v3378 = vadd.f32 0.0, %v3377
    %v3379 = vpop.f32.mrb[0].mxu0
    %v3380 = vpop.f32.mrb[0].mxu0
    %v3381 = vpop.f32.mrb[0].mxu0
    %3382 = vdwg.mxu0
    %v3383 = vmul.f32 %v3378, 0.17677669
    %v3384 = vadd.f32 %v3383, %v1089
    %v3385 = vsel %vm494, %v3384, -inf
    %3386 = vmax.xlane.f32.xlu0 %v3385
    %v3387 = vpop.xlane.xlu0 %3386
    %v3388 = vsub.f32 %v3384, %v3387
    %v3389 = vmul.f32 %v3388, 1.442695
    %v3390 = vpow.pop %v3389
    %v3391 = vsel %vm494, %v3390, 0.0
    %3392 = vadd.xlane.f32.xlu0 %v3391
    %v3393 = vpop.xlane.xlu0 %3392
    %v3394 = vrcp.pop %v3393
    %v3395 = vmul.f32 %v3390, %v3394
    %v3396 = vpack.c.bf16 %v3395, %v3395
    %3397 = vrot.lane.b32.xlu0 %v3047, 64
    %v3398 = vpop.permute.xlu0 %3397
    %v3400 = vsel %vm494, %v3396, 0
    %v3403 = vsel %vm510, %v3398, 0
    %3405 = vmatprep.subr.bf16.mxu0 0
    %3406 = vmatpush1.bf16.msra.mxu0 %v3403
    %3407 = vmatprep.subr.bf16.mxu0 0
    %3408 = vmatpush1.bf16.msra.mxu0 0
    %3409 = vmatprep.subr.bf16.mxu0 0
    %3410 = vmatpush1.bf16.msra.mxu0 0
    %3411 = vmatprep.subr.bf16.mxu0 0
    %3412 = vmatpush1.bf16.msra.mxu0 0
    %3413 = vmatprep.subr.bf16.mxu0 0
    %3414 = vmatpush1.bf16.msra.mxu0 0
    %3415 = vmatprep.subr.bf16.mxu0 0
    %3416 = vmatpush1.bf16.msra.mxu0 0
    %3417 = vmatprep.subr.bf16.mxu0 0
    %3418 = vmatpush1.bf16.msra.mxu0 0
    %3419 = vmatprep.subr.bf16.mxu0 0
    %3420 = vmatpush1.bf16.msra.mxu0 0
    %3421 = vmatprep.subr.bf16.mxu0 0
    %3422 = vmatpush1.bf16.msra.mxu0 0
    %3423 = vmatprep.subr.bf16.mxu0 0
    %3424 = vmatpush1.bf16.msra.mxu0 0
    %3425 = vmatprep.subr.bf16.mxu0 0
    %3426 = vmatpush1.bf16.msra.mxu0 0
    %3427 = vmatprep.subr.bf16.mxu0 0
    %3428 = vmatpush1.bf16.msra.mxu0 0
    %3429 = vmatprep.subr.bf16.mxu0 0
    %3430 = vmatpush1.bf16.msra.mxu0 0
    %3431 = vmatprep.subr.bf16.mxu0 0
    %3432 = vmatpush1.bf16.msra.mxu0 0
    %3433 = vmatprep.subr.bf16.mxu0 0
    %3434 = vmatpush1.bf16.msra.mxu0 0
    %3435 = vmatprep.subr.bf16.mxu0 0
    %3436 = vmatpush1.bf16.msra.mxu0 0
    %3437 = vmatprep.mubr.bf16.mxu0 0
    %3438 = vmatmul.mubr.bf16.gmra.mrb[0].mxu0 %v3400
    %v3439 = vpop.f32.mrb[0].mxu0
    %v3440 = vadd.f32 0.0, %v3439
    %v3441 = vpop.f32.mrb[0].mxu0
    %v3442 = vpop.f32.mrb[0].mxu0
    %v3443 = vpop.f32.mrb[0].mxu0
    %3444 = vdwg.mxu0
    %3445 = vrot.lane.b32.xlu0 %v2383, 32
    %v3446 = vpop.permute.xlu0 %3445
    %3448 = vxpose.xlu0.b32.start [1/16] %v3446, 128
    %3449 = vxpose.xlu0.b32.cont [2/16] 0.0, 128
    %3450 = vxpose.xlu0.b32.cont [3/16] 0.0, 128
    %3451 = vxpose.xlu0.b32.cont [4/16] 0.0, 128
    %3452 = vxpose.xlu0.b32.cont [5/16] 0.0, 128
    %3453 = vxpose.xlu0.b32.cont [6/16] 0.0, 128
    %3454 = vxpose.xlu0.b32.cont [7/16] 0.0, 128
    %3455 = vxpose.xlu0.b32.cont [8/16] 0.0, 128
    %3456 = vxpose.xlu0.b32.cont [9/16] 0.0, 128
    %3457 = vxpose.xlu0.b32.cont [10/16] 0.0, 128
    %3458 = vxpose.xlu0.b32.cont [11/16] 0.0, 128
    %3459 = vxpose.xlu0.b32.cont [12/16] 0.0, 128
    %3460 = vxpose.xlu0.b32.cont [13/16] 0.0, 128
    %3461 = vxpose.xlu0.b32.cont [14/16] 0.0, 128
    %3462 = vxpose.xlu0.b32.cont [15/16] 0.0, 128
    %3463 = vxpose.xlu0.b32.end [16/16] 0.0, 128
    %v3464 = vpop.trf.xlu0
    %v3465 = vpop.trf.xlu0
    %v3466 = vpop.trf.xlu0
    %v3467 = vpop.trf.xlu0
    %v3468 = vpop.trf.xlu0
    %v3469 = vpop.trf.xlu0
    %v3470 = vpop.trf.xlu0
    %v3471 = vpop.trf.xlu0
    %v3472 = vpop.trf.xlu0
    %v3473 = vpop.trf.xlu0
    %v3474 = vpop.trf.xlu0
    %v3475 = vpop.trf.xlu0
    %v3476 = vpop.trf.xlu0
    %v3477 = vpop.trf.xlu0
    %v3478 = vpop.trf.xlu0
    %v3479 = vpop.trf.xlu0
    %v3480 = vpack.c.bf16 %v3465, %v3464
    %v3481 = vpack.c.bf16 %v3467, %v3466
    %3482 = vrot.lane.b32.xlu0 %v3048, 32
    %v3483 = vpop.permute.xlu0 %3482
    %v3485 = vsel %vm444, %v3483, 0
    %3487 = vmatprep.subr.bf16.mxu0 0
    %3488 = vmatpush1.bf16.msra.mxu0 %v3480
    %3489 = vmatprep.subr.bf16.mxu0 0
    %3490 = vmatpush1.bf16.msra.mxu0 %v3481
    %3491 = vmatprep.subr.bf16.mxu0 0
    %3492 = vmatpush1.bf16.msra.mxu0 0
    %3493 = vmatprep.subr.bf16.mxu0 0
    %3494 = vmatpush1.bf16.msra.mxu0 0
    %3495 = vmatprep.subr.bf16.mxu0 0
    %3496 = vmatpush1.bf16.msra.mxu0 0
    %3497 = vmatprep.subr.bf16.mxu0 0
    %3498 = vmatpush1.bf16.msra.mxu0 0
    %3499 = vmatprep.subr.bf16.mxu0 0
    %3500 = vmatpush1.bf16.msra.mxu0 0
    %3501 = vmatprep.subr.bf16.mxu0 0
    %3502 = vmatpush1.bf16.msra.mxu0 0
    %3503 = vmatprep.subr.bf16.mxu0 0
    %3504 = vmatpush1.bf16.msra.mxu0 0
    %3505 = vmatprep.subr.bf16.mxu0 0
    %3506 = vmatpush1.bf16.msra.mxu0 0
    %3507 = vmatprep.subr.bf16.mxu0 0
    %3508 = vmatpush1.bf16.msra.mxu0 0
    %3509 = vmatprep.subr.bf16.mxu0 0
    %3510 = vmatpush1.bf16.msra.mxu0 0
    %3511 = vmatprep.subr.bf16.mxu0 0
    %3512 = vmatpush1.bf16.msra.mxu0 0
    %3513 = vmatprep.subr.bf16.mxu0 0
    %3514 = vmatpush1.bf16.msra.mxu0 0
    %3515 = vmatprep.subr.bf16.mxu0 0
    %3516 = vmatpush1.bf16.msra.mxu0 0
    %3517 = vmatprep.subr.bf16.mxu0 0
    %3518 = vmatpush1.bf16.msra.mxu0 0
    %3519 = vmatprep.mubr.bf16.mxu0 0
    %3520 = vmatmul.mubr.bf16.gmra.mrb[0].mxu0 %v3485
    %v3521 = vpop.f32.mrb[0].mxu0
    %v3522 = vadd.f32 0.0, %v3521
    %v3523 = vpop.f32.mrb[0].mxu0
    %v3524 = vpop.f32.mrb[0].mxu0
    %v3525 = vpop.f32.mrb[0].mxu0
    %3526 = vdwg.mxu0
    %v3527 = vmul.f32 %v3522, 0.17677669
    %v3528 = vadd.f32 %v3527, %v1089
    %v3529 = vsel %vm494, %v3528, -inf
    %3530 = vmax.xlane.f32.xlu0 %v3529
    %v3531 = vpop.xlane.xlu0 %3530
    %v3532 = vsub.f32 %v3528, %v3531
    %v3533 = vmul.f32 %v3532, 1.442695
    %v3534 = vpow.pop %v3533
    %v3535 = vsel %vm494, %v3534, 0.0
    %3536 = vadd.xlane.f32.xlu0 %v3535
    %v3537 = vpop.xlane.xlu0 %3536
    %v3538 = vrcp.pop %v3537
    %v3539 = vmul.f32 %v3534, %v3538
    %v3540 = vpack.c.bf16 %v3539, %v3539
    %3541 = vrot.lane.b32.xlu0 %v3047, 32
    %v3542 = vpop.permute.xlu0 %3541
    %v3544 = vsel %vm494, %v3540, 0
    %v3547 = vsel %vm510, %v3542, 0
    %3549 = vmatprep.subr.bf16.mxu0 0
    %3550 = vmatpush1.bf16.msra.mxu0 %v3547
    %3551 = vmatprep.subr.bf16.mxu0 0
    %3552 = vmatpush1.bf16.msra.mxu0 0
    %3553 = vmatprep.subr.bf16.mxu0 0
    %3554 = vmatpush1.bf16.msra.mxu0 0
    %3555 = vmatprep.subr.bf16.mxu0 0
    %3556 = vmatpush1.bf16.msra.mxu0 0
    %3557 = vmatprep.subr.bf16.mxu0 0
    %3558 = vmatpush1.bf16.msra.mxu0 0
    %3559 = vmatprep.subr.bf16.mxu0 0
    %3560 = vmatpush1.bf16.msra.mxu0 0
    %3561 = vmatprep.subr.bf16.mxu0 0
    %3562 = vmatpush1.bf16.msra.mxu0 0
    %3563 = vmatprep.subr.bf16.mxu0 0
    %3564 = vmatpush1.bf16.msra.mxu0 0
    %3565 = vmatprep.subr.bf16.mxu0 0
    %3566 = vmatpush1.bf16.msra.mxu0 0
    %3567 = vmatprep.subr.bf16.mxu0 0
    %3568 = vmatpush1.bf16.msra.mxu0 0
    %3569 = vmatprep.subr.bf16.mxu0 0
    %3570 = vmatpush1.bf16.msra.mxu0 0
    %3571 = vmatprep.subr.bf16.mxu0 0
    %3572 = vmatpush1.bf16.msra.mxu0 0
    %3573 = vmatprep.subr.bf16.mxu0 0
    %3574 = vmatpush1.bf16.msra.mxu0 0
    %3575 = vmatprep.subr.bf16.mxu0 0
    %3576 = vmatpush1.bf16.msra.mxu0 0
    %3577 = vmatprep.subr.bf16.mxu0 0
    %3578 = vmatpush1.bf16.msra.mxu0 0
    %3579 = vmatprep.subr.bf16.mxu0 0
    %3580 = vmatpush1.bf16.msra.mxu0 0
    %3581 = vmatprep.mubr.bf16.mxu0 0
    %3582 = vmatmul.mubr.bf16.gmra.mrb[0].mxu0 %v3544
    %v3583 = vpop.f32.mrb[0].mxu0
    %v3584 = vadd.f32 0.0, %v3583
    %v3585 = vpop.f32.mrb[0].mxu0
    %v3586 = vpop.f32.mrb[0].mxu0
    %v3587 = vpop.f32.mrb[0].mxu0
    %3588 = vdwg.mxu0
    %3590 = vrot.lane.b32.xlu0 %v3296, 32
    %v3591 = vpop.permute.xlu0 %3590
    %3594 = vrot.lane.b32.xlu0 %v3440, 64
    %v3595 = vpop.permute.xlu0 %3594
    %3598 = vrot.lane.b32.xlu0 %v3584, 96
    %v3599 = vpop.permute.xlu0 %3598
    %v3601 = vsel %vm444, %v3149, %v3591
    %v3602 = vsel %vm1002, %v3601, %v3595
    %v3603 = vsel %vm1004, %v3602, %v3599
    %s3604 = scalar_lea.vmem %s6, 64
    %v3605 = vld [vmem:[%s3604] sm:$0xf]
    %v3606 = vld [vmem:[%s3604 + $0x4] sm:$0xf]
    %v3607 = vld [vmem:[%s3604 + $0x8] sm:$0xf]
    %v3608 = vld [vmem:[%s3604 + $0xc] sm:$0xf]
    %v3609 = vld [vmem:[%s3604 + $0x10] sm:$0xf]
    %v3610 = vld [vmem:[%s3604 + $0x14] sm:$0xf]
    %v3611 = vld [vmem:[%s3604 + $0x18] sm:$0xf]
    %v3612 = vld [vmem:[%s3604 + $0x1c] sm:$0xf]
    %v3613 = vld [vmem:[%s3604 + $0x20] sm:$0xf]
    %v3614 = vld [vmem:[%s3604 + $0x24] sm:$0xf]
    %v3615 = vld [vmem:[%s3604 + $0x28] sm:$0xf]
    %v3616 = vld [vmem:[%s3604 + $0x2c] sm:$0xf]
    %v3617 = vld [vmem:[%s3604 + $0x30] sm:$0xf]
    %v3618 = vld [vmem:[%s3604 + $0x34] sm:$0xf]
    %v3619 = vld [vmem:[%s3604 + $0x38] sm:$0xf]
    %v3620 = vld [vmem:[%s3604 + $0x3c] sm:$0xf]
    %v3621 = vpack.c.bf16 %v3603, %v3014
    %s3622 = scalar_lea.vmem %s7, 1
    %v3623 = vld [vmem:[%s3622] sm:$0x1]
    %v3625 = vlaneseq
    %v3626 = vshrl.u32 %v3625, 7
    %v3627 = vsub.s32 0, %v3626
    %v3628 = vrot.slane %v3623, %v3627
    %v3646 = vunpack.c.l.b16 %v3605
    %v3647 = vunpack.c.l.b16 %v3606
    %v3648 = vunpack.c.l.b16 %v3607
    %v3649 = vunpack.c.l.b16 %v3608
    %v3650 = vunpack.c.l.b16 %v3609
    %v3651 = vunpack.c.l.b16 %v3610
    %v3652 = vunpack.c.l.b16 %v3611
    %v3653 = vunpack.c.l.b16 %v3612
    %v3654 = vunpack.c.l.b16 %v3613
    %v3655 = vunpack.c.l.b16 %v3614
    %v3656 = vunpack.c.l.b16 %v3615
    %v3657 = vunpack.c.l.b16 %v3616
    %v3658 = vunpack.c.l.b16 %v3617
    %v3659 = vunpack.c.l.b16 %v3618
    %v3660 = vunpack.c.l.b16 %v3619
    %v3661 = vunpack.c.l.b16 %v3620
    %v3662 = vpack.c.b16 %v3647, %v3646
    %v3663 = vpack.c.b16 %v3649, %v3648
    %v3664 = vpack.c.b16 %v3651, %v3650
    %v3665 = vpack.c.b16 %v3653, %v3652
    %v3666 = vpack.c.b16 %v3655, %v3654
    %v3667 = vpack.c.b16 %v3657, %v3656
    %v3668 = vpack.c.b16 %v3659, %v3658
    %v3669 = vpack.c.b16 %v3661, %v3660
    %3678 = vmatprep.subr.bf16.mxu0 0
    %3679 = vmatpush1.bf16.msra.mxu0 %v3662
    %3680 = vmatprep.subr.bf16.mxu0 0
    %3681 = vmatpush1.bf16.msra.mxu0 %v3663
    %3682 = vmatprep.subr.bf16.mxu0 0
    %3683 = vmatpush1.bf16.msra.mxu0 %v3664
    %3684 = vmatprep.subr.bf16.mxu0 0
    %3685 = vmatpush1.bf16.msra.mxu0 %v3665
    %3686 = vmatprep.subr.bf16.mxu0 0
    %3687 = vmatpush1.bf16.msra.mxu0 %v3666
    %3688 = vmatprep.subr.bf16.mxu0 0
    %3689 = vmatpush1.bf16.msra.mxu0 %v3667
    %3690 = vmatprep.subr.bf16.mxu0 0
    %3691 = vmatpush1.bf16.msra.mxu0 %v3668
    %3692 = vmatprep.subr.bf16.mxu0 0
    %3693 = vmatpush1.bf16.msra.mxu0 %v3669
    %3694 = vmatprep.subr.bf16.mxu0 0
    %3695 = vmatpush1.bf16.msra.mxu0 0
    %3696 = vmatprep.subr.bf16.mxu0 0
    %3697 = vmatpush1.bf16.msra.mxu0 0
    %3698 = vmatprep.subr.bf16.mxu0 0
    %3699 = vmatpush1.bf16.msra.mxu0 0
    %3700 = vmatprep.subr.bf16.mxu0 0
    %3701 = vmatpush1.bf16.msra.mxu0 0
    %3702 = vmatprep.subr.bf16.mxu0 0
    %3703 = vmatpush1.bf16.msra.mxu0 0
    %3704 = vmatprep.subr.bf16.mxu0 0
    %3705 = vmatpush1.bf16.msra.mxu0 0
    %3706 = vmatprep.subr.bf16.mxu0 0
    %3707 = vmatpush1.bf16.msra.mxu0 0
    %3708 = vmatprep.subr.bf16.mxu0 0
    %3709 = vmatpush1.bf16.msra.mxu0 0
    %3710 = vmatprep.mubr.bf16.mxu0 0
    %3711 = vmatmul.mubr.bf16.gmra.mrb[0].mxu0 %v3621
    %v3712 = vpop.f32.mrb[0].mxu0
    %v3713 = vadd.f32 %v3628, %v3712
    %v3714 = vpop.f32.mrb[0].mxu0
    %v3715 = vpop.f32.mrb[0].mxu0
    %v3716 = vadd.f32 %v3628, %v3715
    %v3717 = vpop.f32.mrb[0].mxu0
    %3718 = vdwg.mxu0
    %v3719 = vadd.f32 %v3713, %v2160
    %v3720 = vadd.f32 %v3716, %v2161
    %s3721 = scalar_lea.vmem %s8, 1
    %v3722 = vld [vmem:[%s3721] sm:$0x1]
    %s3723 = scalar_lea.vmem %s9, 1
    %v3724 = vld [vmem:[%s3723] sm:$0x1]
    %3725 = vadd.xlane.f32.xlu0 %v3719
    %v3726 = vpop.xlane.xlu0 %3725
    %3727 = vadd.xlane.f32.xlu0 %v3720
    %v3728 = vpop.xlane.xlu0 %3727
    %v3729 = vmul.f32 %v3726, %v110
    %v3730 = vmul.f32 %v3728, %v110
    %v3731 = vsub.f32 %v3719, %v3729
    %v3732 = vsub.f32 %v3720, %v3730
    %v3733 = vmul.f32 %v3731, %v3731
    %v3734 = vmul.f32 %v3732, %v3732
    %3735 = vadd.xlane.f32.xlu0 %v3733
    %v3736 = vpop.xlane.xlu0 %3735
    %3737 = vadd.xlane.f32.xlu0 %v3734
    %v3738 = vpop.xlane.xlu0 %3737
    %v3739 = vmul.f32 %v3736, %v110
    %v3740 = vmul.f32 %v3738, %v110
    %v3741 = vadd.f32 %v3739, 1e-12
    %v3742 = vadd.f32 %v3740, 1e-12
    %v3743 = vrsqrt.pop %v3741
    %v3744 = vrsqrt.pop %v3742
    %v3745 = vmul.f32 %v3731, %v3743
    %v3746 = vmul.f32 %v3732, %v3744
    %v3748 = vlaneseq
    %v3749 = vshrl.u32 %v3748, 7
    %v3750 = vsub.s32 0, %v3749
    %v3751 = vrot.slane %v3722, %v3750
    %v3753 = vmul.f32 %v3745, %v3751
    %v3754 = vmul.f32 %v3746, %v3751
    %v3756 = vlaneseq
    %v3757 = vshrl.u32 %v3756, 7
    %v3758 = vsub.s32 0, %v3757
    %v3759 = vrot.slane %v3724, %v3758
    %v3761 = vadd.f32 %v3753, %v3759
    %v3762 = vadd.f32 %v3754, %v3759
    %s3763 = scalar_lea.vmem [#allocation5], 128
    %v3764 = vld [vmem:[%s3763] sm:$0xff]
    %v3765 = vld [vmem:[%s3763 + $0x8] sm:$0xff]
    %v3766 = vld [vmem:[%s3763 + $0x10] sm:$0xff]
    %v3767 = vld [vmem:[%s3763 + $0x18] sm:$0xff]
    %v3768 = vld [vmem:[%s3763 + $0x20] sm:$0xff]
    %v3769 = vld [vmem:[%s3763 + $0x28] sm:$0xff]
    %v3770 = vld [vmem:[%s3763 + $0x30] sm:$0xff]
    %v3771 = vld [vmem:[%s3763 + $0x38] sm:$0xff]
    %v3772 = vld [vmem:[%s3763 + $0x40] sm:$0xff]
    %v3773 = vld [vmem:[%s3763 + $0x48] sm:$0xff]
    %v3774 = vld [vmem:[%s3763 + $0x50] sm:$0xff]
    %v3775 = vld [vmem:[%s3763 + $0x58] sm:$0xff]
    %v3776 = vld [vmem:[%s3763 + $0x60] sm:$0xff]
    %v3777 = vld [vmem:[%s3763 + $0x68] sm:$0xff]
    %v3778 = vld [vmem:[%s3763 + $0x70] sm:$0xff]
    %v3779 = vld [vmem:[%s3763 + $0x78] sm:$0xff]
    %v3780 = vpack.c.bf16 %v3762, %v3761
    %s3781 = scalar_lea.vmem %s11, 2
    %v3782 = vld [vmem:[%s3781] sm:$0x3]
    %v3784 = vlaneseq
    %v3785 = vshrl.u32 %v3784, 7
    %v3786 = vsub.s32 0, %v3785
    %v3787 = vrot.slane %v3782, %v3786
    %v3788 = vlaneseq
    %v3789 = vshrl.u32 %v3788, 7
    %v3790 = vsub.s32 1, %v3789
    %v3791 = vrot.slane %v3782, %v3790
    %v3810 = vunpack.c.l.b16 %v3764
    %v3811 = vunpack.c.h.b16 %v3764
    %v3812 = vunpack.c.l.b16 %v3765
    %v3813 = vunpack.c.h.b16 %v3765
    %v3814 = vunpack.c.l.b16 %v3766
    %v3815 = vunpack.c.h.b16 %v3766
    %v3816 = vunpack.c.l.b16 %v3767
    %v3817 = vunpack.c.h.b16 %v3767
    %v3818 = vunpack.c.l.b16 %v3768
    %v3819 = vunpack.c.h.b16 %v3768
    %v3820 = vunpack.c.l.b16 %v3769
    %v3821 = vunpack.c.h.b16 %v3769
    %v3822 = vunpack.c.l.b16 %v3770
    %v3823 = vunpack.c.h.b16 %v3770
    %v3824 = vunpack.c.l.b16 %v3771
    %v3825 = vunpack.c.h.b16 %v3771
    %v3826 = vunpack.c.l.b16 %v3772
    %v3827 = vunpack.c.h.b16 %v3772
    %v3828 = vunpack.c.l.b16 %v3773
    %v3829 = vunpack.c.h.b16 %v3773
    %v3830 = vunpack.c.l.b16 %v3774
    %v3831 = vunpack.c.h.b16 %v3774
    %v3832 = vunpack.c.l.b16 %v3775
    %v3833 = vunpack.c.h.b16 %v3775
    %v3834 = vunpack.c.l.b16 %v3776
    %v3835 = vunpack.c.h.b16 %v3776
    %v3836 = vunpack.c.l.b16 %v3777
    %v3837 = vunpack.c.h.b16 %v3777
    %v3838 = vunpack.c.l.b16 %v3778
    %v3839 = vunpack.c.h.b16 %v3778
    %v3840 = vunpack.c.l.b16 %v3779
    %v3841 = vunpack.c.h.b16 %v3779
    %v3842 = vpack.c.b16 %v3812, %v3810
    %v3843 = vpack.c.b16 %v3813, %v3811
    %v3844 = vpack.c.b16 %v3816, %v3814
    %v3845 = vpack.c.b16 %v3817, %v3815
    %v3846 = vpack.c.b16 %v3820, %v3818
    %v3847 = vpack.c.b16 %v3821, %v3819
    %v3848 = vpack.c.b16 %v3824, %v3822
    %v3849 = vpack.c.b16 %v3825, %v3823
    %v3850 = vpack.c.b16 %v3828, %v3826
    %v3851 = vpack.c.b16 %v3829, %v3827
    %v3852 = vpack.c.b16 %v3832, %v3830
    %v3853 = vpack.c.b16 %v3833, %v3831
    %v3854 = vpack.c.b16 %v3836, %v3834
    %v3855 = vpack.c.b16 %v3837, %v3835
    %v3856 = vpack.c.b16 %v3840, %v3838
    %v3857 = vpack.c.b16 %v3841, %v3839
    %3874 = vmatprep.subr.bf16.mxu0 %v3843
    %3875 = vmatpush1.bf16.msra.mxu0 %v3842
    %3876 = vmatprep.subr.bf16.mxu0 %v3845
    %3877 = vmatpush1.bf16.msra.mxu0 %v3844
    %3878 = vmatprep.subr.bf16.mxu0 %v3847
    %3879 = vmatpush1.bf16.msra.mxu0 %v3846
    %3880 = vmatprep.subr.bf16.mxu0 %v3849
    %3881 = vmatpush1.bf16.msra.mxu0 %v3848
    %3882 = vmatprep.subr.bf16.mxu0 %v3851
    %3883 = vmatpush1.bf16.msra.mxu0 %v3850
    %3884 = vmatprep.subr.bf16.mxu0 %v3853
    %3885 = vmatpush1.bf16.msra.mxu0 %v3852
    %3886 = vmatprep.subr.bf16.mxu0 %v3855
    %3887 = vmatpush1.bf16.msra.mxu0 %v3854
    %3888 = vmatprep.subr.bf16.mxu0 %v3857
    %3889 = vmatpush1.bf16.msra.mxu0 %v3856
    %3890 = vmatprep.subr.bf16.mxu0 0
    %3891 = vmatpush1.bf16.msra.mxu0 0
    %3892 = vmatprep.subr.bf16.mxu0 0
    %3893 = vmatpush1.bf16.msra.mxu0 0
    %3894 = vmatprep.subr.bf16.mxu0 0
    %3895 = vmatpush1.bf16.msra.mxu0 0
    %3896 = vmatprep.subr.bf16.mxu0 0
    %3897 = vmatpush1.bf16.msra.mxu0 0
    %3898 = vmatprep.subr.bf16.mxu0 0
    %3899 = vmatpush1.bf16.msra.mxu0 0
    %3900 = vmatprep.subr.bf16.mxu0 0
    %3901 = vmatpush1.bf16.msra.mxu0 0
    %3902 = vmatprep.subr.bf16.mxu0 0
    %3903 = vmatpush1.bf16.msra.mxu0 0
    %3904 = vmatprep.subr.bf16.mxu0 0
    %3905 = vmatpush1.bf16.msra.mxu0 0
    %3906 = vmatprep.mubr.bf16.mxu0 0
    %3907 = vmatmul.mubr.bf16.gmra.mrb[0].mxu0 %v3780
    %v3908 = vpop.f32.mrb[0].mxu0
    %v3909 = vadd.f32 %v3787, %v3908
    %v3910 = vpop.f32.mrb[0].mxu0
    %v3911 = vadd.f32 %v3791, %v3910
    %v3912 = vpop.f32.mrb[0].mxu0
    %v3913 = vadd.f32 %v3787, %v3912
    %v3914 = vpop.f32.mrb[0].mxu0
    %v3915 = vadd.f32 %v3791, %v3914
    %3916 = vdwg.mxu0
    %v3917 = vmul.f32 %v3909, 0.5
    %v3918 = vmul.f32 %v3911, 0.5
    %v3919 = vmul.f32 %v3913, 0.5
    %v3920 = vmul.f32 %v3915, 0.5
    %v3921 = vmul.f32 %v3909, 0.044715
    %v3922 = vmul.f32 %v3911, 0.044715
    %v3923 = vmul.f32 %v3913, 0.044715
    %v3924 = vmul.f32 %v3915, 0.044715
    %v3925 = vmul.f32 %v3921, %v3909
    %v3926 = vmul.f32 %v3922, %v3911
    %v3927 = vmul.f32 %v3923, %v3913
    %v3928 = vmul.f32 %v3924, %v3915
    %v3929 = vmul.f32 %v3925, %v3909
    %v3930 = vmul.f32 %v3926, %v3911
    %v3931 = vmul.f32 %v3927, %v3913
    %v3932 = vmul.f32 %v3928, %v3915
    %v3933 = vadd.f32 %v3909, %v3929
    %v3934 = vadd.f32 %v3911, %v3930
    %v3935 = vadd.f32 %v3913, %v3931
    %v3936 = vadd.f32 %v3915, %v3932
    %v3937 = vmul.f32 %v3933, 0.7978846
    %v3938 = vmul.f32 %v3934, 0.7978846
    %v3939 = vmul.f32 %v3935, 0.7978846
    %v3940 = vmul.f32 %v3936, 0.7978846
    %v3941 = vtanh.pop %v3937
    %v3942 = vtanh.pop %v3938
    %v3943 = vtanh.pop %v3939
    %v3944 = vtanh.pop %v3940
    %v3945 = vadd.f32 %v3941, 1.0
    %v3946 = vadd.f32 %v3942, 1.0
    %v3947 = vadd.f32 %v3943, 1.0
    %v3948 = vadd.f32 %v3944, 1.0
    %v3949 = vmul.f32 %v3917, %v3945
    %v3950 = vmul.f32 %v3918, %v3946
    %v3951 = vmul.f32 %v3919, %v3947
    %v3952 = vmul.f32 %v3920, %v3948
    %s3953 = scalar_lea.vmem [#allocation7], 128
    %v3954 = vld [vmem:[%s3953] sm:$0xf]
    %v3955 = vld [vmem:[%s3953 + $0x4] sm:$0xf]
    %v3956 = vld [vmem:[%s3953 + $0x8] sm:$0xf]
    %v3957 = vld [vmem:[%s3953 + $0xc] sm:$0xf]
    %v3958 = vld [vmem:[%s3953 + $0x10] sm:$0xf]
    %v3959 = vld [vmem:[%s3953 + $0x14] sm:$0xf]
    %v3960 = vld [vmem:[%s3953 + $0x18] sm:$0xf]
    %v3961 = vld [vmem:[%s3953 + $0x1c] sm:$0xf]
    %v3962 = vld [vmem:[%s3953 + $0x20] sm:$0xf]
    %v3963 = vld [vmem:[%s3953 + $0x24] sm:$0xf]
    %v3964 = vld [vmem:[%s3953 + $0x28] sm:$0xf]
    %v3965 = vld [vmem:[%s3953 + $0x2c] sm:$0xf]
    %v3966 = vld [vmem:[%s3953 + $0x30] sm:$0xf]
    %v3967 = vld [vmem:[%s3953 + $0x34] sm:$0xf]
    %v3968 = vld [vmem:[%s3953 + $0x38] sm:$0xf]
    %v3969 = vld [vmem:[%s3953 + $0x3c] sm:$0xf]
    %v3970 = vld [vmem:[%s3953 + $0x40] sm:$0xf]
    %v3971 = vld [vmem:[%s3953 + $0x44] sm:$0xf]
    %v3972 = vld [vmem:[%s3953 + $0x48] sm:$0xf]
    %v3973 = vld [vmem:[%s3953 + $0x4c] sm:$0xf]
    %v3974 = vld [vmem:[%s3953 + $0x50] sm:$0xf]
    %v3975 = vld [vmem:[%s3953 + $0x54] sm:$0xf]
    %v3976 = vld [vmem:[%s3953 + $0x58] sm:$0xf]
    %v3977 = vld [vmem:[%s3953 + $0x5c] sm:$0xf]
    %v3978 = vld [vmem:[%s3953 + $0x60] sm:$0xf]
    %v3979 = vld [vmem:[%s3953 + $0x64] sm:$0xf]
    %v3980 = vld [vmem:[%s3953 + $0x68] sm:$0xf]
    %v3981 = vld [vmem:[%s3953 + $0x6c] sm:$0xf]
    %v3982 = vld [vmem:[%s3953 + $0x70] sm:$0xf]
    %v3983 = vld [vmem:[%s3953 + $0x74] sm:$0xf]
    %v3984 = vld [vmem:[%s3953 + $0x78] sm:$0xf]
    %v3985 = vld [vmem:[%s3953 + $0x7c] sm:$0xf]
    %v3986 = vpack.c.bf16 %v3951, %v3949
    %v3987 = vpack.c.bf16 %v3952, %v3950
    %s3988 = scalar_lea.vmem %s13, 1
    %v3989 = vld [vmem:[%s3988] sm:$0x1]
    %v3991 = vlaneseq
    %v3992 = vshrl.u32 %v3991, 7
    %v3993 = vsub.s32 0, %v3992
    %v3994 = vrot.slane %v3989, %v3993
    %v4028 = vunpack.c.l.b16 %v3954
    %v4029 = vunpack.c.l.b16 %v3955
    %v4030 = vunpack.c.l.b16 %v3956
    %v4031 = vunpack.c.l.b16 %v3957
    %v4032 = vunpack.c.l.b16 %v3958
    %v4033 = vunpack.c.l.b16 %v3959
    %v4034 = vunpack.c.l.b16 %v3960
    %v4035 = vunpack.c.l.b16 %v3961
    %v4036 = vunpack.c.l.b16 %v3962
    %v4037 = vunpack.c.l.b16 %v3963
    %v4038 = vunpack.c.l.b16 %v3964
    %v4039 = vunpack.c.l.b16 %v3965
    %v4040 = vunpack.c.l.b16 %v3966
    %v4041 = vunpack.c.l.b16 %v3967
    %v4042 = vunpack.c.l.b16 %v3968
    %v4043 = vunpack.c.l.b16 %v3969
    %v4044 = vunpack.c.l.b16 %v3970
    %v4045 = vunpack.c.l.b16 %v3971
    %v4046 = vunpack.c.l.b16 %v3972
    %v4047 = vunpack.c.l.b16 %v3973
    %v4048 = vunpack.c.l.b16 %v3974
    %v4049 = vunpack.c.l.b16 %v3975
    %v4050 = vunpack.c.l.b16 %v3976
    %v4051 = vunpack.c.l.b16 %v3977
    %v4052 = vunpack.c.l.b16 %v3978
    %v4053 = vunpack.c.l.b16 %v3979
    %v4054 = vunpack.c.l.b16 %v3980
    %v4055 = vunpack.c.l.b16 %v3981
    %v4056 = vunpack.c.l.b16 %v3982
    %v4057 = vunpack.c.l.b16 %v3983
    %v4058 = vunpack.c.l.b16 %v3984
    %v4059 = vunpack.c.l.b16 %v3985
    %v4060 = vpack.c.b16 %v4029, %v4028
    %v4061 = vpack.c.b16 %v4031, %v4030
    %v4062 = vpack.c.b16 %v4033, %v4032
    %v4063 = vpack.c.b16 %v4035, %v4034
    %v4064 = vpack.c.b16 %v4037, %v4036
    %v4065 = vpack.c.b16 %v4039, %v4038
    %v4066 = vpack.c.b16 %v4041, %v4040
    %v4067 = vpack.c.b16 %v4043, %v4042
    %v4068 = vpack.c.b16 %v4045, %v4044
    %v4069 = vpack.c.b16 %v4047, %v4046
    %v4070 = vpack.c.b16 %v4049, %v4048
    %v4071 = vpack.c.b16 %v4051, %v4050
    %v4072 = vpack.c.b16 %v4053, %v4052
    %v4073 = vpack.c.b16 %v4055, %v4054
    %v4074 = vpack.c.b16 %v4057, %v4056
    %v4075 = vpack.c.b16 %v4059, %v4058
    %4092 = vmatprep.subr.bf16.mxu0 0
    %4093 = vmatpush1.bf16.msra.mxu0 %v4060
    %4094 = vmatprep.subr.bf16.mxu0 0
    %4095 = vmatpush1.bf16.msra.mxu0 %v4061
    %4096 = vmatprep.subr.bf16.mxu0 0
    %4097 = vmatpush1.bf16.msra.mxu0 %v4062
    %4098 = vmatprep.subr.bf16.mxu0 0
    %4099 = vmatpush1.bf16.msra.mxu0 %v4063
    %4100 = vmatprep.subr.bf16.mxu0 0
    %4101 = vmatpush1.bf16.msra.mxu0 %v4064
    %4102 = vmatprep.subr.bf16.mxu0 0
    %4103 = vmatpush1.bf16.msra.mxu0 %v4065
    %4104 = vmatprep.subr.bf16.mxu0 0
    %4105 = vmatpush1.bf16.msra.mxu0 %v4066
    %4106 = vmatprep.subr.bf16.mxu0 0
    %4107 = vmatpush1.bf16.msra.mxu0 %v4067
    %4108 = vmatprep.subr.bf16.mxu0 0
    %4109 = vmatpush1.bf16.msra.mxu0 %v4068
    %4110 = vmatprep.subr.bf16.mxu0 0
    %4111 = vmatpush1.bf16.msra.mxu0 %v4069
    %4112 = vmatprep.subr.bf16.mxu0 0
    %4113 = vmatpush1.bf16.msra.mxu0 %v4070
    %4114 = vmatprep.subr.bf16.mxu0 0
    %4115 = vmatpush1.bf16.msra.mxu0 %v4071
    %4116 = vmatprep.subr.bf16.mxu0 0
    %4117 = vmatpush1.bf16.msra.mxu0 %v4072
    %4118 = vmatprep.subr.bf16.mxu0 0
    %4119 = vmatpush1.bf16.msra.mxu0 %v4073
    %4120 = vmatprep.subr.bf16.mxu0 0
    %4121 = vmatpush1.bf16.msra.mxu0 %v4074
    %4122 = vmatprep.subr.bf16.mxu0 0
    %4123 = vmatpush1.bf16.msra.mxu0 %v4075
    %4124 = vmatprep.mubr.bf16.mxu0 %v3987
    %4125 = vmatmul.mubr.bf16.gmra.mrb[0].mxu0 %v3986
    %v4126 = vpop.f32.mrb[0].mxu0
    %v4127 = vadd.f32 %v3994, %v4126
    %v4128 = vpop.f32.mrb[0].mxu0
    %v4129 = vpop.f32.mrb[0].mxu0
    %v4130 = vadd.f32 %v3994, %v4129
    %v4131 = vpop.f32.mrb[0].mxu0
    %4132 = vdwg.mxu0
    %v4133 = vadd.f32 %v4127, %v3761
    %v4134 = vadd.f32 %v4130, %v3762
    %s4135 = scalar_lea.vmem %s14, 1
    %v4136 = vld [vmem:[%s4135] sm:$0x1]
    %s4137 = scalar_lea.vmem %s15, 1
    %v4138 = vld [vmem:[%s4137] sm:$0x1]
    %4139 = vadd.xlane.f32.xlu0 %v4133
    %v4140 = vpop.xlane.xlu0 %4139
    %4141 = vadd.xlane.f32.xlu0 %v4134
    %v4142 = vpop.xlane.xlu0 %4141
    %v4143 = vmul.f32 %v4140, %v110
    %v4144 = vmul.f32 %v4142, %v110
    %v4145 = vsub.f32 %v4133, %v4143
    %v4146 = vsub.f32 %v4134, %v4144
    %v4147 = vmul.f32 %v4145, %v4145
    %v4148 = vmul.f32 %v4146, %v4146
    %4149 = vadd.xlane.f32.xlu0 %v4147
    %v4150 = vpop.xlane.xlu0 %4149
    %4151 = vadd.xlane.f32.xlu0 %v4148
    %v4152 = vpop.xlane.xlu0 %4151
    %v4153 = vmul.f32 %v4150, %v110
    %v4154 = vmul.f32 %v4152, %v110
    %v4155 = vadd.f32 %v4153, 1e-12
    %v4156 = vadd.f32 %v4154, 1e-12
    %v4157 = vrsqrt.pop %v4155
    %v4158 = vrsqrt.pop %v4156
    %v4159 = vmul.f32 %v4145, %v4157
    %v4160 = vmul.f32 %v4146, %v4158
    %v4162 = vlaneseq
    %v4163 = vshrl.u32 %v4162, 7
    %v4164 = vsub.s32 0, %v4163
    %v4165 = vrot.slane %v4136, %v4164
    %v4167 = vmul.f32 %v4159, %v4165
    %v4168 = vmul.f32 %v4160, %v4165
    %v4170 = vlaneseq
    %v4171 = vshrl.u32 %v4170, 7
    %v4172 = vsub.s32 0, %v4171
    %v4173 = vrot.slane %v4138, %v4172
    %v4175 = vadd.f32 %v4167, %v4173
    %v4176 = vadd.f32 %v4168, %v4173
    %v4178 = vrot.slane %v4176, 7
    %vm4180 = vcmask 1040384
    %v4181 = vsel %vm4180, %v4175, %v4178
    %v4182 = vld [vmem:[%s16] sm:$0xf]
    %v4183 = vld [vmem:[%s16 + $0x4] sm:$0xf]
    %v4184 = vld [vmem:[%s16 + $0x8] sm:$0xf]
    %v4185 = vld [vmem:[%s16 + $0xc] sm:$0xf]
    %v4186 = vld [vmem:[%s16 + $0x10] sm:$0xf]
    %v4187 = vld [vmem:[%s16 + $0x14] sm:$0xf]
    %v4188 = vld [vmem:[%s16 + $0x18] sm:$0xf]
    %v4189 = vld [vmem:[%s16 + $0x1c] sm:$0xf]
    %v4190 = vld [vmem:[%s16 + $0x20] sm:$0xf]
    %v4191 = vld [vmem:[%s16 + $0x24] sm:$0xf]
    %v4192 = vld [vmem:[%s16 + $0x28] sm:$0xf]
    %v4193 = vld [vmem:[%s16 + $0x2c] sm:$0xf]
    %v4194 = vld [vmem:[%s16 + $0x30] sm:$0xf]
    %v4195 = vld [vmem:[%s16 + $0x34] sm:$0xf]
    %v4196 = vld [vmem:[%s16 + $0x38] sm:$0xf]
    %v4197 = vld [vmem:[%s16 + $0x3c] sm:$0xf]
    %v4198 = vpack.c.bf16 %v4181, %v4181
    %v4199 = vld [vmem:[%s17] sm:$0x1]
    %v4201 = vlaneseq
    %v4202 = vshrl.u32 %v4201, 7
    %v4203 = vsub.s32 0, %v4202
    %v4204 = vrot.slane %v4199, %v4203
    %v4222 = vunpack.c.l.b16 %v4182
    %v4223 = vunpack.c.l.b16 %v4183
    %v4224 = vunpack.c.l.b16 %v4184
    %v4225 = vunpack.c.l.b16 %v4185
    %v4226 = vunpack.c.l.b16 %v4186
    %v4227 = vunpack.c.l.b16 %v4187
    %v4228 = vunpack.c.l.b16 %v4188
    %v4229 = vunpack.c.l.b16 %v4189
    %v4230 = vunpack.c.l.b16 %v4190
    %v4231 = vunpack.c.l.b16 %v4191
    %v4232 = vunpack.c.l.b16 %v4192
    %v4233 = vunpack.c.l.b16 %v4193
    %v4234 = vunpack.c.l.b16 %v4194
    %v4235 = vunpack.c.l.b16 %v4195
    %v4236 = vunpack.c.l.b16 %v4196
    %v4237 = vunpack.c.l.b16 %v4197
    %v4238 = vpack.c.b16 %v4223, %v4222
    %v4239 = vpack.c.b16 %v4225, %v4224
    %v4240 = vpack.c.b16 %v4227, %v4226
    %v4241 = vpack.c.b16 %v4229, %v4228
    %v4242 = vpack.c.b16 %v4231, %v4230
    %v4243 = vpack.c.b16 %v4233, %v4232
    %v4244 = vpack.c.b16 %v4235, %v4234
    %v4245 = vpack.c.b16 %v4237, %v4236
    %4254 = vmatprep.subr.bf16.mxu0 0
    %4255 = vmatpush1.bf16.msra.mxu0 %v4238
    %4256 = vmatprep.subr.bf16.mxu0 0
    %4257 = vmatpush1.bf16.msra.mxu0 %v4239
    %4258 = vmatprep.subr.bf16.mxu0 0
    %4259 = vmatpush1.bf16.msra.mxu0 %v4240
    %4260 = vmatprep.subr.bf16.mxu0 0
    %4261 = vmatpush1.bf16.msra.mxu0 %v4241
    %4262 = vmatprep.subr.bf16.mxu0 0
    %4263 = vmatpush1.bf16.msra.mxu0 %v4242
    %4264 = vmatprep.subr.bf16.mxu0 0
    %4265 = vmatpush1.bf16.msra.mxu0 %v4243
    %4266 = vmatprep.subr.bf16.mxu0 0
    %4267 = vmatpush1.bf16.msra.mxu0 %v4244
    %4268 = vmatprep.subr.bf16.mxu0 0
    %4269 = vmatpush1.bf16.msra.mxu0 %v4245
    %4270 = vmatprep.subr.bf16.mxu0 0
    %4271 = vmatpush1.bf16.msra.mxu0 0
    %4272 = vmatprep.subr.bf16.mxu0 0
    %4273 = vmatpush1.bf16.msra.mxu0 0
    %4274 = vmatprep.subr.bf16.mxu0 0
    %4275 = vmatpush1.bf16.msra.mxu0 0
    %4276 = vmatprep.subr.bf16.mxu0 0
    %4277 = vmatpush1.bf16.msra.mxu0 0
    %4278 = vmatprep.subr.bf16.mxu0 0
    %4279 = vmatpush1.bf16.msra.mxu0 0
    %4280 = vmatprep.subr.bf16.mxu0 0
    %4281 = vmatpush1.bf16.msra.mxu0 0
    %4282 = vmatprep.subr.bf16.mxu0 0
    %4283 = vmatpush1.bf16.msra.mxu0 0
    %4284 = vmatprep.subr.bf16.mxu0 0
    %4285 = vmatpush1.bf16.msra.mxu0 0
    %4286 = vmatprep.mubr.bf16.mxu0 0
    %4287 = vmatmul.mubr.bf16.gmra.mrb[0].mxu0 %v4198
    %v4288 = vpop.f32.mrb[0].mxu0
    %v4289 = vadd.f32 %v4204, %v4288
    %v4290 = vpop.f32.mrb[0].mxu0
    %v4291 = vpop.f32.mrb[0].mxu0
    %v4292 = vpop.f32.mrb[0].mxu0
    %4293 = vdwg.mxu0
    %4294 = vst [vmem:[#allocation8] sm:$0x3] %v4289
    // Predicated region
    $region86: #{forward.1} parent=1 // pred_check
      _
    $region87: #{forward.1} parent=1 // pred_check_branch
      %4296 = sbr.rel (0) target = $region89
    $region88: #{forward.1} parent=1 // pred_region
      %s4298 = ssub.s32 32, 32
      %4299 = vsyncadd [#allocation4], %s4298
      %s4301 = sshll.u32 [#allocation8], 4
      %s4302 = int_to_ptr.vmem [resolvable:$true] %s4301
      %4304 = dma.vmem_to_hbm [thread:$0]  %s4302, 32, %s18, [#allocation4]
    $region89: #{forward.1} parent=1 // pred_fallthru
      _
    // Predicated region
    $region90: #{forward.1} parent=1 // pred_check
      _
    $region91: #{forward.1} parent=1 // pred_check_branch
      %4306 = sbr.rel (0) target = $region93
    $region92: #{forward.1} parent=1 // pred_region
      %4307 = dma.done [#allocation4], 32
    $region93: #{forward.1} parent=1 // pred_fallthru
      _
    %4308 = vsyncpa [#allocation3], 1
    %4309 = vsyncpa [#allocation6], 1
    %4310 = vsyncpa [#allocation4], 1

</llo_original>
